<compile_context>
chip_gen: v7x
topology: tpu7x:2x2x1
jax: 0.10.0
libtpu: 0.0.40
codegen_flags: <defaults>
</compile_context>

<pallas_src>
import math

import jax
import jax.numpy as jnp
from jax.experimental import pallas as pl
from jax.experimental.pallas import tpu as pltpu  # noqa: F401

# ----------------------------- model dimensions -----------------------------
B, S, M = 2, 8, 8            # batch, seq_size, in_chans
BS = B * S                   # batch folded into rows
D = 32                       # embed_dim
H = 4                        # num_heads
DK = D // H                  # head dim
DFF = D // 2                 # encoder FFN hidden (embed_dim // 2)
DEPTH = 2                    # encoder depth
O1, O2 = 50, 10              # seq_tf head widths
EPS = 1e-6                   # LayerNorm eps
NEG_INF = -1e30              # additive mask for cross-batch attention entries

# ----------------------------- parameter slab layout -----------------------------
def _r8(n):
    return -(-n // 8) * 8


def _make_offsets(entries):
    offs, row = {}, 0
    for name, (r, _c) in entries:
        offs[name] = (row, r, _c)
        row += _r8(r)
    return offs, _r8(row)


W_ENTRIES = (
    [("conv_cat", (BS, 3 * BS)),
     ("Wr", (M, M)), ("Vr", (M, M)), ("Wu", (M, M)), ("Vu", (M, M)),
     ("We", (M, D))]
    + [(f"{n}{l}", s) for l in range(DEPTH)
       for n, s in [("Wq", (D, D)), ("Wk", (D, D)), ("Wv", (D, D)),
                    ("Wo", (D, D)), ("Wf1", (D, DFF)), ("Wf2", (DFF, D))]]
    + [("Wenc", (D, D))]
)

F_ENTRIES = (
    [("conv_b", (BS, 1)),
     ("b_r", (1, M)), ("b_u", (1, M)), ("b_e", (1, D)),
     ("pe", (BS, D)), ("pe_g", (1, D)), ("pe_b", (1, D)),
     ("attn_bias", (BS, BS))]
    + [(f"{n}{l}", s) for l in range(DEPTH)
       for n, s in [("b_o", (1, D)), ("ln1_g", (1, D)), ("ln1_b", (1, D)),
                    ("b_f1", (1, DFF)), ("b_f2", (1, D)),
                    ("ln2_g", (1, D)), ("ln2_b", (1, D))]]
    + [("b_enc", (1, D)), ("selB", (B, BS)), ("b_tf1", (1, O1)),
       ("W_tf2", (O1, O2)), ("b_tf2", (1, O2)), ("W_out", (O2, 1)), ("b_out", (1, 1))]
)

H_ENTRIES = [("Wcat", (D, S * O1)), ("tf_mask", (BS, S * O1))]

W_OFF, W_ROWS = _make_offsets(W_ENTRIES)
F_OFF, F_ROWS = _make_offsets(F_ENTRIES)
H_OFF, H_ROWS = _make_offsets(H_ENTRIES)
W_WIDTH = 128
F_WIDTH = 128
H_WIDTH = S * O1


def _pack(values, entries, offs, rows, width, dtype):
    assert set(values) == {n for n, _ in entries}
    slab = jnp.zeros((rows, width), dtype)
    for name, (r, c) in entries:
        a = jnp.asarray(values[name], jnp.float32)
        assert a.shape == (r, c), (name, a.shape, (r, c))
        r0 = offs[name][0]
        slab = slab.at[r0:r0 + r, 0:c].set(a.astype(dtype))
    return slab


def _treesum(xs):
    while len(xs) > 1:
        pairs = [xs[i] + xs[i + 1] for i in range(0, len(xs) - 1, 2)]
        if len(xs) % 2:
            pairs.append(xs[-1])
        xs = pairs
    return xs[0]


# ------------------------------ fused kernel ------------------------------
def fused_gcu_kernel(xall_ref, w_ref, f_ref, h_ref, csum_ref, out_ref):
    f32, bf16 = jnp.float32, jnp.bfloat16

    def wread(n):
        r0, r, c = W_OFF[n]
        return w_ref[r0:r0 + r, 0:c]

    def fread(n):
        r0, r, c = F_OFF[n]
        return f_ref[r0:r0 + r, 0:c]

    def hread(n):
        r0, r, c = H_OFF[n]
        return h_ref[r0:r0 + r, 0:c]

    def mm(a, b):                       # MXU matmul, f32 accumulation
        return jnp.dot(a, b, preferred_element_type=f32)

    def mm_nt(a, b):                    # a[m,k] x b[n,k]^T, contraction on last dims
        return jax.lax.dot_general(a, b, (((1,), (1,)), ((), ())),
                                   preferred_element_type=f32)

    def ln(x, g, b):                    # LayerNorm with affine params from the f32 slab
        mu = jnp.mean(x, axis=-1, keepdims=True)
        var = jnp.mean((x - mu) ** 2, axis=-1, keepdims=True)
        return (x - mu) * jax.lax.rsqrt(var + EPS) * fread(g) + fread(b)

    # ---- Gating: Conv1d(S, S, k=3, pad=1) over the M axis + GRU-style gates ----
    # xall rows = [x ; x(l-1) ; x(l+1)] (shifts prepared in the wrapper); three conv taps are
    # block-diagonal over batch and packed into ONE [BS, 3*BS] weight -> a single matmul.
    x_all_bf = xall_ref[...].astype(bf16)                              # [3*BS, M]
    x = xall_ref[0:BS, :]                                              # [BS, M] f32
    x_bf = x_all_bf[0:BS, :]
    h = mm(wread("conv_cat"), x_all_bf) + fread("conv_b")              # [BS, M]
    h_bf = h.astype(bf16)
    r = jax.nn.sigmoid(mm(h_bf, wread("Wr")) + mm(x_bf, wread("Vr")) + fread("b_r"))
    u = jax.nn.sigmoid(mm(h_bf, wread("Wu")) + mm(x_bf, wread("Vu")) + fread("b_u"))
    hh = h * u + x * r
    gcu = mm(hh.astype(bf16), wread("We")) + fread("b_e")              # [BS, D]

    # ---- FixedPositionalEncoding (+ LayerNorm) ----
    # TODO(synk): nn.Dropout(p=0.1) is identity in this eval-mode forward.
    z = ln(gcu + fread("pe"), "pe_g", "pe_b")                          # [BS, D]

    # Per-head lane masks (VPU constants from iota; avoids per-head weight slices / lane splits).
    lane = jax.lax.broadcasted_iota(jnp.int32, (1, D), 1)
    hmask = [jnp.where((lane >= hd * DK) & (lane < (hd + 1) * DK), 1.0, 0.0).astype(bf16)
             for hd in range(H)]

    # ---- Transformer encoder layers ----
    # TODO(synk): the reference Encoder class body is not provided; implemented as a standard
    # post-LN multi-head self-attention + position-wise FFN (hidden = embed_dim // 2) layer.
    scale = 1.0 / math.sqrt(DK)
    attn_bias = fread("attn_bias")                                     # [BS, BS] block-diag mask
    for l in range(DEPTH):
        z_bf = z.astype(bf16)
        q = mm(z_bf, wread(f"Wq{l}")).astype(bf16)                     # [BS, D]
        k = mm(z_bf, wread(f"Wk{l}")).astype(bf16)
        v = mm(z_bf, wread(f"Wv{l}")).astype(bf16)
        heads = []
        for hd in range(H):
            s = mm_nt(q * hmask[hd], k) * scale + attn_bias            # per-head scores [BS,BS]
            s = s - jnp.max(s, axis=-1, keepdims=True)
            p = jnp.exp(s)
            p = p * pl.reciprocal(jnp.sum(p, axis=-1, keepdims=True), approx=True)
            heads.append(mm(p.astype(bf16), v * hmask[hd]))            # lands in head-hd lanes
        attn = _treesum(heads)                                         # lane-wise head concat
        o = ln(z + mm(attn.astype(bf16), wread(f"Wo{l}")) + fread(f"b_o{l}"),
               f"ln1_g{l}", f"ln1_b{l}")
        o_bf = o.astype(bf16)
        ff = jnp.maximum(mm(o_bf, wread(f"Wf1{l}")) + fread(f"b_f1{l}"), 0.0)
        ff = mm(ff.astype(bf16), wread(f"Wf2{l}")) + fread(f"b_f2{l}")
        z = ln(o + ff, f"ln2_g{l}", f"ln2_b{l}")

    # ---- encoder_block tail: Linear(D, D) ----
    latent = mm(z.astype(bf16), wread("Wenc")) + fread("b_enc")        # [BS, D]

    # ---- seq_tf + output1 head on the [B, S*D] flatten (no in-kernel reshape) ----
    # lane-dense form: (latent @ Wcat) * blockdiag_mask @ Csum == per-row latent @ W_tf1[s].
    yb = mm(latent.astype(bf16), hread("Wcat")).astype(bf16) * hread("tf_mask")   # [BS, S*50]
    zp = mm(yb, csum_ref[...])                                         # [BS, 50]
    tf1 = jnp.maximum(mm(fread("selB"), zp) + fread("b_tf1"), 0.0)     # [B, 50]
    # TODO(synk): seq_tf Dropout(p=0.1) is identity in this eval-mode forward.
    tf2 = jnp.maximum(mm(tf1, fread("W_tf2")) + fread("b_tf2"), 0.0)   # [B, 10]
    out_ref[...] = mm(tf2, fread("W_out")) + fread("b_out")            # [B, 1]


# ------------------------------ wrapper ------------------------------
@jax.jit
def gcu_transformer_forward(seq, wslab, fslab, hslab, csum):
    x = seq.reshape(BS, M)                                    # fold batch into rows
    zcol = jnp.zeros((BS, 1), seq.dtype)
    x_m1 = jnp.concatenate([zcol, x[:, :M - 1]], axis=1)      # x[:, l-1] (zero at l=0)
    x_p1 = jnp.concatenate([x[:, 1:], zcol], axis=1)          # x[:, l+1] (zero at l=M-1)
    x_all = jnp.concatenate([x, x_m1, x_p1], axis=0)          # [3*BS, M]
    return pl.pallas_call(
        fused_gcu_kernel,
        out_shape=jax.ShapeDtypeStruct((B, 1), jnp.float32),
    )(x_all, wslab, fslab, hslab, csum)


# ------------------------------ parameters ------------------------------
def init_params(key):
    keys = iter(jax.random.split(key, 40))

    def w(shape, scale=0.1):
        return (scale * jax.random.normal(next(keys), shape)).astype(jnp.float32)

    wv, fv, hv = {}, {}, {}

    # Gating: Conv1d weight [S, S, 3] -> per-tap block-diagonal over batch, concatenated to
    # match the [x ; x_m1 ; x_p1] row stacking of the kernel input.
    conv_taps = w((3, S, S))
    eye_b = jnp.eye(B, dtype=jnp.float32)
    bd = [jnp.kron(eye_b, conv_taps[t]) for t in range(3)]            # [BS, BS] each
    wv["conv_cat"] = jnp.concatenate([bd[1], bd[0], bd[2]], axis=1)   # matches [x, x_m1, x_p1]
    fv["conv_b"] = jnp.tile(w((S, 1)), (B, 1))

    wv["Wr"], wv["Vr"], fv["b_r"] = w((M, M)), w((M, M)), w((1, M))
    wv["Wu"], wv["Vu"], fv["b_u"] = w((M, M)), w((M, M)), w((1, M))
    wv["We"], fv["b_e"] = w((M, D)), w((1, D))

    # Fixed sinusoidal positional encoding, tiled over batch; LN affine = identity at init.
    pos = jnp.arange(S, dtype=jnp.float32)[:, None]
    div = jnp.exp(jnp.arange(0, D, 2, dtype=jnp.float32) * (-math.log(10000.0) / D))
    pe = jnp.zeros((S, D), jnp.float32)
    pe = pe.at[:, 0::2].set(jnp.sin(pos * div)).at[:, 1::2].set(jnp.cos(pos * div))
    fv["pe"] = jnp.tile(pe, (B, 1))
    fv["pe_g"], fv["pe_b"] = jnp.ones((1, D)), jnp.zeros((1, D))

    # Additive attention mask: folded batches must not attend across batches.
    rid = jnp.arange(BS) // S
    fv["attn_bias"] = jnp.where(rid[:, None] == rid[None, :], 0.0, NEG_INF).astype(jnp.float32)

    for l in range(DEPTH):
        wv[f"Wq{l}"], wv[f"Wk{l}"] = w((D, D)), w((D, D))
        wv[f"Wv{l}"], wv[f"Wo{l}"] = w((D, D)), w((D, D))
        wv[f"Wf1{l}"], wv[f"Wf2{l}"] = w((D, DFF)), w((DFF, D))
        fv[f"b_o{l}"] = jnp.zeros((1, D))
        fv[f"b_f1{l}"], fv[f"b_f2{l}"] = jnp.zeros((1, DFF)), jnp.zeros((1, D))
        fv[f"ln1_g{l}"], fv[f"ln1_b{l}"] = jnp.ones((1, D)), jnp.zeros((1, D))
        fv[f"ln2_g{l}"], fv[f"ln2_b{l}"] = jnp.ones((1, D)), jnp.zeros((1, D))

    wv["Wenc"], fv["b_enc"] = w((D, D)), jnp.zeros((1, D))

    # seq_tf head: Linear(S*D, 50) laid out lane-dense + block-diag mask + column collapse.
    W_tf1 = w((S * D, O1))
    hv["Wcat"] = jnp.concatenate([W_tf1[s * D:(s + 1) * D, :] for s in range(S)], axis=1)
    hv["tf_mask"] = ((jnp.arange(BS) % S)[:, None] ==
                     (jnp.arange(S * O1) // O1)[None, :]).astype(jnp.float32)
    csum = jnp.tile(jnp.eye(O1, dtype=jnp.float32), (S, 1))           # [S*50, 50]
    fv["selB"] = (jnp.arange(BS)[None, :] // S == jnp.arange(B)[:, None]).astype(jnp.float32)
    fv["b_tf1"] = jnp.zeros((1, O1))
    fv["W_tf2"], fv["b_tf2"] = w((O1, O2)), jnp.zeros((1, O2))
    fv["W_out"], fv["b_out"] = w((O2, 1)), jnp.zeros((1, 1))

    wslab = _pack(wv, W_ENTRIES, W_OFF, W_ROWS, W_WIDTH, jnp.bfloat16)
    fslab = _pack(fv, F_ENTRIES, F_OFF, F_ROWS, F_WIDTH, jnp.float32)
    hslab = _pack(hv, H_ENTRIES, H_OFF, H_ROWS, H_WIDTH, jnp.bfloat16)
    return wslab, fslab, hslab, csum.astype(jnp.bfloat16)


if __name__ == "__main__":
    key = jax.random.PRNGKey(0)
    k_param, k_in = jax.random.split(key)
    wslab, fslab, hslab, csum = init_params(k_param)
    seq = jax.random.normal(k_in, (B, S, M), dtype=jnp.float32)

    out = gcu_transformer_forward(seq, wslab, fslab, hslab, csum)
    out = jax.block_until_ready(out)

    assert out.shape == (B, 1), out.shape
    assert bool(jnp.all(jnp.isfinite(out)))
    print("KERNEL_OK")
</pallas_src>

<mosaic_0001>
module attributes {stable_mosaic.version = 11 : i64} {
  func.func @fused_gcu_kernel(%arg0: memref<48x8xf32, #tpu.memory_space<vmem>>, %arg1: memref<440x128xbf16, #tpu.memory_space<vmem>>, %arg2: memref<312x128xf32, #tpu.memory_space<vmem>>, %arg3: memref<48x400xbf16, #tpu.memory_space<vmem>>, %arg4: memref<400x50xbf16, #tpu.memory_space<vmem>>, %arg5: memref<2x1xf32, #tpu.memory_space<vmem>>) attributes {dimension_semantics = [], scalar_prefetch = 0 : i64, scratch_operands = 0 : i64, tpu.core_type = #tpu.core_type<tc>} {
    %c0 = arith.constant 0 : index
    %c0_0 = arith.constant 0 : index
    %0 = vector.load %arg0[%c0, %c0_0] : memref<48x8xf32, #tpu.memory_space<vmem>>, vector<48x8xf32>
    %1 = arith.truncf %0 : vector<48x8xf32> to vector<48x8xbf16>
    %c0_1 = arith.constant 0 : index
    %c0_2 = arith.constant 0 : index
    %2 = vector.load %arg0[%c0_1, %c0_2] : memref<48x8xf32, #tpu.memory_space<vmem>>, vector<16x8xf32>
    %3 = vector.extract_strided_slice %1 {offsets = [0, 0], sizes = [16, 8], strides = [1, 1]} : vector<48x8xbf16> to vector<16x8xbf16>
    %c0_3 = arith.constant 0 : index
    %c0_4 = arith.constant 0 : index
    %4 = vector.load %arg1[%c0_3, %c0_4] : memref<440x128xbf16, #tpu.memory_space<vmem>>, vector<16x48xbf16>
    %cst = arith.constant dense<0.000000e+00> : vector<16x8xf32>
    %5 = tpu.matmul %4, %1, %cst {dimension_numbers = #tpu.dot_dimension_numbers<[1], [0], [0], [1], [0, 0, 1, 1], [], []>} : vector<16x48xbf16>, vector<48x8xbf16>, vector<16x8xf32> -> vector<16x8xf32>
    %c0_5 = arith.constant 0 : index
    %c0_6 = arith.constant 0 : index
    %6 = vector.load %arg2[%c0_5, %c0_6] : memref<312x128xf32, #tpu.memory_space<vmem>>, vector<16x1xf32>
    %7 = vector.broadcast %6 : vector<16x1xf32> to vector<16x8xf32>
    %8 = arith.addf %5, %7 : vector<16x8xf32>
    %9 = arith.truncf %8 : vector<16x8xf32> to vector<16x8xbf16>
    %c16 = arith.constant 16 : index
    %c0_7 = arith.constant 0 : index
    %10 = vector.load %arg1[%c16, %c0_7] : memref<440x128xbf16, #tpu.memory_space<vmem>>, vector<8x8xbf16>
    %cst_8 = arith.constant dense<0.000000e+00> : vector<16x8xf32>
    %11 = tpu.matmul %9, %10, %cst_8 {dimension_numbers = #tpu.dot_dimension_numbers<[1], [0], [0], [1], [0, 0, 1, 1], [], []>} : vector<16x8xbf16>, vector<8x8xbf16>, vector<16x8xf32> -> vector<16x8xf32>
    %c24 = arith.constant 24 : index
    %c0_9 = arith.constant 0 : index
    %12 = vector.load %arg1[%c24, %c0_9] : memref<440x128xbf16, #tpu.memory_space<vmem>>, vector<8x8xbf16>
    %cst_10 = arith.constant dense<0.000000e+00> : vector<16x8xf32>
    %13 = tpu.matmul %3, %12, %cst_10 {dimension_numbers = #tpu.dot_dimension_numbers<[1], [0], [0], [1], [0, 0, 1, 1], [], []>} : vector<16x8xbf16>, vector<8x8xbf16>, vector<16x8xf32> -> vector<16x8xf32>
    %14 = arith.addf %11, %13 : vector<16x8xf32>
    %c16_11 = arith.constant 16 : index
    %c0_12 = arith.constant 0 : index
    %15 = vector.load %arg2[%c16_11, %c0_12] : memref<312x128xf32, #tpu.memory_space<vmem>>, vector<1x8xf32>
    %16 = vector.broadcast %15 : vector<1x8xf32> to vector<16x8xf32>
    %17 = arith.addf %14, %16 : vector<16x8xf32>
    %18 = arith.negf %17 : vector<16x8xf32>
    %19 = math.exp %18 : vector<16x8xf32>
    %cst_13 = arith.constant 1.000000e+00 : f32
    %20 = vector.broadcast %cst_13 : f32 to vector<16x8xf32>
    %21 = arith.addf %20, %19 : vector<16x8xf32>
    %22 = arith.divf %20, %21 : vector<16x8xf32>
    %c32 = arith.constant 32 : index
    %c0_14 = arith.constant 0 : index
    %23 = vector.load %arg1[%c32, %c0_14] : memref<440x128xbf16, #tpu.memory_space<vmem>>, vector<8x8xbf16>
    %cst_15 = arith.constant dense<0.000000e+00> : vector<16x8xf32>
    %24 = tpu.matmul %9, %23, %cst_15 {dimension_numbers = #tpu.dot_dimension_numbers<[1], [0], [0], [1], [0, 0, 1, 1], [], []>} : vector<16x8xbf16>, vector<8x8xbf16>, vector<16x8xf32> -> vector<16x8xf32>
    %c40 = arith.constant 40 : index
    %c0_16 = arith.constant 0 : index
    %25 = vector.load %arg1[%c40, %c0_16] : memref<440x128xbf16, #tpu.memory_space<vmem>>, vector<8x8xbf16>
    %cst_17 = arith.constant dense<0.000000e+00> : vector<16x8xf32>
    %26 = tpu.matmul %3, %25, %cst_17 {dimension_numbers = #tpu.dot_dimension_numbers<[1], [0], [0], [1], [0, 0, 1, 1], [], []>} : vector<16x8xbf16>, vector<8x8xbf16>, vector<16x8xf32> -> vector<16x8xf32>
    %27 = arith.addf %24, %26 : vector<16x8xf32>
    %c24_18 = arith.constant 24 : index
    %c0_19 = arith.constant 0 : index
    %28 = vector.load %arg2[%c24_18, %c0_19] : memref<312x128xf32, #tpu.memory_space<vmem>>, vector<1x8xf32>
    %29 = vector.broadcast %28 : vector<1x8xf32> to vector<16x8xf32>
    %30 = arith.addf %27, %29 : vector<16x8xf32>
    %31 = arith.negf %30 : vector<16x8xf32>
    %32 = math.exp %31 : vector<16x8xf32>
    %cst_20 = arith.constant 1.000000e+00 : f32
    %33 = vector.broadcast %cst_20 : f32 to vector<16x8xf32>
    %34 = arith.addf %33, %32 : vector<16x8xf32>
    %35 = arith.divf %33, %34 : vector<16x8xf32>
    %36 = arith.mulf %8, %35 : vector<16x8xf32>
    %37 = arith.mulf %2, %22 : vector<16x8xf32>
    %38 = arith.addf %36, %37 : vector<16x8xf32>
    %39 = arith.truncf %38 : vector<16x8xf32> to vector<16x8xbf16>
    %c48 = arith.constant 48 : index
    %c0_21 = arith.constant 0 : index
    %40 = vector.load %arg1[%c48, %c0_21] : memref<440x128xbf16, #tpu.memory_space<vmem>>, vector<8x32xbf16>
    %cst_22 = arith.constant dense<0.000000e+00> : vector<16x32xf32>
    %41 = tpu.matmul %39, %40, %cst_22 {dimension_numbers = #tpu.dot_dimension_numbers<[1], [0], [0], [1], [0, 0, 1, 1], [], []>} : vector<16x8xbf16>, vector<8x32xbf16>, vector<16x32xf32> -> vector<16x32xf32>
    %c32_23 = arith.constant 32 : index
    %c0_24 = arith.constant 0 : index
    %42 = vector.load %arg2[%c32_23, %c0_24] : memref<312x128xf32, #tpu.memory_space<vmem>>, vector<1x32xf32>
    %43 = vector.broadcast %42 : vector<1x32xf32> to vector<16x32xf32>
    %44 = arith.addf %41, %43 : vector<16x32xf32>
    %c40_25 = arith.constant 40 : index
    %c0_26 = arith.constant 0 : index
    %45 = vector.load %arg2[%c40_25, %c0_26] : memref<312x128xf32, #tpu.memory_space<vmem>>, vector<16x32xf32>
    %46 = arith.addf %44, %45 : vector<16x32xf32>
    %cst_27 = arith.constant dense<0.000000e+00> : vector<16xf32>
    %47 = vector.multi_reduction <add>, %46, %cst_27 [1] : vector<16x32xf32> to vector<16xf32>
    %48 = vector.shape_cast %47 : vector<16xf32> to vector<16x1xf32>
    %cst_28 = arith.constant 3.200000e+01 : f32
    %49 = vector.broadcast %cst_28 : f32 to vector<16x1xf32>
    %50 = arith.divf %48, %49 : vector<16x1xf32>
    %51 = vector.broadcast %50 : vector<16x1xf32> to vector<16x32xf32>
    %52 = arith.subf %46, %51 : vector<16x32xf32>
    %53 = arith.mulf %52, %52 : vector<16x32xf32>
    %cst_29 = arith.constant dense<0.000000e+00> : vector<16xf32>
    %54 = vector.multi_reduction <add>, %53, %cst_29 [1] : vector<16x32xf32> to vector<16xf32>
    %55 = vector.shape_cast %54 : vector<16xf32> to vector<16x1xf32>
    %cst_30 = arith.constant 3.200000e+01 : f32
    %56 = vector.broadcast %cst_30 : f32 to vector<16x1xf32>
    %57 = arith.divf %55, %56 : vector<16x1xf32>
    %58 = vector.broadcast %50 : vector<16x1xf32> to vector<16x32xf32>
    %59 = arith.subf %46, %58 : vector<16x32xf32>
    %cst_31 = arith.constant 9.99999997E-7 : f32
    %60 = vector.broadcast %cst_31 : f32 to vector<16x1xf32>
    %61 = arith.addf %57, %60 : vector<16x1xf32>
    %62 = math.rsqrt %61 : vector<16x1xf32>
    %63 = vector.broadcast %62 : vector<16x1xf32> to vector<16x32xf32>
    %64 = arith.mulf %59, %63 : vector<16x32xf32>
    %c56 = arith.constant 56 : index
    %c0_32 = arith.constant 0 : index
    %65 = vector.load %arg2[%c56, %c0_32] : memref<312x128xf32, #tpu.memory_space<vmem>>, vector<1x32xf32>
    %66 = vector.broadcast %65 : vector<1x32xf32> to vector<16x32xf32>
    %67 = arith.mulf %64, %66 : vector<16x32xf32>
    %c64 = arith.constant 64 : index
    %c0_33 = arith.constant 0 : index
    %68 = vector.load %arg2[%c64, %c0_33] : memref<312x128xf32, #tpu.memory_space<vmem>>, vector<1x32xf32>
    %69 = vector.broadcast %68 : vector<1x32xf32> to vector<16x32xf32>
    %70 = arith.addf %67, %69 : vector<16x32xf32>
    %71 = tpu.iota {dimensions = array<i32: 1>} : vector<1x32xi32>
    %c0_i32 = arith.constant 0 : i32
    %72 = vector.broadcast %c0_i32 : i32 to vector<1x32xi32>
    %73 = arith.cmpi sge, %71, %72 : vector<1x32xi32>
    %c8_i32 = arith.constant 8 : i32
    %74 = vector.broadcast %c8_i32 : i32 to vector<1x32xi32>
    %75 = arith.cmpi slt, %71, %74 : vector<1x32xi32>
    %76 = arith.andi %73, %75 : vector<1x32xi1>
    %cst_34 = arith.constant 1.000000e+00 : f32
    %cst_35 = arith.constant 0.000000e+00 : f32
    %77 = vector.broadcast %cst_34 : f32 to vector<1x32xf32>
    %78 = vector.broadcast %cst_35 : f32 to vector<1x32xf32>
    %79 = arith.select %76, %77, %78 : vector<1x32xi1>, vector<1x32xf32>
    %80 = arith.truncf %79 : vector<1x32xf32> to vector<1x32xbf16>
    %c8_i32_36 = arith.constant 8 : i32
    %81 = vector.broadcast %c8_i32_36 : i32 to vector<1x32xi32>
    %82 = arith.cmpi sge, %71, %81 : vector<1x32xi32>
    %c16_i32 = arith.constant 16 : i32
    %83 = vector.broadcast %c16_i32 : i32 to vector<1x32xi32>
    %84 = arith.cmpi slt, %71, %83 : vector<1x32xi32>
    %85 = arith.andi %82, %84 : vector<1x32xi1>
    %cst_37 = arith.constant 1.000000e+00 : f32
    %cst_38 = arith.constant 0.000000e+00 : f32
    %86 = vector.broadcast %cst_37 : f32 to vector<1x32xf32>
    %87 = vector.broadcast %cst_38 : f32 to vector<1x32xf32>
    %88 = arith.select %85, %86, %87 : vector<1x32xi1>, vector<1x32xf32>
    %89 = arith.truncf %88 : vector<1x32xf32> to vector<1x32xbf16>
    %c16_i32_39 = arith.constant 16 : i32
    %90 = vector.broadcast %c16_i32_39 : i32 to vector<1x32xi32>
    %91 = arith.cmpi sge, %71, %90 : vector<1x32xi32>
    %c24_i32 = arith.constant 24 : i32
    %92 = vector.broadcast %c24_i32 : i32 to vector<1x32xi32>
    %93 = arith.cmpi slt, %71, %92 : vector<1x32xi32>
    %94 = arith.andi %91, %93 : vector<1x32xi1>
    %cst_40 = arith.constant 1.000000e+00 : f32
    %cst_41 = arith.constant 0.000000e+00 : f32
    %95 = vector.broadcast %cst_40 : f32 to vector<1x32xf32>
    %96 = vector.broadcast %cst_41 : f32 to vector<1x32xf32>
    %97 = arith.select %94, %95, %96 : vector<1x32xi1>, vector<1x32xf32>
    %98 = arith.truncf %97 : vector<1x32xf32> to vector<1x32xbf16>
    %c24_i32_42 = arith.constant 24 : i32
    %99 = vector.broadcast %c24_i32_42 : i32 to vector<1x32xi32>
    %100 = arith.cmpi sge, %71, %99 : vector<1x32xi32>
    %c32_i32 = arith.constant 32 : i32
    %101 = vector.broadcast %c32_i32 : i32 to vector<1x32xi32>
    %102 = arith.cmpi slt, %71, %101 : vector<1x32xi32>
    %103 = arith.andi %100, %102 : vector<1x32xi1>
    %cst_43 = arith.constant 1.000000e+00 : f32
    %cst_44 = arith.constant 0.000000e+00 : f32
    %104 = vector.broadcast %cst_43 : f32 to vector<1x32xf32>
    %105 = vector.broadcast %cst_44 : f32 to vector<1x32xf32>
    %106 = arith.select %103, %104, %105 : vector<1x32xi1>, vector<1x32xf32>
    %107 = arith.truncf %106 : vector<1x32xf32> to vector<1x32xbf16>
    %c72 = arith.constant 72 : index
    %c0_45 = arith.constant 0 : index
    %108 = vector.load %arg2[%c72, %c0_45] : memref<312x128xf32, #tpu.memory_space<vmem>>, vector<16x16xf32>
    %109 = arith.truncf %70 : vector<16x32xf32> to vector<16x32xbf16>
    %c56_46 = arith.constant 56 : index
    %c0_47 = arith.constant 0 : index
    %110 = vector.load %arg1[%c56_46, %c0_47] : memref<440x128xbf16, #tpu.memory_space<vmem>>, vector<32x32xbf16>
    %cst_48 = arith.constant dense<0.000000e+00> : vector<16x32xf32>
    %111 = tpu.matmul %109, %110, %cst_48 {dimension_numbers = #tpu.dot_dimension_numbers<[1], [0], [0], [1], [0, 0, 1, 1], [], []>} : vector<16x32xbf16>, vector<32x32xbf16>, vector<16x32xf32> -> vector<16x32xf32>
    %112 = arith.truncf %111 : vector<16x32xf32> to vector<16x32xbf16>
    %c88 = arith.constant 88 : index
    %c0_49 = arith.constant 0 : index
    %113 = vector.load %arg1[%c88, %c0_49] : memref<440x128xbf16, #tpu.memory_space<vmem>>, vector<32x32xbf16>
    %cst_50 = arith.constant dense<0.000000e+00> : vector<16x32xf32>
    %114 = tpu.matmul %109, %113, %cst_50 {dimension_numbers = #tpu.dot_dimension_numbers<[1], [0], [0], [1], [0, 0, 1, 1], [], []>} : vector<16x32xbf16>, vector<32x32xbf16>, vector<16x32xf32> -> vector<16x32xf32>
    %115 = arith.truncf %114 : vector<16x32xf32> to vector<16x32xbf16>
    %c120 = arith.constant 120 : index
    %c0_51 = arith.constant 0 : index
    %116 = vector.load %arg1[%c120, %c0_51] : memref<440x128xbf16, #tpu.memory_space<vmem>>, vector<32x32xbf16>
    %cst_52 = arith.constant dense<0.000000e+00> : vector<16x32xf32>
    %117 = tpu.matmul %109, %116, %cst_52 {dimension_numbers = #tpu.dot_dimension_numbers<[1], [0], [0], [1], [0, 0, 1, 1], [], []>} : vector<16x32xbf16>, vector<32x32xbf16>, vector<16x32xf32> -> vector<16x32xf32>
    %118 = arith.truncf %117 : vector<16x32xf32> to vector<16x32xbf16>
    %119 = vector.broadcast %80 : vector<1x32xbf16> to vector<16x32xbf16>
    %120 = arith.mulf %112, %119 : vector<16x32xbf16>
    %cst_53 = arith.constant dense<0.000000e+00> : vector<16x16xf32>
    %121 = tpu.matmul %120, %115, %cst_53 {dimension_numbers = #tpu.dot_dimension_numbers<[1], [1], [0], [0], [0, 0, 1, 0], [], []>} : vector<16x32xbf16>, vector<16x32xbf16>, vector<16x16xf32> -> vector<16x16xf32>
    %cst_54 = arith.constant 0.353553385 : f32
    %122 = vector.broadcast %cst_54 : f32 to vector<16x16xf32>
    %123 = arith.mulf %121, %122 : vector<16x16xf32>
    %124 = arith.addf %123, %108 : vector<16x16xf32>
    %cst_55 = arith.constant dense<0xFF800000> : vector<16xf32>
    %125 = vector.multi_reduction <maximumf>, %124, %cst_55 [1] : vector<16x16xf32> to vector<16xf32>
    %126 = vector.shape_cast %125 : vector<16xf32> to vector<16x1xf32>
    %127 = vector.broadcast %126 : vector<16x1xf32> to vector<16x16xf32>
    %128 = arith.subf %124, %127 : vector<16x16xf32>
    %129 = math.exp %128 : vector<16x16xf32>
    %cst_56 = arith.constant dense<0.000000e+00> : vector<16xf32>
    %130 = vector.multi_reduction <add>, %129, %cst_56 [1] : vector<16x16xf32> to vector<16xf32>
    %131 = vector.shape_cast %130 : vector<16xf32> to vector<16x1xf32>
    %132 = tpu.reciprocal %131 {approx = true} : vector<16x1xf32> -> vector<16x1xf32>
    %133 = vector.broadcast %132 : vector<16x1xf32> to vector<16x16xf32>
    %134 = arith.mulf %129, %133 : vector<16x16xf32>
    %135 = arith.truncf %134 : vector<16x16xf32> to vector<16x16xbf16>
    %136 = vector.broadcast %80 : vector<1x32xbf16> to vector<16x32xbf16>
    %137 = arith.mulf %118, %136 : vector<16x32xbf16>
    %cst_57 = arith.constant dense<0.000000e+00> : vector<16x32xf32>
    %138 = tpu.matmul %135, %137, %cst_57 {dimension_numbers = #tpu.dot_dimension_numbers<[1], [0], [0], [1], [0, 0, 1, 1], [], []>} : vector<16x16xbf16>, vector<16x32xbf16>, vector<16x32xf32> -> vector<16x32xf32>
    %139 = vector.broadcast %89 : vector<1x32xbf16> to vector<16x32xbf16>
    %140 = arith.mulf %112, %139 : vector<16x32xbf16>
    %cst_58 = arith.constant dense<0.000000e+00> : vector<16x16xf32>
    %141 = tpu.matmul %140, %115, %cst_58 {dimension_numbers = #tpu.dot_dimension_numbers<[1], [1], [0], [0], [0, 0, 1, 0], [], []>} : vector<16x32xbf16>, vector<16x32xbf16>, vector<16x16xf32> -> vector<16x16xf32>
    %cst_59 = arith.constant 0.353553385 : f32
    %142 = vector.broadcast %cst_59 : f32 to vector<16x16xf32>
    %143 = arith.mulf %141, %142 : vector<16x16xf32>
    %144 = arith.addf %143, %108 : vector<16x16xf32>
    %cst_60 = arith.constant dense<0xFF800000> : vector<16xf32>
    %145 = vector.multi_reduction <maximumf>, %144, %cst_60 [1] : vector<16x16xf32> to vector<16xf32>
    %146 = vector.shape_cast %145 : vector<16xf32> to vector<16x1xf32>
    %147 = vector.broadcast %146 : vector<16x1xf32> to vector<16x16xf32>
    %148 = arith.subf %144, %147 : vector<16x16xf32>
    %149 = math.exp %148 : vector<16x16xf32>
    %cst_61 = arith.constant dense<0.000000e+00> : vector<16xf32>
    %150 = vector.multi_reduction <add>, %149, %cst_61 [1] : vector<16x16xf32> to vector<16xf32>
    %151 = vector.shape_cast %150 : vector<16xf32> to vector<16x1xf32>
    %152 = tpu.reciprocal %151 {approx = true} : vector<16x1xf32> -> vector<16x1xf32>
    %153 = vector.broadcast %152 : vector<16x1xf32> to vector<16x16xf32>
    %154 = arith.mulf %149, %153 : vector<16x16xf32>
    %155 = arith.truncf %154 : vector<16x16xf32> to vector<16x16xbf16>
    %156 = vector.broadcast %89 : vector<1x32xbf16> to vector<16x32xbf16>
    %157 = arith.mulf %118, %156 : vector<16x32xbf16>
    %cst_62 = arith.constant dense<0.000000e+00> : vector<16x32xf32>
    %158 = tpu.matmul %155, %157, %cst_62 {dimension_numbers = #tpu.dot_dimension_numbers<[1], [0], [0], [1], [0, 0, 1, 1], [], []>} : vector<16x16xbf16>, vector<16x32xbf16>, vector<16x32xf32> -> vector<16x32xf32>
    %159 = vector.broadcast %98 : vector<1x32xbf16> to vector<16x32xbf16>
    %160 = arith.mulf %112, %159 : vector<16x32xbf16>
    %cst_63 = arith.constant dense<0.000000e+00> : vector<16x16xf32>
    %161 = tpu.matmul %160, %115, %cst_63 {dimension_numbers = #tpu.dot_dimension_numbers<[1], [1], [0], [0], [0, 0, 1, 0], [], []>} : vector<16x32xbf16>, vector<16x32xbf16>, vector<16x16xf32> -> vector<16x16xf32>
    %cst_64 = arith.constant 0.353553385 : f32
    %162 = vector.broadcast %cst_64 : f32 to vector<16x16xf32>
    %163 = arith.mulf %161, %162 : vector<16x16xf32>
    %164 = arith.addf %163, %108 : vector<16x16xf32>
    %cst_65 = arith.constant dense<0xFF800000> : vector<16xf32>
    %165 = vector.multi_reduction <maximumf>, %164, %cst_65 [1] : vector<16x16xf32> to vector<16xf32>
    %166 = vector.shape_cast %165 : vector<16xf32> to vector<16x1xf32>
    %167 = vector.broadcast %166 : vector<16x1xf32> to vector<16x16xf32>
    %168 = arith.subf %164, %167 : vector<16x16xf32>
    %169 = math.exp %168 : vector<16x16xf32>
    %cst_66 = arith.constant dense<0.000000e+00> : vector<16xf32>
    %170 = vector.multi_reduction <add>, %169, %cst_66 [1] : vector<16x16xf32> to vector<16xf32>
    %171 = vector.shape_cast %170 : vector<16xf32> to vector<16x1xf32>
    %172 = tpu.reciprocal %171 {approx = true} : vector<16x1xf32> -> vector<16x1xf32>
    %173 = vector.broadcast %172 : vector<16x1xf32> to vector<16x16xf32>
    %174 = arith.mulf %169, %173 : vector<16x16xf32>
    %175 = arith.truncf %174 : vector<16x16xf32> to vector<16x16xbf16>
    %176 = vector.broadcast %98 : vector<1x32xbf16> to vector<16x32xbf16>
    %177 = arith.mulf %118, %176 : vector<16x32xbf16>
    %cst_67 = arith.constant dense<0.000000e+00> : vector<16x32xf32>
    %178 = tpu.matmul %175, %177, %cst_67 {dimension_numbers = #tpu.dot_dimension_numbers<[1], [0], [0], [1], [0, 0, 1, 1], [], []>} : vector<16x16xbf16>, vector<16x32xbf16>, vector<16x32xf32> -> vector<16x32xf32>
    %179 = vector.broadcast %107 : vector<1x32xbf16> to vector<16x32xbf16>
    %180 = arith.mulf %112, %179 : vector<16x32xbf16>
    %cst_68 = arith.constant dense<0.000000e+00> : vector<16x16xf32>
    %181 = tpu.matmul %180, %115, %cst_68 {dimension_numbers = #tpu.dot_dimension_numbers<[1], [1], [0], [0], [0, 0, 1, 0], [], []>} : vector<16x32xbf16>, vector<16x32xbf16>, vector<16x16xf32> -> vector<16x16xf32>
    %cst_69 = arith.constant 0.353553385 : f32
    %182 = vector.broadcast %cst_69 : f32 to vector<16x16xf32>
    %183 = arith.mulf %181, %182 : vector<16x16xf32>
    %184 = arith.addf %183, %108 : vector<16x16xf32>
    %cst_70 = arith.constant dense<0xFF800000> : vector<16xf32>
    %185 = vector.multi_reduction <maximumf>, %184, %cst_70 [1] : vector<16x16xf32> to vector<16xf32>
    %186 = vector.shape_cast %185 : vector<16xf32> to vector<16x1xf32>
    %187 = vector.broadcast %186 : vector<16x1xf32> to vector<16x16xf32>
    %188 = arith.subf %184, %187 : vector<16x16xf32>
    %189 = math.exp %188 : vector<16x16xf32>
    %cst_71 = arith.constant dense<0.000000e+00> : vector<16xf32>
    %190 = vector.multi_reduction <add>, %189, %cst_71 [1] : vector<16x16xf32> to vector<16xf32>
    %191 = vector.shape_cast %190 : vector<16xf32> to vector<16x1xf32>
    %192 = tpu.reciprocal %191 {approx = true} : vector<16x1xf32> -> vector<16x1xf32>
    %193 = vector.broadcast %192 : vector<16x1xf32> to vector<16x16xf32>
    %194 = arith.mulf %189, %193 : vector<16x16xf32>
    %195 = arith.truncf %194 : vector<16x16xf32> to vector<16x16xbf16>
    %196 = vector.broadcast %107 : vector<1x32xbf16> to vector<16x32xbf16>
    %197 = arith.mulf %118, %196 : vector<16x32xbf16>
    %cst_72 = arith.constant dense<0.000000e+00> : vector<16x32xf32>
    %198 = tpu.matmul %195, %197, %cst_72 {dimension_numbers = #tpu.dot_dimension_numbers<[1], [0], [0], [1], [0, 0, 1, 1], [], []>} : vector<16x16xbf16>, vector<16x32xbf16>, vector<16x32xf32> -> vector<16x32xf32>
    %199 = arith.addf %138, %158 : vector<16x32xf32>
    %200 = arith.addf %178, %198 : vector<16x32xf32>
    %201 = arith.addf %199, %200 : vector<16x32xf32>
    %202 = arith.truncf %201 : vector<16x32xf32> to vector<16x32xbf16>
    %c152 = arith.constant 152 : index
    %c0_73 = arith.constant 0 : index
    %203 = vector.load %arg1[%c152, %c0_73] : memref<440x128xbf16, #tpu.memory_space<vmem>>, vector<32x32xbf16>
    %cst_74 = arith.constant dense<0.000000e+00> : vector<16x32xf32>
    %204 = tpu.matmul %202, %203, %cst_74 {dimension_numbers = #tpu.dot_dimension_numbers<[1], [0], [0], [1], [0, 0, 1, 1], [], []>} : vector<16x32xbf16>, vector<32x32xbf16>, vector<16x32xf32> -> vector<16x32xf32>
    %205 = arith.addf %70, %204 : vector<16x32xf32>
    %c88_75 = arith.constant 88 : index
    %c0_76 = arith.constant 0 : index
    %206 = vector.load %arg2[%c88_75, %c0_76] : memref<312x128xf32, #tpu.memory_space<vmem>>, vector<1x32xf32>
    %207 = vector.broadcast %206 : vector<1x32xf32> to vector<16x32xf32>
    %208 = arith.addf %205, %207 : vector<16x32xf32>
    %cst_77 = arith.constant dense<0.000000e+00> : vector<16xf32>
    %209 = vector.multi_reduction <add>, %208, %cst_77 [1] : vector<16x32xf32> to vector<16xf32>
    %210 = vector.shape_cast %209 : vector<16xf32> to vector<16x1xf32>
    %cst_78 = arith.constant 3.200000e+01 : f32
    %211 = vector.broadcast %cst_78 : f32 to vector<16x1xf32>
    %212 = arith.divf %210, %211 : vector<16x1xf32>
    %213 = vector.broadcast %212 : vector<16x1xf32> to vector<16x32xf32>
    %214 = arith.subf %208, %213 : vector<16x32xf32>
    %215 = arith.mulf %214, %214 : vector<16x32xf32>
    %cst_79 = arith.constant dense<0.000000e+00> : vector<16xf32>
    %216 = vector.multi_reduction <add>, %215, %cst_79 [1] : vector<16x32xf32> to vector<16xf32>
    %217 = vector.shape_cast %216 : vector<16xf32> to vector<16x1xf32>
    %cst_80 = arith.constant 3.200000e+01 : f32
    %218 = vector.broadcast %cst_80 : f32 to vector<16x1xf32>
    %219 = arith.divf %217, %218 : vector<16x1xf32>
    %220 = vector.broadcast %212 : vector<16x1xf32> to vector<16x32xf32>
    %221 = arith.subf %208, %220 : vector<16x32xf32>
    %cst_81 = arith.constant 9.99999997E-7 : f32
    %222 = vector.broadcast %cst_81 : f32 to vector<16x1xf32>
    %223 = arith.addf %219, %222 : vector<16x1xf32>
    %224 = math.rsqrt %223 : vector<16x1xf32>
    %225 = vector.broadcast %224 : vector<16x1xf32> to vector<16x32xf32>
    %226 = arith.mulf %221, %225 : vector<16x32xf32>
    %c96 = arith.constant 96 : index
    %c0_82 = arith.constant 0 : index
    %227 = vector.load %arg2[%c96, %c0_82] : memref<312x128xf32, #tpu.memory_space<vmem>>, vector<1x32xf32>
    %228 = vector.broadcast %227 : vector<1x32xf32> to vector<16x32xf32>
    %229 = arith.mulf %226, %228 : vector<16x32xf32>
    %c104 = arith.constant 104 : index
    %c0_83 = arith.constant 0 : index
    %230 = vector.load %arg2[%c104, %c0_83] : memref<312x128xf32, #tpu.memory_space<vmem>>, vector<1x32xf32>
    %231 = vector.broadcast %230 : vector<1x32xf32> to vector<16x32xf32>
    %232 = arith.addf %229, %231 : vector<16x32xf32>
    %233 = arith.truncf %232 : vector<16x32xf32> to vector<16x32xbf16>
    %c184 = arith.constant 184 : index
    %c0_84 = arith.constant 0 : index
    %234 = vector.load %arg1[%c184, %c0_84] : memref<440x128xbf16, #tpu.memory_space<vmem>>, vector<32x16xbf16>
    %cst_85 = arith.constant dense<0.000000e+00> : vector<16x16xf32>
    %235 = tpu.matmul %233, %234, %cst_85 {dimension_numbers = #tpu.dot_dimension_numbers<[1], [0], [0], [1], [0, 0, 1, 1], [], []>} : vector<16x32xbf16>, vector<32x16xbf16>, vector<16x16xf32> -> vector<16x16xf32>
    %c112 = arith.constant 112 : index
    %c0_86 = arith.constant 0 : index
    %236 = vector.load %arg2[%c112, %c0_86] : memref<312x128xf32, #tpu.memory_space<vmem>>, vector<1x16xf32>
    %237 = vector.broadcast %236 : vector<1x16xf32> to vector<16x16xf32>
    %238 = arith.addf %235, %237 : vector<16x16xf32>
    %cst_87 = arith.constant 0.000000e+00 : f32
    %239 = vector.broadcast %cst_87 : f32 to vector<16x16xf32>
    %240 = arith.maximumf %238, %239 : vector<16x16xf32>
    %241 = arith.truncf %240 : vector<16x16xf32> to vector<16x16xbf16>
    %c216 = arith.constant 216 : index
    %c0_88 = arith.constant 0 : index
    %242 = vector.load %arg1[%c216, %c0_88] : memref<440x128xbf16, #tpu.memory_space<vmem>>, vector<16x32xbf16>
    %cst_89 = arith.constant dense<0.000000e+00> : vector<16x32xf32>
    %243 = tpu.matmul %241, %242, %cst_89 {dimension_numbers = #tpu.dot_dimension_numbers<[1], [0], [0], [1], [0, 0, 1, 1], [], []>} : vector<16x16xbf16>, vector<16x32xbf16>, vector<16x32xf32> -> vector<16x32xf32>
    %c120_90 = arith.constant 120 : index
    %c0_91 = arith.constant 0 : index
    %244 = vector.load %arg2[%c120_90, %c0_91] : memref<312x128xf32, #tpu.memory_space<vmem>>, vector<1x32xf32>
    %245 = vector.broadcast %244 : vector<1x32xf32> to vector<16x32xf32>
    %246 = arith.addf %243, %245 : vector<16x32xf32>
    %247 = arith.addf %232, %246 : vector<16x32xf32>
    %cst_92 = arith.constant dense<0.000000e+00> : vector<16xf32>
    %248 = vector.multi_reduction <add>, %247, %cst_92 [1] : vector<16x32xf32> to vector<16xf32>
    %249 = vector.shape_cast %248 : vector<16xf32> to vector<16x1xf32>
    %cst_93 = arith.constant 3.200000e+01 : f32
    %250 = vector.broadcast %cst_93 : f32 to vector<16x1xf32>
    %251 = arith.divf %249, %250 : vector<16x1xf32>
    %252 = vector.broadcast %251 : vector<16x1xf32> to vector<16x32xf32>
    %253 = arith.subf %247, %252 : vector<16x32xf32>
    %254 = arith.mulf %253, %253 : vector<16x32xf32>
    %cst_94 = arith.constant dense<0.000000e+00> : vector<16xf32>
    %255 = vector.multi_reduction <add>, %254, %cst_94 [1] : vector<16x32xf32> to vector<16xf32>
    %256 = vector.shape_cast %255 : vector<16xf32> to vector<16x1xf32>
    %cst_95 = arith.constant 3.200000e+01 : f32
    %257 = vector.broadcast %cst_95 : f32 to vector<16x1xf32>
    %258 = arith.divf %256, %257 : vector<16x1xf32>
    %259 = vector.broadcast %251 : vector<16x1xf32> to vector<16x32xf32>
    %260 = arith.subf %247, %259 : vector<16x32xf32>
    %cst_96 = arith.constant 9.99999997E-7 : f32
    %261 = vector.broadcast %cst_96 : f32 to vector<16x1xf32>
    %262 = arith.addf %258, %261 : vector<16x1xf32>
    %263 = math.rsqrt %262 : vector<16x1xf32>
    %264 = vector.broadcast %263 : vector<16x1xf32> to vector<16x32xf32>
    %265 = arith.mulf %260, %264 : vector<16x32xf32>
    %c128 = arith.constant 128 : index
    %c0_97 = arith.constant 0 : index
    %266 = vector.load %arg2[%c128, %c0_97] : memref<312x128xf32, #tpu.memory_space<vmem>>, vector<1x32xf32>
    %267 = vector.broadcast %266 : vector<1x32xf32> to vector<16x32xf32>
    %268 = arith.mulf %265, %267 : vector<16x32xf32>
    %c136 = arith.constant 136 : index
    %c0_98 = arith.constant 0 : index
    %269 = vector.load %arg2[%c136, %c0_98] : memref<312x128xf32, #tpu.memory_space<vmem>>, vector<1x32xf32>
    %270 = vector.broadcast %269 : vector<1x32xf32> to vector<16x32xf32>
    %271 = arith.addf %268, %270 : vector<16x32xf32>
    %272 = arith.truncf %271 : vector<16x32xf32> to vector<16x32xbf16>
    %c232 = arith.constant 232 : index
    %c0_99 = arith.constant 0 : index
    %273 = vector.load %arg1[%c232, %c0_99] : memref<440x128xbf16, #tpu.memory_space<vmem>>, vector<32x32xbf16>
    %cst_100 = arith.constant dense<0.000000e+00> : vector<16x32xf32>
    %274 = tpu.matmul %272, %273, %cst_100 {dimension_numbers = #tpu.dot_dimension_numbers<[1], [0], [0], [1], [0, 0, 1, 1], [], []>} : vector<16x32xbf16>, vector<32x32xbf16>, vector<16x32xf32> -> vector<16x32xf32>
    %275 = arith.truncf %274 : vector<16x32xf32> to vector<16x32xbf16>
    %c264 = arith.constant 264 : index
    %c0_101 = arith.constant 0 : index
    %276 = vector.load %arg1[%c264, %c0_101] : memref<440x128xbf16, #tpu.memory_space<vmem>>, vector<32x32xbf16>
    %cst_102 = arith.constant dense<0.000000e+00> : vector<16x32xf32>
    %277 = tpu.matmul %272, %276, %cst_102 {dimension_numbers = #tpu.dot_dimension_numbers<[1], [0], [0], [1], [0, 0, 1, 1], [], []>} : vector<16x32xbf16>, vector<32x32xbf16>, vector<16x32xf32> -> vector<16x32xf32>
    %278 = arith.truncf %277 : vector<16x32xf32> to vector<16x32xbf16>
    %c296 = arith.constant 296 : index
    %c0_103 = arith.constant 0 : index
    %279 = vector.load %arg1[%c296, %c0_103] : memref<440x128xbf16, #tpu.memory_space<vmem>>, vector<32x32xbf16>
    %cst_104 = arith.constant dense<0.000000e+00> : vector<16x32xf32>
    %280 = tpu.matmul %272, %279, %cst_104 {dimension_numbers = #tpu.dot_dimension_numbers<[1], [0], [0], [1], [0, 0, 1, 1], [], []>} : vector<16x32xbf16>, vector<32x32xbf16>, vector<16x32xf32> -> vector<16x32xf32>
    %281 = arith.truncf %280 : vector<16x32xf32> to vector<16x32xbf16>
    %282 = vector.broadcast %80 : vector<1x32xbf16> to vector<16x32xbf16>
    %283 = arith.mulf %275, %282 : vector<16x32xbf16>
    %cst_105 = arith.constant dense<0.000000e+00> : vector<16x16xf32>
    %284 = tpu.matmul %283, %278, %cst_105 {dimension_numbers = #tpu.dot_dimension_numbers<[1], [1], [0], [0], [0, 0, 1, 0], [], []>} : vector<16x32xbf16>, vector<16x32xbf16>, vector<16x16xf32> -> vector<16x16xf32>
    %cst_106 = arith.constant 0.353553385 : f32
    %285 = vector.broadcast %cst_106 : f32 to vector<16x16xf32>
    %286 = arith.mulf %284, %285 : vector<16x16xf32>
    %287 = arith.addf %286, %108 : vector<16x16xf32>
    %cst_107 = arith.constant dense<0xFF800000> : vector<16xf32>
    %288 = vector.multi_reduction <maximumf>, %287, %cst_107 [1] : vector<16x16xf32> to vector<16xf32>
    %289 = vector.shape_cast %288 : vector<16xf32> to vector<16x1xf32>
    %290 = vector.broadcast %289 : vector<16x1xf32> to vector<16x16xf32>
    %291 = arith.subf %287, %290 : vector<16x16xf32>
    %292 = math.exp %291 : vector<16x16xf32>
    %cst_108 = arith.constant dense<0.000000e+00> : vector<16xf32>
    %293 = vector.multi_reduction <add>, %292, %cst_108 [1] : vector<16x16xf32> to vector<16xf32>
    %294 = vector.shape_cast %293 : vector<16xf32> to vector<16x1xf32>
    %295 = tpu.reciprocal %294 {approx = true} : vector<16x1xf32> -> vector<16x1xf32>
    %296 = vector.broadcast %295 : vector<16x1xf32> to vector<16x16xf32>
    %297 = arith.mulf %292, %296 : vector<16x16xf32>
    %298 = arith.truncf %297 : vector<16x16xf32> to vector<16x16xbf16>
    %299 = vector.broadcast %80 : vector<1x32xbf16> to vector<16x32xbf16>
    %300 = arith.mulf %281, %299 : vector<16x32xbf16>
    %cst_109 = arith.constant dense<0.000000e+00> : vector<16x32xf32>
    %301 = tpu.matmul %298, %300, %cst_109 {dimension_numbers = #tpu.dot_dimension_numbers<[1], [0], [0], [1], [0, 0, 1, 1], [], []>} : vector<16x16xbf16>, vector<16x32xbf16>, vector<16x32xf32> -> vector<16x32xf32>
    %302 = vector.broadcast %89 : vector<1x32xbf16> to vector<16x32xbf16>
    %303 = arith.mulf %275, %302 : vector<16x32xbf16>
    %cst_110 = arith.constant dense<0.000000e+00> : vector<16x16xf32>
    %304 = tpu.matmul %303, %278, %cst_110 {dimension_numbers = #tpu.dot_dimension_numbers<[1], [1], [0], [0], [0, 0, 1, 0], [], []>} : vector<16x32xbf16>, vector<16x32xbf16>, vector<16x16xf32> -> vector<16x16xf32>
    %cst_111 = arith.constant 0.353553385 : f32
    %305 = vector.broadcast %cst_111 : f32 to vector<16x16xf32>
    %306 = arith.mulf %304, %305 : vector<16x16xf32>
    %307 = arith.addf %306, %108 : vector<16x16xf32>
    %cst_112 = arith.constant dense<0xFF800000> : vector<16xf32>
    %308 = vector.multi_reduction <maximumf>, %307, %cst_112 [1] : vector<16x16xf32> to vector<16xf32>
    %309 = vector.shape_cast %308 : vector<16xf32> to vector<16x1xf32>
    %310 = vector.broadcast %309 : vector<16x1xf32> to vector<16x16xf32>
    %311 = arith.subf %307, %310 : vector<16x16xf32>
    %312 = math.exp %311 : vector<16x16xf32>
    %cst_113 = arith.constant dense<0.000000e+00> : vector<16xf32>
    %313 = vector.multi_reduction <add>, %312, %cst_113 [1] : vector<16x16xf32> to vector<16xf32>
    %314 = vector.shape_cast %313 : vector<16xf32> to vector<16x1xf32>
    %315 = tpu.reciprocal %314 {approx = true} : vector<16x1xf32> -> vector<16x1xf32>
    %316 = vector.broadcast %315 : vector<16x1xf32> to vector<16x16xf32>
    %317 = arith.mulf %312, %316 : vector<16x16xf32>
    %318 = arith.truncf %317 : vector<16x16xf32> to vector<16x16xbf16>
    %319 = vector.broadcast %89 : vector<1x32xbf16> to vector<16x32xbf16>
    %320 = arith.mulf %281, %319 : vector<16x32xbf16>
    %cst_114 = arith.constant dense<0.000000e+00> : vector<16x32xf32>
    %321 = tpu.matmul %318, %320, %cst_114 {dimension_numbers = #tpu.dot_dimension_numbers<[1], [0], [0], [1], [0, 0, 1, 1], [], []>} : vector<16x16xbf16>, vector<16x32xbf16>, vector<16x32xf32> -> vector<16x32xf32>
    %322 = vector.broadcast %98 : vector<1x32xbf16> to vector<16x32xbf16>
    %323 = arith.mulf %275, %322 : vector<16x32xbf16>
    %cst_115 = arith.constant dense<0.000000e+00> : vector<16x16xf32>
    %324 = tpu.matmul %323, %278, %cst_115 {dimension_numbers = #tpu.dot_dimension_numbers<[1], [1], [0], [0], [0, 0, 1, 0], [], []>} : vector<16x32xbf16>, vector<16x32xbf16>, vector<16x16xf32> -> vector<16x16xf32>
    %cst_116 = arith.constant 0.353553385 : f32
    %325 = vector.broadcast %cst_116 : f32 to vector<16x16xf32>
    %326 = arith.mulf %324, %325 : vector<16x16xf32>
    %327 = arith.addf %326, %108 : vector<16x16xf32>
    %cst_117 = arith.constant dense<0xFF800000> : vector<16xf32>
    %328 = vector.multi_reduction <maximumf>, %327, %cst_117 [1] : vector<16x16xf32> to vector<16xf32>
    %329 = vector.shape_cast %328 : vector<16xf32> to vector<16x1xf32>
    %330 = vector.broadcast %329 : vector<16x1xf32> to vector<16x16xf32>
    %331 = arith.subf %327, %330 : vector<16x16xf32>
    %332 = math.exp %331 : vector<16x16xf32>
    %cst_118 = arith.constant dense<0.000000e+00> : vector<16xf32>
    %333 = vector.multi_reduction <add>, %332, %cst_118 [1] : vector<16x16xf32> to vector<16xf32>
    %334 = vector.shape_cast %333 : vector<16xf32> to vector<16x1xf32>
    %335 = tpu.reciprocal %334 {approx = true} : vector<16x1xf32> -> vector<16x1xf32>
    %336 = vector.broadcast %335 : vector<16x1xf32> to vector<16x16xf32>
    %337 = arith.mulf %332, %336 : vector<16x16xf32>
    %338 = arith.truncf %337 : vector<16x16xf32> to vector<16x16xbf16>
    %339 = vector.broadcast %98 : vector<1x32xbf16> to vector<16x32xbf16>
    %340 = arith.mulf %281, %339 : vector<16x32xbf16>
    %cst_119 = arith.constant dense<0.000000e+00> : vector<16x32xf32>
    %341 = tpu.matmul %338, %340, %cst_119 {dimension_numbers = #tpu.dot_dimension_numbers<[1], [0], [0], [1], [0, 0, 1, 1], [], []>} : vector<16x16xbf16>, vector<16x32xbf16>, vector<16x32xf32> -> vector<16x32xf32>
    %342 = vector.broadcast %107 : vector<1x32xbf16> to vector<16x32xbf16>
    %343 = arith.mulf %275, %342 : vector<16x32xbf16>
    %cst_120 = arith.constant dense<0.000000e+00> : vector<16x16xf32>
    %344 = tpu.matmul %343, %278, %cst_120 {dimension_numbers = #tpu.dot_dimension_numbers<[1], [1], [0], [0], [0, 0, 1, 0], [], []>} : vector<16x32xbf16>, vector<16x32xbf16>, vector<16x16xf32> -> vector<16x16xf32>
    %cst_121 = arith.constant 0.353553385 : f32
    %345 = vector.broadcast %cst_121 : f32 to vector<16x16xf32>
    %346 = arith.mulf %344, %345 : vector<16x16xf32>
    %347 = arith.addf %346, %108 : vector<16x16xf32>
    %cst_122 = arith.constant dense<0xFF800000> : vector<16xf32>
    %348 = vector.multi_reduction <maximumf>, %347, %cst_122 [1] : vector<16x16xf32> to vector<16xf32>
    %349 = vector.shape_cast %348 : vector<16xf32> to vector<16x1xf32>
    %350 = vector.broadcast %349 : vector<16x1xf32> to vector<16x16xf32>
    %351 = arith.subf %347, %350 : vector<16x16xf32>
    %352 = math.exp %351 : vector<16x16xf32>
    %cst_123 = arith.constant dense<0.000000e+00> : vector<16xf32>
    %353 = vector.multi_reduction <add>, %352, %cst_123 [1] : vector<16x16xf32> to vector<16xf32>
    %354 = vector.shape_cast %353 : vector<16xf32> to vector<16x1xf32>
    %355 = tpu.reciprocal %354 {approx = true} : vector<16x1xf32> -> vector<16x1xf32>
    %356 = vector.broadcast %355 : vector<16x1xf32> to vector<16x16xf32>
    %357 = arith.mulf %352, %356 : vector<16x16xf32>
    %358 = arith.truncf %357 : vector<16x16xf32> to vector<16x16xbf16>
    %359 = vector.broadcast %107 : vector<1x32xbf16> to vector<16x32xbf16>
    %360 = arith.mulf %281, %359 : vector<16x32xbf16>
    %cst_124 = arith.constant dense<0.000000e+00> : vector<16x32xf32>
    %361 = tpu.matmul %358, %360, %cst_124 {dimension_numbers = #tpu.dot_dimension_numbers<[1], [0], [0], [1], [0, 0, 1, 1], [], []>} : vector<16x16xbf16>, vector<16x32xbf16>, vector<16x32xf32> -> vector<16x32xf32>
    %362 = arith.addf %301, %321 : vector<16x32xf32>
    %363 = arith.addf %341, %361 : vector<16x32xf32>
    %364 = arith.addf %362, %363 : vector<16x32xf32>
    %365 = arith.truncf %364 : vector<16x32xf32> to vector<16x32xbf16>
    %c328 = arith.constant 328 : index
    %c0_125 = arith.constant 0 : index
    %366 = vector.load %arg1[%c328, %c0_125] : memref<440x128xbf16, #tpu.memory_space<vmem>>, vector<32x32xbf16>
    %cst_126 = arith.constant dense<0.000000e+00> : vector<16x32xf32>
    %367 = tpu.matmul %365, %366, %cst_126 {dimension_numbers = #tpu.dot_dimension_numbers<[1], [0], [0], [1], [0, 0, 1, 1], [], []>} : vector<16x32xbf16>, vector<32x32xbf16>, vector<16x32xf32> -> vector<16x32xf32>
    %368 = arith.addf %271, %367 : vector<16x32xf32>
    %c144 = arith.constant 144 : index
    %c0_127 = arith.constant 0 : index
    %369 = vector.load %arg2[%c144, %c0_127] : memref<312x128xf32, #tpu.memory_space<vmem>>, vector<1x32xf32>
    %370 = vector.broadcast %369 : vector<1x32xf32> to vector<16x32xf32>
    %371 = arith.addf %368, %370 : vector<16x32xf32>
    %cst_128 = arith.constant dense<0.000000e+00> : vector<16xf32>
    %372 = vector.multi_reduction <add>, %371, %cst_128 [1] : vector<16x32xf32> to vector<16xf32>
    %373 = vector.shape_cast %372 : vector<16xf32> to vector<16x1xf32>
    %cst_129 = arith.constant 3.200000e+01 : f32
    %374 = vector.broadcast %cst_129 : f32 to vector<16x1xf32>
    %375 = arith.divf %373, %374 : vector<16x1xf32>
    %376 = vector.broadcast %375 : vector<16x1xf32> to vector<16x32xf32>
    %377 = arith.subf %371, %376 : vector<16x32xf32>
    %378 = arith.mulf %377, %377 : vector<16x32xf32>
    %cst_130 = arith.constant dense<0.000000e+00> : vector<16xf32>
    %379 = vector.multi_reduction <add>, %378, %cst_130 [1] : vector<16x32xf32> to vector<16xf32>
    %380 = vector.shape_cast %379 : vector<16xf32> to vector<16x1xf32>
    %cst_131 = arith.constant 3.200000e+01 : f32
    %381 = vector.broadcast %cst_131 : f32 to vector<16x1xf32>
    %382 = arith.divf %380, %381 : vector<16x1xf32>
    %383 = vector.broadcast %375 : vector<16x1xf32> to vector<16x32xf32>
    %384 = arith.subf %371, %383 : vector<16x32xf32>
    %cst_132 = arith.constant 9.99999997E-7 : f32
    %385 = vector.broadcast %cst_132 : f32 to vector<16x1xf32>
    %386 = arith.addf %382, %385 : vector<16x1xf32>
    %387 = math.rsqrt %386 : vector<16x1xf32>
    %388 = vector.broadcast %387 : vector<16x1xf32> to vector<16x32xf32>
    %389 = arith.mulf %384, %388 : vector<16x32xf32>
    %c152_133 = arith.constant 152 : index
    %c0_134 = arith.constant 0 : index
    %390 = vector.load %arg2[%c152_133, %c0_134] : memref<312x128xf32, #tpu.memory_space<vmem>>, vector<1x32xf32>
    %391 = vector.broadcast %390 : vector<1x32xf32> to vector<16x32xf32>
    %392 = arith.mulf %389, %391 : vector<16x32xf32>
    %c160 = arith.constant 160 : index
    %c0_135 = arith.constant 0 : index
    %393 = vector.load %arg2[%c160, %c0_135] : memref<312x128xf32, #tpu.memory_space<vmem>>, vector<1x32xf32>
    %394 = vector.broadcast %393 : vector<1x32xf32> to vector<16x32xf32>
    %395 = arith.addf %392, %394 : vector<16x32xf32>
    %396 = arith.truncf %395 : vector<16x32xf32> to vector<16x32xbf16>
    %c360 = arith.constant 360 : index
    %c0_136 = arith.constant 0 : index
    %397 = vector.load %arg1[%c360, %c0_136] : memref<440x128xbf16, #tpu.memory_space<vmem>>, vector<32x16xbf16>
    %cst_137 = arith.constant dense<0.000000e+00> : vector<16x16xf32>
    %398 = tpu.matmul %396, %397, %cst_137 {dimension_numbers = #tpu.dot_dimension_numbers<[1], [0], [0], [1], [0, 0, 1, 1], [], []>} : vector<16x32xbf16>, vector<32x16xbf16>, vector<16x16xf32> -> vector<16x16xf32>
    %c168 = arith.constant 168 : index
    %c0_138 = arith.constant 0 : index
    %399 = vector.load %arg2[%c168, %c0_138] : memref<312x128xf32, #tpu.memory_space<vmem>>, vector<1x16xf32>
    %400 = vector.broadcast %399 : vector<1x16xf32> to vector<16x16xf32>
    %401 = arith.addf %398, %400 : vector<16x16xf32>
    %cst_139 = arith.constant 0.000000e+00 : f32
    %402 = vector.broadcast %cst_139 : f32 to vector<16x16xf32>
    %403 = arith.maximumf %401, %402 : vector<16x16xf32>
    %404 = arith.truncf %403 : vector<16x16xf32> to vector<16x16xbf16>
    %c392 = arith.constant 392 : index
    %c0_140 = arith.constant 0 : index
    %405 = vector.load %arg1[%c392, %c0_140] : memref<440x128xbf16, #tpu.memory_space<vmem>>, vector<16x32xbf16>
    %cst_141 = arith.constant dense<0.000000e+00> : vector<16x32xf32>
    %406 = tpu.matmul %404, %405, %cst_141 {dimension_numbers = #tpu.dot_dimension_numbers<[1], [0], [0], [1], [0, 0, 1, 1], [], []>} : vector<16x16xbf16>, vector<16x32xbf16>, vector<16x32xf32> -> vector<16x32xf32>
    %c176 = arith.constant 176 : index
    %c0_142 = arith.constant 0 : index
    %407 = vector.load %arg2[%c176, %c0_142] : memref<312x128xf32, #tpu.memory_space<vmem>>, vector<1x32xf32>
    %408 = vector.broadcast %407 : vector<1x32xf32> to vector<16x32xf32>
    %409 = arith.addf %406, %408 : vector<16x32xf32>
    %410 = arith.addf %395, %409 : vector<16x32xf32>
    %cst_143 = arith.constant dense<0.000000e+00> : vector<16xf32>
    %411 = vector.multi_reduction <add>, %410, %cst_143 [1] : vector<16x32xf32> to vector<16xf32>
    %412 = vector.shape_cast %411 : vector<16xf32> to vector<16x1xf32>
    %cst_144 = arith.constant 3.200000e+01 : f32
    %413 = vector.broadcast %cst_144 : f32 to vector<16x1xf32>
    %414 = arith.divf %412, %413 : vector<16x1xf32>
    %415 = vector.broadcast %414 : vector<16x1xf32> to vector<16x32xf32>
    %416 = arith.subf %410, %415 : vector<16x32xf32>
    %417 = arith.mulf %416, %416 : vector<16x32xf32>
    %cst_145 = arith.constant dense<0.000000e+00> : vector<16xf32>
    %418 = vector.multi_reduction <add>, %417, %cst_145 [1] : vector<16x32xf32> to vector<16xf32>
    %419 = vector.shape_cast %418 : vector<16xf32> to vector<16x1xf32>
    %cst_146 = arith.constant 3.200000e+01 : f32
    %420 = vector.broadcast %cst_146 : f32 to vector<16x1xf32>
    %421 = arith.divf %419, %420 : vector<16x1xf32>
    %422 = vector.broadcast %414 : vector<16x1xf32> to vector<16x32xf32>
    %423 = arith.subf %410, %422 : vector<16x32xf32>
    %cst_147 = arith.constant 9.99999997E-7 : f32
    %424 = vector.broadcast %cst_147 : f32 to vector<16x1xf32>
    %425 = arith.addf %421, %424 : vector<16x1xf32>
    %426 = math.rsqrt %425 : vector<16x1xf32>
    %427 = vector.broadcast %426 : vector<16x1xf32> to vector<16x32xf32>
    %428 = arith.mulf %423, %427 : vector<16x32xf32>
    %c184_148 = arith.constant 184 : index
    %c0_149 = arith.constant 0 : index
    %429 = vector.load %arg2[%c184_148, %c0_149] : memref<312x128xf32, #tpu.memory_space<vmem>>, vector<1x32xf32>
    %430 = vector.broadcast %429 : vector<1x32xf32> to vector<16x32xf32>
    %431 = arith.mulf %428, %430 : vector<16x32xf32>
    %c192 = arith.constant 192 : index
    %c0_150 = arith.constant 0 : index
    %432 = vector.load %arg2[%c192, %c0_150] : memref<312x128xf32, #tpu.memory_space<vmem>>, vector<1x32xf32>
    %433 = vector.broadcast %432 : vector<1x32xf32> to vector<16x32xf32>
    %434 = arith.addf %431, %433 : vector<16x32xf32>
    %435 = arith.truncf %434 : vector<16x32xf32> to vector<16x32xbf16>
    %c408 = arith.constant 408 : index
    %c0_151 = arith.constant 0 : index
    %436 = vector.load %arg1[%c408, %c0_151] : memref<440x128xbf16, #tpu.memory_space<vmem>>, vector<32x32xbf16>
    %cst_152 = arith.constant dense<0.000000e+00> : vector<16x32xf32>
    %437 = tpu.matmul %435, %436, %cst_152 {dimension_numbers = #tpu.dot_dimension_numbers<[1], [0], [0], [1], [0, 0, 1, 1], [], []>} : vector<16x32xbf16>, vector<32x32xbf16>, vector<16x32xf32> -> vector<16x32xf32>
    %c200 = arith.constant 200 : index
    %c0_153 = arith.constant 0 : index
    %438 = vector.load %arg2[%c200, %c0_153] : memref<312x128xf32, #tpu.memory_space<vmem>>, vector<1x32xf32>
    %439 = vector.broadcast %438 : vector<1x32xf32> to vector<16x32xf32>
    %440 = arith.addf %437, %439 : vector<16x32xf32>
    %441 = arith.truncf %440 : vector<16x32xf32> to vector<16x32xbf16>
    %c0_154 = arith.constant 0 : index
    %c0_155 = arith.constant 0 : index
    %442 = vector.load %arg3[%c0_154, %c0_155] : memref<48x400xbf16, #tpu.memory_space<vmem>>, vector<32x400xbf16>
    %cst_156 = arith.constant dense<0.000000e+00> : vector<16x400xf32>
    %443 = tpu.matmul %441, %442, %cst_156 {dimension_numbers = #tpu.dot_dimension_numbers<[1], [0], [0], [1], [0, 0, 1, 1], [], []>} : vector<16x32xbf16>, vector<32x400xbf16>, vector<16x400xf32> -> vector<16x400xf32>
    %444 = arith.truncf %443 : vector<16x400xf32> to vector<16x400xbf16>
    %c32_157 = arith.constant 32 : index
    %c0_158 = arith.constant 0 : index
    %445 = vector.load %arg3[%c32_157, %c0_158] : memref<48x400xbf16, #tpu.memory_space<vmem>>, vector<16x400xbf16>
    %446 = arith.mulf %444, %445 : vector<16x400xbf16>
    %c0_159 = arith.constant 0 : index
    %c0_160 = arith.constant 0 : index
    %447 = vector.load %arg4[%c0_159, %c0_160] : memref<400x50xbf16, #tpu.memory_space<vmem>>, vector<400x50xbf16>
    %cst_161 = arith.constant dense<0.000000e+00> : vector<16x50xf32>
    %448 = tpu.matmul %446, %447, %cst_161 {dimension_numbers = #tpu.dot_dimension_numbers<[1], [0], [0], [1], [0, 0, 1, 1], [], []>} : vector<16x400xbf16>, vector<400x50xbf16>, vector<16x50xf32> -> vector<16x50xf32>
    %c208 = arith.constant 208 : index
    %c0_162 = arith.constant 0 : index
    %449 = vector.load %arg2[%c208, %c0_162] : memref<312x128xf32, #tpu.memory_space<vmem>>, vector<2x16xf32>
    %cst_163 = arith.constant dense<0.000000e+00> : vector<2x50xf32>
    %450 = tpu.matmul %449, %448, %cst_163 {dimension_numbers = #tpu.dot_dimension_numbers<[1], [0], [0], [1], [0, 0, 1, 1], [], []>} : vector<2x16xf32>, vector<16x50xf32>, vector<2x50xf32> -> vector<2x50xf32>
    %c216_164 = arith.constant 216 : index
    %c0_165 = arith.constant 0 : index
    %451 = vector.load %arg2[%c216_164, %c0_165] : memref<312x128xf32, #tpu.memory_space<vmem>>, vector<1x50xf32>
    %452 = vector.broadcast %451 : vector<1x50xf32> to vector<2x50xf32>
    %453 = arith.addf %450, %452 : vector<2x50xf32>
    %cst_166 = arith.constant 0.000000e+00 : f32
    %454 = vector.broadcast %cst_166 : f32 to vector<2x50xf32>
    %455 = arith.maximumf %453, %454 : vector<2x50xf32>
    %c224 = arith.constant 224 : index
    %c0_167 = arith.constant 0 : index
    %456 = vector.load %arg2[%c224, %c0_167] : memref<312x128xf32, #tpu.memory_space<vmem>>, vector<50x10xf32>
    %cst_168 = arith.constant dense<0.000000e+00> : vector<2x10xf32>
    %457 = tpu.matmul %455, %456, %cst_168 {dimension_numbers = #tpu.dot_dimension_numbers<[1], [0], [0], [1], [0, 0, 1, 1], [], []>} : vector<2x50xf32>, vector<50x10xf32>, vector<2x10xf32> -> vector<2x10xf32>
    %c280 = arith.constant 280 : index
    %c0_169 = arith.constant 0 : index
    %458 = vector.load %arg2[%c280, %c0_169] : memref<312x128xf32, #tpu.memory_space<vmem>>, vector<1x10xf32>
    %459 = vector.broadcast %458 : vector<1x10xf32> to vector<2x10xf32>
    %460 = arith.addf %457, %459 : vector<2x10xf32>
    %cst_170 = arith.constant 0.000000e+00 : f32
    %461 = vector.broadcast %cst_170 : f32 to vector<2x10xf32>
    %462 = arith.maximumf %460, %461 : vector<2x10xf32>
    %c288 = arith.constant 288 : index
    %c0_171 = arith.constant 0 : index
    %463 = vector.load %arg2[%c288, %c0_171] : memref<312x128xf32, #tpu.memory_space<vmem>>, vector<10x1xf32>
    %cst_172 = arith.constant dense<0.000000e+00> : vector<2x1xf32>
    %464 = tpu.matmul %462, %463, %cst_172 {dimension_numbers = #tpu.dot_dimension_numbers<[1], [0], [0], [1], [0, 0, 1, 1], [], []>} : vector<2x10xf32>, vector<10x1xf32>, vector<2x1xf32> -> vector<2x1xf32>
    %c304 = arith.constant 304 : index
    %c0_173 = arith.constant 0 : index
    %465 = vector.load %arg2[%c304, %c0_173] : memref<312x128xf32, #tpu.memory_space<vmem>>, vector<1x1xf32>
    %466 = vector.broadcast %465 : vector<1x1xf32> to vector<2x1xf32>
    %467 = arith.addf %464, %466 : vector<2x1xf32>
    %c0_174 = arith.constant 0 : index
    %c0_175 = arith.constant 0 : index
    %468 = vector.load %arg5[%c0_174, %c0_175] : memref<2x1xf32, #tpu.memory_space<vmem>>, vector<2x1xf32>
    tpu.vector_store %arg5[%c0_174, %c0_175], %467 {strides = array<i32>} : memref<2x1xf32, #tpu.memory_space<vmem>>, vector<2x1xf32>,
    return
  }
}

</mosaic_0001>

<llo_original>
// kernel: gcu_transformer_forward.1
$region0: #{gcu_transformer_forward.1}
  #allocation0 [shape = 'u32[]', space=smem, size = 0x4, offset = 0x4, fixed_abs, tag = 'smem constant byte address 0x4 - core index']
  #allocation1 [shape = 'u32[144,128]{1,0:T(1,128)}', space=vmem, size = 0x12000, scoped, tag = 'internal scratch']
  %s0 = inlined_call_operand.vmem [shape: f32[48,8], index: 0, kind: input, shape index: {}]
  %s1 = inlined_call_operand.hbm [shape: bf16[440,128], index: 1, kind: input, shape index: {}]
  %s2 = inlined_call_operand.vmem [shape: f32[312,128], index: 2, kind: input, shape index: {}]
  %s3 = inlined_call_operand.hbm [shape: bf16[48,400], index: 3, kind: input, shape index: {}]
  %s4 = inlined_call_operand.vmem [shape: bf16[400,50], index: 4, kind: input, shape index: {}]
  %s5 = inlined_call_operand.vmem [shape: f32[2,1], index: 5, kind: output, shape index: {}]
  %s6 = sld [smem:[#allocation0]]
  $region38: #{gcu_transformer_forward.1} parent=0
    _
  %s8 = ssub.s32 1, %s6
  %s9 = scalar_select 0, %s8, %s6
  $region1: #{gcu_transformer_forward.1} parent=0
    #allocation2 [shape = 'u8[112640]{0}', space=vmem, size = 0x1b800, scoped, tag = 'input window, operand 1, single buffered']
    #allocation3 [shape = 's32[1]{0}', space=sflag, size = 0x4, scoped, tag = 'scoped memory for gcu_transformer_forward.1']
    #allocation4 [shape = 'u8[49152]{0}', space=vmem, size = 0xc000, scoped, tag = 'input window, operand 3, single buffered']
    #allocation5 [shape = 's32[1]{0}', space=sflag, size = 0x4, scoped, tag = 'scoped memory for gcu_transformer_forward.1']
    %10 = vsyncpa [#allocation3], 0
    %11 = vsyncpa [#allocation5], 0
    // Predicated region
    $region2: #{gcu_transformer_forward.1} parent=1 // pred_check
      _
    $region3: #{gcu_transformer_forward.1} parent=1 // pred_check_branch
      %13 = sbr.rel (0) target = $region5
    $region4: #{gcu_transformer_forward.1} parent=1 // pred_region
      _
    $region5: #{gcu_transformer_forward.1} parent=1 // pred_fallthru
      _
    // Predicated region
    $region6: #{gcu_transformer_forward.1} parent=1 // pred_check
      _
    $region7: #{gcu_transformer_forward.1} parent=1 // pred_check_branch
      %15 = sbr.rel (0) target = $region9
    $region8: #{gcu_transformer_forward.1} parent=1 // pred_region
      %s17 = ssub.s32 3520, 3520
      %18 = vsyncadd [#allocation3], %s17
      %s19 = sshll.u32 [#allocation2], 4
      %s20 = int_to_ptr.vmem [resolvable:$true] %s19
      %25 = dma.hbm_to_vmem [thread:$0]  %s1, 3520, %s20, [#allocation3], 64, 64, 4
    $region9: #{gcu_transformer_forward.1} parent=1 // pred_fallthru
      _
    // Predicated region
    $region10: #{gcu_transformer_forward.1} parent=1 // pred_check
      _
    $region11: #{gcu_transformer_forward.1} parent=1 // pred_check_branch
      %27 = sbr.rel (0) target = $region13
    $region12: #{gcu_transformer_forward.1} parent=1 // pred_region
      _
    $region13: #{gcu_transformer_forward.1} parent=1 // pred_fallthru
      _
    // Predicated region
    $region14: #{gcu_transformer_forward.1} parent=1 // pred_check
      _
    $region15: #{gcu_transformer_forward.1} parent=1 // pred_check_branch
      %29 = sbr.rel (0) target = $region17
    $region16: #{gcu_transformer_forward.1} parent=1 // pred_region
      %s31 = ssub.s32 1536, 1536
      %32 = vsyncadd [#allocation5], %s31
      %s33 = sshll.u32 [#allocation4], 4
      %s34 = int_to_ptr.vmem [resolvable:$true] %s33
      %39 = dma.hbm_to_vmem [thread:$0]  %s3, 1536, %s34, [#allocation5], 256, 256, 16
    $region17: #{gcu_transformer_forward.1} parent=1 // pred_fallthru
      _
    // Predicated region
    $region18: #{gcu_transformer_forward.1} parent=1 // pred_check
      _
    $region19: #{gcu_transformer_forward.1} parent=1 // pred_check_branch
      %41 = sbr.rel (0) target = $region21
    $region20: #{gcu_transformer_forward.1} parent=1 // pred_region
      _
    $region21: #{gcu_transformer_forward.1} parent=1 // pred_fallthru
      _
    // Predicated region
    $region22: #{gcu_transformer_forward.1} parent=1 // pred_check
      _
    $region23: #{gcu_transformer_forward.1} parent=1 // pred_check_branch
      %43 = sbr.rel (0) target = $region25
    $region24: #{gcu_transformer_forward.1} parent=1 // pred_region
      %44 = dma.done [#allocation3], 3520
    $region25: #{gcu_transformer_forward.1} parent=1 // pred_fallthru
      _
    // Predicated region
    $region26: #{gcu_transformer_forward.1} parent=1 // pred_check
      _
    $region27: #{gcu_transformer_forward.1} parent=1 // pred_check_branch
      %46 = sbr.rel (0) target = $region29
    $region28: #{gcu_transformer_forward.1} parent=1 // pred_region
      %47 = dma.done [#allocation5], 1536
    $region29: #{gcu_transformer_forward.1} parent=1 // pred_fallthru
      _
    %v49 = vld [vmem:[%s0] sm:$0xff]
    %v50 = vld [vmem:[%s0 + $0x8] sm:$0xff]
    %v51 = vld [vmem:[%s0 + $0x10] sm:$0xff]
    %v52 = vld [vmem:[%s0 + $0x18] sm:$0xff]
    %v53 = vld [vmem:[%s0 + $0x20] sm:$0xff]
    %v54 = vld [vmem:[%s0 + $0x28] sm:$0xff]
    %v55 = vpack.c.bf16 %v50, %v49
    %v56 = vpack.c.bf16 %v52, %v51
    %v57 = vpack.c.bf16 %v54, %v53
    %v58 = vld [vmem:[#allocation2] sm:$0xf]
    %v59 = vld [vmem:[#allocation2 + $0x4] sm:$0xf]
    %v60 = vld [vmem:[%s2] sm:$0xff]
    %v61 = vld [vmem:[%s2 + $0x8] sm:$0xff]
    %63 = vset.pattern.permute.xlu0 0
    %64 = vperm.xlu0 %63, %v60
    %v65 = vpop.permute.xlu0 %64
    %68 = vset.pattern.permute.xlu0 0
    %69 = vperm.xlu0 %68, %v61
    %v70 = vpop.permute.xlu0 %69
    %v74 = vunpack.c.l.b16 %v58
    %v75 = vunpack.c.l.b16 %v59
    %v76 = vpack.c.b16 %v75, %v74
    %vm77 = vcmask 392192
    %v79 = vsel %vm77, %v76, 0
    %81 = vmatprep.subr.bf16.mxu0 0
    %82 = vmatpush1.bf16.msra.mxu0 %v55
    %83 = vmatprep.subr.bf16.mxu0 0
    %84 = vmatpush1.bf16.msra.mxu0 %v56
    %85 = vmatprep.subr.bf16.mxu0 0
    %86 = vmatpush1.bf16.msra.mxu0 %v57
    %87 = vmatprep.subr.bf16.mxu0 0
    %88 = vmatpush1.bf16.msra.mxu0 0
    %89 = vmatprep.subr.bf16.mxu0 0
    %90 = vmatpush1.bf16.msra.mxu0 0
    %91 = vmatprep.subr.bf16.mxu0 0
    %92 = vmatpush1.bf16.msra.mxu0 0
    %93 = vmatprep.subr.bf16.mxu0 0
    %94 = vmatpush1.bf16.msra.mxu0 0
    %95 = vmatprep.subr.bf16.mxu0 0
    %96 = vmatpush1.bf16.msra.mxu0 0
    %97 = vmatprep.subr.bf16.mxu0 0
    %98 = vmatpush1.bf16.msra.mxu0 0
    %99 = vmatprep.subr.bf16.mxu0 0
    %100 = vmatpush1.bf16.msra.mxu0 0
    %101 = vmatprep.subr.bf16.mxu0 0
    %102 = vmatpush1.bf16.msra.mxu0 0
    %103 = vmatprep.subr.bf16.mxu0 0
    %104 = vmatpush1.bf16.msra.mxu0 0
    %105 = vmatprep.subr.bf16.mxu0 0
    %106 = vmatpush1.bf16.msra.mxu0 0
    %107 = vmatprep.subr.bf16.mxu0 0
    %108 = vmatpush1.bf16.msra.mxu0 0
    %109 = vmatprep.subr.bf16.mxu0 0
    %110 = vmatpush1.bf16.msra.mxu0 0
    %111 = vmatprep.subr.bf16.mxu0 0
    %112 = vmatpush1.bf16.msra.mxu0 0
    %113 = vmatprep.mubr.bf16.mxu0 0
    %114 = vmatmul.mubr.bf16.gmra.mrb[0].mxu0 %v79
    %v115 = vpop.f32.mrb[0].mxu0
    %v116 = vadd.f32 %v65, %v115
    %v117 = vpop.f32.mrb[0].mxu0
    %v118 = vpop.f32.mrb[0].mxu0
    %v119 = vadd.f32 %v70, %v118
    %v120 = vpop.f32.mrb[0].mxu0
    %121 = vdwg.mxu0
    %v122 = vpack.c.bf16 %v119, %v116
    %v123 = vld [vmem:[#allocation2 + $0x8] sm:$0xf]
    %v124 = vld [vmem:[#allocation2 + $0xc] sm:$0xf]
    %vm125 = vcmask 64512
    %v127 = vsel %vm125, %v55, 0
    %vm129 = vcmask 1043456
    %v131 = vsel %vm129, %v124, 0
    %133 = vmatprep.subr.bf16.mxu0 0
    %134 = vmatpush1.bf16.msra.mxu0 %v131
    %135 = vmatprep.subr.bf16.mxu0 0
    %136 = vmatpush1.bf16.msra.mxu0 0
    %137 = vmatprep.subr.bf16.mxu0 0
    %138 = vmatpush1.bf16.msra.mxu0 0
    %139 = vmatprep.subr.bf16.mxu0 0
    %140 = vmatpush1.bf16.msra.mxu0 0
    %141 = vmatprep.subr.bf16.mxu0 0
    %142 = vmatpush1.bf16.msra.mxu0 0
    %143 = vmatprep.subr.bf16.mxu0 0
    %144 = vmatpush1.bf16.msra.mxu0 0
    %145 = vmatprep.subr.bf16.mxu0 0
    %146 = vmatpush1.bf16.msra.mxu0 0
    %147 = vmatprep.subr.bf16.mxu0 0
    %148 = vmatpush1.bf16.msra.mxu0 0
    %149 = vmatprep.subr.bf16.mxu0 0
    %150 = vmatpush1.bf16.msra.mxu0 0
    %151 = vmatprep.subr.bf16.mxu0 0
    %152 = vmatpush1.bf16.msra.mxu0 0
    %153 = vmatprep.subr.bf16.mxu0 0
    %154 = vmatpush1.bf16.msra.mxu0 0
    %155 = vmatprep.subr.bf16.mxu0 0
    %156 = vmatpush1.bf16.msra.mxu0 0
    %157 = vmatprep.subr.bf16.mxu0 0
    %158 = vmatpush1.bf16.msra.mxu0 0
    %159 = vmatprep.subr.bf16.mxu0 0
    %160 = vmatpush1.bf16.msra.mxu0 0
    %161 = vmatprep.subr.bf16.mxu0 0
    %162 = vmatpush1.bf16.msra.mxu0 0
    %163 = vmatprep.subr.bf16.mxu0 0
    %164 = vmatpush1.bf16.msra.mxu0 0
    %165 = vmatprep.mubr.bf16.mxu0 0
    %166 = vmatmul.mubr.bf16.gmra.mrb[0].mxu0 %v127
    %v167 = vpop.f32.mrb[0].mxu0
    %v168 = vadd.f32 0.0, %v167
    %v169 = vpop.f32.mrb[0].mxu0
    %v170 = vpop.f32.mrb[0].mxu0
    %v171 = vadd.f32 0.0, %v170
    %v172 = vpop.f32.mrb[0].mxu0
    %173 = vdwg.mxu0
    %v175 = vsel %vm125, %v122, 0
    %v178 = vsel %vm129, %v123, 0
    %180 = vmatprep.subr.bf16.mxu0 0
    %181 = vmatpush1.bf16.msra.mxu0 %v178
    %182 = vmatprep.subr.bf16.mxu0 0
    %183 = vmatpush1.bf16.msra.mxu0 0
    %184 = vmatprep.subr.bf16.mxu0 0
    %185 = vmatpush1.bf16.msra.mxu0 0
    %186 = vmatprep.subr.bf16.mxu0 0
    %187 = vmatpush1.bf16.msra.mxu0 0
    %188 = vmatprep.subr.bf16.mxu0 0
    %189 = vmatpush1.bf16.msra.mxu0 0
    %190 = vmatprep.subr.bf16.mxu0 0
    %191 = vmatpush1.bf16.msra.mxu0 0
    %192 = vmatprep.subr.bf16.mxu0 0
    %193 = vmatpush1.bf16.msra.mxu0 0
    %194 = vmatprep.subr.bf16.mxu0 0
    %195 = vmatpush1.bf16.msra.mxu0 0
    %196 = vmatprep.subr.bf16.mxu0 0
    %197 = vmatpush1.bf16.msra.mxu0 0
    %198 = vmatprep.subr.bf16.mxu0 0
    %199 = vmatpush1.bf16.msra.mxu0 0
    %200 = vmatprep.subr.bf16.mxu0 0
    %201 = vmatpush1.bf16.msra.mxu0 0
    %202 = vmatprep.subr.bf16.mxu0 0
    %203 = vmatpush1.bf16.msra.mxu0 0
    %204 = vmatprep.subr.bf16.mxu0 0
    %205 = vmatpush1.bf16.msra.mxu0 0
    %206 = vmatprep.subr.bf16.mxu0 0
    %207 = vmatpush1.bf16.msra.mxu0 0
    %208 = vmatprep.subr.bf16.mxu0 0
    %209 = vmatpush1.bf16.msra.mxu0 0
    %210 = vmatprep.subr.bf16.mxu0 0
    %211 = vmatpush1.bf16.msra.mxu0 0
    %212 = vmatprep.mubr.bf16.mxu0 0
    %213 = vmatmul.mubr.bf16.gmra.mrb[0].mxu0 %v175
    %v214 = vpop.f32.mrb[0].mxu0
    %v215 = vadd.f32 %v168, %v214
    %v216 = vpop.f32.mrb[0].mxu0
    %v217 = vpop.f32.mrb[0].mxu0
    %v218 = vadd.f32 %v171, %v217
    %v219 = vpop.f32.mrb[0].mxu0
    %220 = vdwg.mxu0
    %v221 = vld [vmem:[%s2 + $0x10] sm:$0x1]
    %v222 = vlaneseq
    %v223 = vshrl.u32 %v222, 7
    %v224 = vsub.s32 0, %v223
    %v225 = vrot.slane %v221, %v224
    %v226 = vadd.f32 %v215, %v225
    %v227 = vadd.f32 %v218, %v225
    %v228 = vxor.u32 %v226, 2147483648
    %v229 = vxor.u32 %v227, 2147483648
    %v230 = vmul.f32 %v228, 1.442695
    %v231 = vpow.pop %v230
    %v232 = vmul.f32 %v229, 1.442695
    %v233 = vpow.pop %v232
    %v234 = vadd.f32 %v231, 1.0
    %v235 = vadd.f32 %v233, 1.0
    %v236 = vrcp.pop %v234
    %v237 = vmul.f32 1.0, %v236
    %v238 = vrcp.pop %v235
    %v239 = vmul.f32 1.0, %v238
    %v240 = vld [vmem:[#allocation2 + $0x10] sm:$0xf]
    %v241 = vld [vmem:[#allocation2 + $0x14] sm:$0xf]
    %v243 = vsel %vm129, %v241, 0
    %245 = vmatprep.subr.bf16.mxu0 0
    %246 = vmatpush1.bf16.msra.mxu0 %v243
    %247 = vmatprep.subr.bf16.mxu0 0
    %248 = vmatpush1.bf16.msra.mxu0 0
    %249 = vmatprep.subr.bf16.mxu0 0
    %250 = vmatpush1.bf16.msra.mxu0 0
    %251 = vmatprep.subr.bf16.mxu0 0
    %252 = vmatpush1.bf16.msra.mxu0 0
    %253 = vmatprep.subr.bf16.mxu0 0
    %254 = vmatpush1.bf16.msra.mxu0 0
    %255 = vmatprep.subr.bf16.mxu0 0
    %256 = vmatpush1.bf16.msra.mxu0 0
    %257 = vmatprep.subr.bf16.mxu0 0
    %258 = vmatpush1.bf16.msra.mxu0 0
    %259 = vmatprep.subr.bf16.mxu0 0
    %260 = vmatpush1.bf16.msra.mxu0 0
    %261 = vmatprep.subr.bf16.mxu0 0
    %262 = vmatpush1.bf16.msra.mxu0 0
    %263 = vmatprep.subr.bf16.mxu0 0
    %264 = vmatpush1.bf16.msra.mxu0 0
    %265 = vmatprep.subr.bf16.mxu0 0
    %266 = vmatpush1.bf16.msra.mxu0 0
    %267 = vmatprep.subr.bf16.mxu0 0
    %268 = vmatpush1.bf16.msra.mxu0 0
    %269 = vmatprep.subr.bf16.mxu0 0
    %270 = vmatpush1.bf16.msra.mxu0 0
    %271 = vmatprep.subr.bf16.mxu0 0
    %272 = vmatpush1.bf16.msra.mxu0 0
    %273 = vmatprep.subr.bf16.mxu0 0
    %274 = vmatpush1.bf16.msra.mxu0 0
    %275 = vmatprep.subr.bf16.mxu0 0
    %276 = vmatpush1.bf16.msra.mxu0 0
    %277 = vmatprep.mubr.bf16.mxu0 0
    %278 = vmatmul.mubr.bf16.gmra.mrb[0].mxu0 %v127
    %v279 = vpop.f32.mrb[0].mxu0
    %v280 = vadd.f32 0.0, %v279
    %v281 = vpop.f32.mrb[0].mxu0
    %v282 = vpop.f32.mrb[0].mxu0
    %v283 = vadd.f32 0.0, %v282
    %v284 = vpop.f32.mrb[0].mxu0
    %285 = vdwg.mxu0
    %v287 = vsel %vm129, %v240, 0
    %289 = vmatprep.subr.bf16.mxu0 0
    %290 = vmatpush1.bf16.msra.mxu0 %v287
    %291 = vmatprep.subr.bf16.mxu0 0
    %292 = vmatpush1.bf16.msra.mxu0 0
    %293 = vmatprep.subr.bf16.mxu0 0
    %294 = vmatpush1.bf16.msra.mxu0 0
    %295 = vmatprep.subr.bf16.mxu0 0
    %296 = vmatpush1.bf16.msra.mxu0 0
    %297 = vmatprep.subr.bf16.mxu0 0
    %298 = vmatpush1.bf16.msra.mxu0 0
    %299 = vmatprep.subr.bf16.mxu0 0
    %300 = vmatpush1.bf16.msra.mxu0 0
    %301 = vmatprep.subr.bf16.mxu0 0
    %302 = vmatpush1.bf16.msra.mxu0 0
    %303 = vmatprep.subr.bf16.mxu0 0
    %304 = vmatpush1.bf16.msra.mxu0 0
    %305 = vmatprep.subr.bf16.mxu0 0
    %306 = vmatpush1.bf16.msra.mxu0 0
    %307 = vmatprep.subr.bf16.mxu0 0
    %308 = vmatpush1.bf16.msra.mxu0 0
    %309 = vmatprep.subr.bf16.mxu0 0
    %310 = vmatpush1.bf16.msra.mxu0 0
    %311 = vmatprep.subr.bf16.mxu0 0
    %312 = vmatpush1.bf16.msra.mxu0 0
    %313 = vmatprep.subr.bf16.mxu0 0
    %314 = vmatpush1.bf16.msra.mxu0 0
    %315 = vmatprep.subr.bf16.mxu0 0
    %316 = vmatpush1.bf16.msra.mxu0 0
    %317 = vmatprep.subr.bf16.mxu0 0
    %318 = vmatpush1.bf16.msra.mxu0 0
    %319 = vmatprep.subr.bf16.mxu0 0
    %320 = vmatpush1.bf16.msra.mxu0 0
    %321 = vmatprep.mubr.bf16.mxu0 0
    %322 = vmatmul.mubr.bf16.gmra.mrb[0].mxu0 %v175
    %v323 = vpop.f32.mrb[0].mxu0
    %v324 = vadd.f32 %v280, %v323
    %v325 = vpop.f32.mrb[0].mxu0
    %v326 = vpop.f32.mrb[0].mxu0
    %v327 = vadd.f32 %v283, %v326
    %v328 = vpop.f32.mrb[0].mxu0
    %329 = vdwg.mxu0
    %v330 = vld [vmem:[%s2 + $0x18] sm:$0x1]
    %v331 = vlaneseq
    %v332 = vshrl.u32 %v331, 7
    %v333 = vsub.s32 0, %v332
    %v334 = vrot.slane %v330, %v333
    %v335 = vadd.f32 %v324, %v334
    %v336 = vadd.f32 %v327, %v334
    %v337 = vxor.u32 %v335, 2147483648
    %v338 = vxor.u32 %v336, 2147483648
    %v339 = vmul.f32 %v337, 1.442695
    %v340 = vpow.pop %v339
    %v341 = vmul.f32 %v338, 1.442695
    %v342 = vpow.pop %v341
    %v343 = vadd.f32 %v340, 1.0
    %v344 = vadd.f32 %v342, 1.0
    %v345 = vrcp.pop %v343
    %v346 = vmul.f32 1.0, %v345
    %v347 = vrcp.pop %v344
    %v348 = vmul.f32 1.0, %v347
    %v349 = vmul.f32 %v116, %v346
    %v350 = vmul.f32 %v119, %v348
    %v351 = vmul.f32 %v49, %v237
    %v352 = vmul.f32 %v50, %v239
    %v353 = vadd.f32 %v349, %v351
    %v354 = vadd.f32 %v350, %v352
    %v355 = vpack.c.bf16 %v354, %v353
    %v356 = vld [vmem:[#allocation2 + $0x18] sm:$0xf]
    %v357 = vld [vmem:[%s2 + $0x20] sm:$0x1]
    %v358 = vlaneseq
    %v359 = vshrl.u32 %v358, 7
    %v360 = vsub.s32 0, %v359
    %v361 = vrot.slane %v357, %v360
    %v363 = vsel %vm125, %v355, 0
    %v366 = vsel %vm129, %v356, 0
    %368 = vmatprep.subr.bf16.mxu0 0
    %369 = vmatpush1.bf16.msra.mxu0 %v366
    %370 = vmatprep.subr.bf16.mxu0 0
    %371 = vmatpush1.bf16.msra.mxu0 0
    %372 = vmatprep.subr.bf16.mxu0 0
    %373 = vmatpush1.bf16.msra.mxu0 0
    %374 = vmatprep.subr.bf16.mxu0 0
    %375 = vmatpush1.bf16.msra.mxu0 0
    %376 = vmatprep.subr.bf16.mxu0 0
    %377 = vmatpush1.bf16.msra.mxu0 0
    %378 = vmatprep.subr.bf16.mxu0 0
    %379 = vmatpush1.bf16.msra.mxu0 0
    %380 = vmatprep.subr.bf16.mxu0 0
    %381 = vmatpush1.bf16.msra.mxu0 0
    %382 = vmatprep.subr.bf16.mxu0 0
    %383 = vmatpush1.bf16.msra.mxu0 0
    %384 = vmatprep.subr.bf16.mxu0 0
    %385 = vmatpush1.bf16.msra.mxu0 0
    %386 = vmatprep.subr.bf16.mxu0 0
    %387 = vmatpush1.bf16.msra.mxu0 0
    %388 = vmatprep.subr.bf16.mxu0 0
    %389 = vmatpush1.bf16.msra.mxu0 0
    %390 = vmatprep.subr.bf16.mxu0 0
    %391 = vmatpush1.bf16.msra.mxu0 0
    %392 = vmatprep.subr.bf16.mxu0 0
    %393 = vmatpush1.bf16.msra.mxu0 0
    %394 = vmatprep.subr.bf16.mxu0 0
    %395 = vmatpush1.bf16.msra.mxu0 0
    %396 = vmatprep.subr.bf16.mxu0 0
    %397 = vmatpush1.bf16.msra.mxu0 0
    %398 = vmatprep.subr.bf16.mxu0 0
    %399 = vmatpush1.bf16.msra.mxu0 0
    %400 = vmatprep.mubr.bf16.mxu0 0
    %401 = vmatmul.mubr.bf16.gmra.mrb[0].mxu0 %v363
    %v402 = vpop.f32.mrb[0].mxu0
    %v403 = vadd.f32 %v361, %v402
    %v404 = vpop.f32.mrb[0].mxu0
    %v405 = vpop.f32.mrb[0].mxu0
    %v406 = vadd.f32 %v361, %v405
    %v407 = vpop.f32.mrb[0].mxu0
    %408 = vdwg.mxu0
    %v409 = vld [vmem:[%s2 + $0x28] sm:$0xff]
    %v410 = vld [vmem:[%s2 + $0x30] sm:$0xff]
    %v411 = vadd.f32 %v403, %v409
    %v412 = vadd.f32 %v406, %v410
    %vm413 = vcmask 261120
    %v414 = vsel %vm413, %v411, 0.0
    %415 = vadd.xlane.f32.xlu0 %v414
    %v416 = vpop.xlane.xlu0 %415
    %v417 = vsel %vm413, %v412, 0.0
    %418 = vadd.xlane.f32.xlu0 %v417
    %v419 = vpop.xlane.xlu0 %418
    %v420 = vrcp.pop 32.0
    %v421 = vmul.f32 %v416, %v420
    %v422 = vmul.f32 %v419, %v420
    %v423 = vsub.f32 %v411, %v421
    %v424 = vsub.f32 %v412, %v422
    %v425 = vmul.f32 %v423, %v423
    %v426 = vmul.f32 %v424, %v424
    %v427 = vsel %vm413, %v425, 0.0
    %428 = vadd.xlane.f32.xlu0 %v427
    %v429 = vpop.xlane.xlu0 %428
    %v430 = vsel %vm413, %v426, 0.0
    %431 = vadd.xlane.f32.xlu0 %v430
    %v432 = vpop.xlane.xlu0 %431
    %v433 = vmul.f32 %v429, %v420
    %v434 = vmul.f32 %v432, %v420
    %v435 = vadd.f32 %v433, 1e-06
    %v436 = vadd.f32 %v434, 1e-06
    %v437 = vrsqrt.pop %v435
    %v438 = vrsqrt.pop %v436
    %v439 = vmul.f32 %v423, %v437
    %v440 = vmul.f32 %v424, %v438
    %v441 = vld [vmem:[%s2 + $0x38] sm:$0x1]
    %v442 = vlaneseq
    %v443 = vshrl.u32 %v442, 7
    %v444 = vsub.s32 0, %v443
    %v445 = vrot.slane %v441, %v444
    %v446 = vmul.f32 %v439, %v445
    %v447 = vmul.f32 %v440, %v445
    %v448 = vld [vmem:[%s2 + $0x40] sm:$0x1]
    %v449 = vlaneseq
    %v450 = vshrl.u32 %v449, 7
    %v451 = vsub.s32 0, %v450
    %v452 = vrot.slane %v448, %v451
    %v453 = vadd.f32 %v446, %v452
    %v454 = vadd.f32 %v447, %v452
    %v455 = vlaneseq
    %v456 = vand.u32 %v455, 127
    %vm457 = vcmp.ge.s32.totalorder %v456, 0
    %vm458 = vcmp.lt.s32.totalorder %v456, 8
    %vm459 = vmand %vm457, %vm458
    %v460 = vsel %vm459, 1.0, 0.0
    %v461 = vpack.c.bf16 %v460, %v460
    %vm462 = vcmp.ge.s32.totalorder %v456, 8
    %vm463 = vcmp.lt.s32.totalorder %v456, 16
    %vm464 = vmand %vm462, %vm463
    %v465 = vsel %vm464, 1.0, 0.0
    %v466 = vpack.c.bf16 %v465, %v465
    %vm467 = vcmp.ge.s32.totalorder %v456, 16
    %vm468 = vcmp.lt.s32.totalorder %v456, 24
    %vm469 = vmand %vm467, %vm468
    %v470 = vsel %vm469, 1.0, 0.0
    %v471 = vpack.c.bf16 %v470, %v470
    %vm472 = vcmp.ge.s32.totalorder %v456, 24
    %vm473 = vcmp.lt.s32.totalorder %v456, 32
    %vm474 = vmand %vm472, %vm473
    %v475 = vsel %vm474, 1.0, 0.0
    %v476 = vpack.c.bf16 %v475, %v475
    %v477 = vld [vmem:[%s2 + $0x48] sm:$0xff]
    %v478 = vld [vmem:[%s2 + $0x50] sm:$0xff]
    %v479 = vpack.c.bf16 %v454, %v453
    %v480 = vld [vmem:[#allocation2 + $0x1c] sm:$0xf]
    %v481 = vld [vmem:[#allocation2 + $0x20] sm:$0xf]
    %v482 = vld [vmem:[#allocation2 + $0x24] sm:$0xf]
    %v483 = vld [vmem:[#allocation2 + $0x28] sm:$0xf]
    %v488 = vunpack.c.l.b16 %v480
    %v489 = vunpack.c.l.b16 %v481
    %v490 = vunpack.c.l.b16 %v482
    %v491 = vunpack.c.l.b16 %v483
    %v492 = vpack.c.b16 %v489, %v488
    %v493 = vpack.c.b16 %v491, %v490
    %v497 = vsel %vm413, %v479, 0
    %499 = vmatprep.subr.bf16.mxu0 0
    %500 = vmatpush1.bf16.msra.mxu0 %v492
    %501 = vmatprep.subr.bf16.mxu0 0
    %502 = vmatpush1.bf16.msra.mxu0 %v493
    %503 = vmatprep.subr.bf16.mxu0 0
    %504 = vmatpush1.bf16.msra.mxu0 0
    %505 = vmatprep.subr.bf16.mxu0 0
    %506 = vmatpush1.bf16.msra.mxu0 0
    %507 = vmatprep.subr.bf16.mxu0 0
    %508 = vmatpush1.bf16.msra.mxu0 0
    %509 = vmatprep.subr.bf16.mxu0 0
    %510 = vmatpush1.bf16.msra.mxu0 0
    %511 = vmatprep.subr.bf16.mxu0 0
    %512 = vmatpush1.bf16.msra.mxu0 0
    %513 = vmatprep.subr.bf16.mxu0 0
    %514 = vmatpush1.bf16.msra.mxu0 0
    %515 = vmatprep.subr.bf16.mxu0 0
    %516 = vmatpush1.bf16.msra.mxu0 0
    %517 = vmatprep.subr.bf16.mxu0 0
    %518 = vmatpush1.bf16.msra.mxu0 0
    %519 = vmatprep.subr.bf16.mxu0 0
    %520 = vmatpush1.bf16.msra.mxu0 0
    %521 = vmatprep.subr.bf16.mxu0 0
    %522 = vmatpush1.bf16.msra.mxu0 0
    %523 = vmatprep.subr.bf16.mxu0 0
    %524 = vmatpush1.bf16.msra.mxu0 0
    %525 = vmatprep.subr.bf16.mxu0 0
    %526 = vmatpush1.bf16.msra.mxu0 0
    %527 = vmatprep.subr.bf16.mxu0 0
    %528 = vmatpush1.bf16.msra.mxu0 0
    %529 = vmatprep.subr.bf16.mxu0 0
    %530 = vmatpush1.bf16.msra.mxu0 0
    %531 = vmatprep.mubr.bf16.mxu0 0
    %532 = vmatmul.mubr.bf16.gmra.mrb[0].mxu0 %v497
    %v533 = vpop.f32.mrb[0].mxu0
    %v534 = vadd.f32 0.0, %v533
    %v535 = vpop.f32.mrb[0].mxu0
    %v536 = vpop.f32.mrb[0].mxu0
    %v537 = vadd.f32 0.0, %v536
    %v538 = vpop.f32.mrb[0].mxu0
    %539 = vdwg.mxu0
    %v540 = vpack.c.bf16 %v537, %v534
    %v541 = vld [vmem:[#allocation2 + $0x2c] sm:$0xf]
    %v542 = vld [vmem:[#allocation2 + $0x30] sm:$0xf]
    %v543 = vld [vmem:[#allocation2 + $0x34] sm:$0xf]
    %v544 = vld [vmem:[#allocation2 + $0x38] sm:$0xf]
    %v549 = vunpack.c.l.b16 %v541
    %v550 = vunpack.c.l.b16 %v542
    %v551 = vunpack.c.l.b16 %v543
    %v552 = vunpack.c.l.b16 %v544
    %v553 = vpack.c.b16 %v550, %v549
    %v554 = vpack.c.b16 %v552, %v551
    %557 = vmatprep.subr.bf16.mxu0 0
    %558 = vmatpush1.bf16.msra.mxu0 %v553
    %559 = vmatprep.subr.bf16.mxu0 0
    %560 = vmatpush1.bf16.msra.mxu0 %v554
    %561 = vmatprep.subr.bf16.mxu0 0
    %562 = vmatpush1.bf16.msra.mxu0 0
    %563 = vmatprep.subr.bf16.mxu0 0
    %564 = vmatpush1.bf16.msra.mxu0 0
    %565 = vmatprep.subr.bf16.mxu0 0
    %566 = vmatpush1.bf16.msra.mxu0 0
    %567 = vmatprep.subr.bf16.mxu0 0
    %568 = vmatpush1.bf16.msra.mxu0 0
    %569 = vmatprep.subr.bf16.mxu0 0
    %570 = vmatpush1.bf16.msra.mxu0 0
    %571 = vmatprep.subr.bf16.mxu0 0
    %572 = vmatpush1.bf16.msra.mxu0 0
    %573 = vmatprep.subr.bf16.mxu0 0
    %574 = vmatpush1.bf16.msra.mxu0 0
    %575 = vmatprep.subr.bf16.mxu0 0
    %576 = vmatpush1.bf16.msra.mxu0 0
    %577 = vmatprep.subr.bf16.mxu0 0
    %578 = vmatpush1.bf16.msra.mxu0 0
    %579 = vmatprep.subr.bf16.mxu0 0
    %580 = vmatpush1.bf16.msra.mxu0 0
    %581 = vmatprep.subr.bf16.mxu0 0
    %582 = vmatpush1.bf16.msra.mxu0 0
    %583 = vmatprep.subr.bf16.mxu0 0
    %584 = vmatpush1.bf16.msra.mxu0 0
    %585 = vmatprep.subr.bf16.mxu0 0
    %586 = vmatpush1.bf16.msra.mxu0 0
    %587 = vmatprep.subr.bf16.mxu0 0
    %588 = vmatpush1.bf16.msra.mxu0 0
    %589 = vmatprep.mubr.bf16.mxu0 0
    %590 = vmatmul.mubr.bf16.gmra.mrb[0].mxu0 %v497
    %v591 = vpop.f32.mrb[0].mxu0
    %v592 = vadd.f32 0.0, %v591
    %v593 = vpop.f32.mrb[0].mxu0
    %v594 = vpop.f32.mrb[0].mxu0
    %v595 = vadd.f32 0.0, %v594
    %v596 = vpop.f32.mrb[0].mxu0
    %597 = vdwg.mxu0
    %v598 = vpack.c.bf16 %v595, %v592
    %v599 = vld [vmem:[#allocation2 + $0x3c] sm:$0xf]
    %v600 = vld [vmem:[#allocation2 + $0x40] sm:$0xf]
    %v601 = vld [vmem:[#allocation2 + $0x44] sm:$0xf]
    %v602 = vld [vmem:[#allocation2 + $0x48] sm:$0xf]
    %v607 = vunpack.c.l.b16 %v599
    %v608 = vunpack.c.l.b16 %v600
    %v609 = vunpack.c.l.b16 %v601
    %v610 = vunpack.c.l.b16 %v602
    %v611 = vpack.c.b16 %v608, %v607
    %v612 = vpack.c.b16 %v610, %v609
    %615 = vmatprep.subr.bf16.mxu0 0
    %616 = vmatpush1.bf16.msra.mxu0 %v611
    %617 = vmatprep.subr.bf16.mxu0 0
    %618 = vmatpush1.bf16.msra.mxu0 %v612
    %619 = vmatprep.subr.bf16.mxu0 0
    %620 = vmatpush1.bf16.msra.mxu0 0
    %621 = vmatprep.subr.bf16.mxu0 0
    %622 = vmatpush1.bf16.msra.mxu0 0
    %623 = vmatprep.subr.bf16.mxu0 0
    %624 = vmatpush1.bf16.msra.mxu0 0
    %625 = vmatprep.subr.bf16.mxu0 0
    %626 = vmatpush1.bf16.msra.mxu0 0
    %627 = vmatprep.subr.bf16.mxu0 0
    %628 = vmatpush1.bf16.msra.mxu0 0
    %629 = vmatprep.subr.bf16.mxu0 0
    %630 = vmatpush1.bf16.msra.mxu0 0
    %631 = vmatprep.subr.bf16.mxu0 0
    %632 = vmatpush1.bf16.msra.mxu0 0
    %633 = vmatprep.subr.bf16.mxu0 0
    %634 = vmatpush1.bf16.msra.mxu0 0
    %635 = vmatprep.subr.bf16.mxu0 0
    %636 = vmatpush1.bf16.msra.mxu0 0
    %637 = vmatprep.subr.bf16.mxu0 0
    %638 = vmatpush1.bf16.msra.mxu0 0
    %639 = vmatprep.subr.bf16.mxu0 0
    %640 = vmatpush1.bf16.msra.mxu0 0
    %641 = vmatprep.subr.bf16.mxu0 0
    %642 = vmatpush1.bf16.msra.mxu0 0
    %643 = vmatprep.subr.bf16.mxu0 0
    %644 = vmatpush1.bf16.msra.mxu0 0
    %645 = vmatprep.subr.bf16.mxu0 0
    %646 = vmatpush1.bf16.msra.mxu0 0
    %647 = vmatprep.mubr.bf16.mxu0 0
    %648 = vmatmul.mubr.bf16.gmra.mrb[0].mxu0 %v497
    %v649 = vpop.f32.mrb[0].mxu0
    %v650 = vadd.f32 0.0, %v649
    %v651 = vpop.f32.mrb[0].mxu0
    %v652 = vpop.f32.mrb[0].mxu0
    %v653 = vadd.f32 0.0, %v652
    %v654 = vpop.f32.mrb[0].mxu0
    %655 = vdwg.mxu0
    %v656 = vpack.c.bf16 %v653, %v650
    %v657 = vmul.bf16 %v540, %v461
    %v659 = vsel %vm413, %v657, 0
    %v662 = vsel %vm413, %v598, 0
    %664 = vmatprep.subr.bf16.mxu0 0
    %665 = vmatpush1.bf16.xpose.msra.mxu0 %v662
    %666 = vmatprep.subr.bf16.mxu0 0
    %667 = vmatpush1.bf16.xpose.msra.mxu0 0
    %668 = vmatprep.subr.bf16.mxu0 0
    %669 = vmatpush1.bf16.xpose.msra.mxu0 0
    %670 = vmatprep.subr.bf16.mxu0 0
    %671 = vmatpush1.bf16.xpose.msra.mxu0 0
    %672 = vmatprep.subr.bf16.mxu0 0
    %673 = vmatpush1.bf16.xpose.msra.mxu0 0
    %674 = vmatprep.subr.bf16.mxu0 0
    %675 = vmatpush1.bf16.xpose.msra.mxu0 0
    %676 = vmatprep.subr.bf16.mxu0 0
    %677 = vmatpush1.bf16.xpose.msra.mxu0 0
    %678 = vmatprep.subr.bf16.mxu0 0
    %679 = vmatpush1.bf16.xpose.msra.mxu0 0
    %680 = vmatprep.subr.bf16.mxu0 0
    %681 = vmatpush1.bf16.xpose.msra.mxu0 0
    %682 = vmatprep.subr.bf16.mxu0 0
    %683 = vmatpush1.bf16.xpose.msra.mxu0 0
    %684 = vmatprep.subr.bf16.mxu0 0
    %685 = vmatpush1.bf16.xpose.msra.mxu0 0
    %686 = vmatprep.subr.bf16.mxu0 0
    %687 = vmatpush1.bf16.xpose.msra.mxu0 0
    %688 = vmatprep.subr.bf16.mxu0 0
    %689 = vmatpush1.bf16.xpose.msra.mxu0 0
    %690 = vmatprep.subr.bf16.mxu0 0
    %691 = vmatpush1.bf16.xpose.msra.mxu0 0
    %692 = vmatprep.subr.bf16.mxu0 0
    %693 = vmatpush1.bf16.xpose.msra.mxu0 0
    %694 = vmatprep.subr.bf16.mxu0 0
    %695 = vmatpush1.bf16.xpose.msra.mxu0 0
    %696 = vmatprep.mubr.bf16.mxu0 0
    %697 = vmatmul.mubr.bf16.gmra.mrb[0].mxu0 %v659
    %v698 = vpop.f32.mrb[0].mxu0
    %v699 = vadd.f32 0.0, %v698
    %v700 = vpop.f32.mrb[0].mxu0
    %v701 = vpop.f32.mrb[0].mxu0
    %v702 = vadd.f32 0.0, %v701
    %v703 = vpop.f32.mrb[0].mxu0
    %704 = vdwg.mxu0
    %v705 = vmul.f32 %v699, 0.35355338
    %v706 = vmul.f32 %v702, 0.35355338
    %v707 = vadd.f32 %v705, %v477
    %v708 = vadd.f32 %v706, %v478
    %vm709 = vcmask 130048
    %v710 = vsel %vm709, %v707, -inf
    %711 = vmax.xlane.f32.xlu0 %v710
    %v712 = vpop.xlane.xlu0 %711
    %v713 = vsel %vm709, %v708, -inf
    %714 = vmax.xlane.f32.xlu0 %v713
    %v715 = vpop.xlane.xlu0 %714
    %v716 = vsub.f32 %v707, %v712
    %v717 = vsub.f32 %v708, %v715
    %v718 = vmul.f32 %v716, 1.442695
    %v719 = vpow.pop %v718
    %v720 = vmul.f32 %v717, 1.442695
    %v721 = vpow.pop %v720
    %v722 = vsel %vm709, %v719, 0.0
    %723 = vadd.xlane.f32.xlu0 %v722
    %v724 = vpop.xlane.xlu0 %723
    %v725 = vsel %vm709, %v721, 0.0
    %726 = vadd.xlane.f32.xlu0 %v725
    %v727 = vpop.xlane.xlu0 %726
    %v728 = vrcp.pop %v724
    %v729 = vrcp.pop %v727
    %v730 = vmul.f32 %v719, %v728
    %v731 = vmul.f32 %v721, %v729
    %v732 = vpack.c.bf16 %v731, %v730
    %v733 = vmul.bf16 %v656, %v461
    %v734 = vmul.bf16 %v540, %v466
    %v736 = vsel %vm413, %v734, 0
    %738 = vmatprep.subr.bf16.mxu0 0
    %739 = vmatpush1.bf16.xpose.msra.mxu0 %v662
    %740 = vmatprep.subr.bf16.mxu0 0
    %741 = vmatpush1.bf16.xpose.msra.mxu0 0
    %742 = vmatprep.subr.bf16.mxu0 0
    %743 = vmatpush1.bf16.xpose.msra.mxu0 0
    %744 = vmatprep.subr.bf16.mxu0 0
    %745 = vmatpush1.bf16.xpose.msra.mxu0 0
    %746 = vmatprep.subr.bf16.mxu0 0
    %747 = vmatpush1.bf16.xpose.msra.mxu0 0
    %748 = vmatprep.subr.bf16.mxu0 0
    %749 = vmatpush1.bf16.xpose.msra.mxu0 0
    %750 = vmatprep.subr.bf16.mxu0 0
    %751 = vmatpush1.bf16.xpose.msra.mxu0 0
    %752 = vmatprep.subr.bf16.mxu0 0
    %753 = vmatpush1.bf16.xpose.msra.mxu0 0
    %754 = vmatprep.subr.bf16.mxu0 0
    %755 = vmatpush1.bf16.xpose.msra.mxu0 0
    %756 = vmatprep.subr.bf16.mxu0 0
    %757 = vmatpush1.bf16.xpose.msra.mxu0 0
    %758 = vmatprep.subr.bf16.mxu0 0
    %759 = vmatpush1.bf16.xpose.msra.mxu0 0
    %760 = vmatprep.subr.bf16.mxu0 0
    %761 = vmatpush1.bf16.xpose.msra.mxu0 0
    %762 = vmatprep.subr.bf16.mxu0 0
    %763 = vmatpush1.bf16.xpose.msra.mxu0 0
    %764 = vmatprep.subr.bf16.mxu0 0
    %765 = vmatpush1.bf16.xpose.msra.mxu0 0
    %766 = vmatprep.subr.bf16.mxu0 0
    %767 = vmatpush1.bf16.xpose.msra.mxu0 0
    %768 = vmatprep.subr.bf16.mxu0 0
    %769 = vmatpush1.bf16.xpose.msra.mxu0 0
    %770 = vmatprep.mubr.bf16.mxu0 0
    %771 = vmatmul.mubr.bf16.gmra.mrb[0].mxu0 %v736
    %v772 = vpop.f32.mrb[0].mxu0
    %v773 = vadd.f32 0.0, %v772
    %v774 = vpop.f32.mrb[0].mxu0
    %v775 = vpop.f32.mrb[0].mxu0
    %v776 = vadd.f32 0.0, %v775
    %v777 = vpop.f32.mrb[0].mxu0
    %778 = vdwg.mxu0
    %v779 = vmul.f32 %v773, 0.35355338
    %v780 = vmul.f32 %v776, 0.35355338
    %v781 = vadd.f32 %v779, %v477
    %v782 = vadd.f32 %v780, %v478
    %v783 = vsel %vm709, %v781, -inf
    %784 = vmax.xlane.f32.xlu0 %v783
    %v785 = vpop.xlane.xlu0 %784
    %v786 = vsel %vm709, %v782, -inf
    %787 = vmax.xlane.f32.xlu0 %v786
    %v788 = vpop.xlane.xlu0 %787
    %v789 = vsub.f32 %v781, %v785
    %v790 = vsub.f32 %v782, %v788
    %v791 = vmul.f32 %v789, 1.442695
    %v792 = vpow.pop %v791
    %v793 = vmul.f32 %v790, 1.442695
    %v794 = vpow.pop %v793
    %v795 = vsel %vm709, %v792, 0.0
    %796 = vadd.xlane.f32.xlu0 %v795
    %v797 = vpop.xlane.xlu0 %796
    %v798 = vsel %vm709, %v794, 0.0
    %799 = vadd.xlane.f32.xlu0 %v798
    %v800 = vpop.xlane.xlu0 %799
    %v801 = vrcp.pop %v797
    %v802 = vrcp.pop %v800
    %v803 = vmul.f32 %v792, %v801
    %v804 = vmul.f32 %v794, %v802
    %v805 = vpack.c.bf16 %v804, %v803
    %v806 = vmul.bf16 %v656, %v466
    %v808 = vsel %vm709, %v805, 0
    %810 = vmatprep.subr.bf16.mxu0 0
    %811 = vmatpush1.bf16.msra.mxu0 %v806
    %812 = vmatprep.subr.bf16.mxu0 0
    %813 = vmatpush1.bf16.msra.mxu0 0
    %814 = vmatprep.subr.bf16.mxu0 0
    %815 = vmatpush1.bf16.msra.mxu0 0
    %816 = vmatprep.subr.bf16.mxu0 0
    %817 = vmatpush1.bf16.msra.mxu0 0
    %818 = vmatprep.subr.bf16.mxu0 0
    %819 = vmatpush1.bf16.msra.mxu0 0
    %820 = vmatprep.subr.bf16.mxu0 0
    %821 = vmatpush1.bf16.msra.mxu0 0
    %822 = vmatprep.subr.bf16.mxu0 0
    %823 = vmatpush1.bf16.msra.mxu0 0
    %824 = vmatprep.subr.bf16.mxu0 0
    %825 = vmatpush1.bf16.msra.mxu0 0
    %826 = vmatprep.subr.bf16.mxu0 0
    %827 = vmatpush1.bf16.msra.mxu0 0
    %828 = vmatprep.subr.bf16.mxu0 0
    %829 = vmatpush1.bf16.msra.mxu0 0
    %830 = vmatprep.subr.bf16.mxu0 0
    %831 = vmatpush1.bf16.msra.mxu0 0
    %832 = vmatprep.subr.bf16.mxu0 0
    %833 = vmatpush1.bf16.msra.mxu0 0
    %834 = vmatprep.subr.bf16.mxu0 0
    %835 = vmatpush1.bf16.msra.mxu0 0
    %836 = vmatprep.subr.bf16.mxu0 0
    %837 = vmatpush1.bf16.msra.mxu0 0
    %838 = vmatprep.subr.bf16.mxu0 0
    %839 = vmatpush1.bf16.msra.mxu0 0
    %840 = vmatprep.subr.bf16.mxu0 0
    %841 = vmatpush1.bf16.msra.mxu0 0
    %842 = vmatprep.mubr.bf16.mxu0 0
    %843 = vmatmul.mubr.bf16.gmra.mrb[0].mxu0 %v808
    %v844 = vpop.f32.mrb[0].mxu0
    %v845 = vadd.f32 0.0, %v844
    %v846 = vpop.f32.mrb[0].mxu0
    %v847 = vpop.f32.mrb[0].mxu0
    %v848 = vadd.f32 0.0, %v847
    %v849 = vpop.f32.mrb[0].mxu0
    %850 = vdwg.mxu0
    %v851 = vmul.bf16 %v540, %v471
    %v853 = vsel %vm413, %v851, 0
    %855 = vmatprep.subr.bf16.mxu0 0
    %856 = vmatpush1.bf16.xpose.msra.mxu0 %v662
    %857 = vmatprep.subr.bf16.mxu0 0
    %858 = vmatpush1.bf16.xpose.msra.mxu0 0
    %859 = vmatprep.subr.bf16.mxu0 0
    %860 = vmatpush1.bf16.xpose.msra.mxu0 0
    %861 = vmatprep.subr.bf16.mxu0 0
    %862 = vmatpush1.bf16.xpose.msra.mxu0 0
    %863 = vmatprep.subr.bf16.mxu0 0
    %864 = vmatpush1.bf16.xpose.msra.mxu0 0
    %865 = vmatprep.subr.bf16.mxu0 0
    %866 = vmatpush1.bf16.xpose.msra.mxu0 0
    %867 = vmatprep.subr.bf16.mxu0 0
    %868 = vmatpush1.bf16.xpose.msra.mxu0 0
    %869 = vmatprep.subr.bf16.mxu0 0
    %870 = vmatpush1.bf16.xpose.msra.mxu0 0
    %871 = vmatprep.subr.bf16.mxu0 0
    %872 = vmatpush1.bf16.xpose.msra.mxu0 0
    %873 = vmatprep.subr.bf16.mxu0 0
    %874 = vmatpush1.bf16.xpose.msra.mxu0 0
    %875 = vmatprep.subr.bf16.mxu0 0
    %876 = vmatpush1.bf16.xpose.msra.mxu0 0
    %877 = vmatprep.subr.bf16.mxu0 0
    %878 = vmatpush1.bf16.xpose.msra.mxu0 0
    %879 = vmatprep.subr.bf16.mxu0 0
    %880 = vmatpush1.bf16.xpose.msra.mxu0 0
    %881 = vmatprep.subr.bf16.mxu0 0
    %882 = vmatpush1.bf16.xpose.msra.mxu0 0
    %883 = vmatprep.subr.bf16.mxu0 0
    %884 = vmatpush1.bf16.xpose.msra.mxu0 0
    %885 = vmatprep.subr.bf16.mxu0 0
    %886 = vmatpush1.bf16.xpose.msra.mxu0 0
    %887 = vmatprep.mubr.bf16.mxu0 0
    %888 = vmatmul.mubr.bf16.gmra.mrb[0].mxu0 %v853
    %v889 = vpop.f32.mrb[0].mxu0
    %v890 = vadd.f32 0.0, %v889
    %v891 = vpop.f32.mrb[0].mxu0
    %v892 = vpop.f32.mrb[0].mxu0
    %v893 = vadd.f32 0.0, %v892
    %v894 = vpop.f32.mrb[0].mxu0
    %895 = vdwg.mxu0
    %v896 = vmul.f32 %v890, 0.35355338
    %v897 = vmul.f32 %v893, 0.35355338
    %v898 = vadd.f32 %v896, %v477
    %v899 = vadd.f32 %v897, %v478
    %v900 = vsel %vm709, %v898, -inf
    %901 = vmax.xlane.f32.xlu0 %v900
    %v902 = vpop.xlane.xlu0 %901
    %v903 = vsel %vm709, %v899, -inf
    %904 = vmax.xlane.f32.xlu0 %v903
    %v905 = vpop.xlane.xlu0 %904
    %v906 = vsub.f32 %v898, %v902
    %v907 = vsub.f32 %v899, %v905
    %v908 = vmul.f32 %v906, 1.442695
    %v909 = vpow.pop %v908
    %v910 = vmul.f32 %v907, 1.442695
    %v911 = vpow.pop %v910
    %v912 = vsel %vm709, %v909, 0.0
    %913 = vadd.xlane.f32.xlu0 %v912
    %v914 = vpop.xlane.xlu0 %913
    %v915 = vsel %vm709, %v911, 0.0
    %916 = vadd.xlane.f32.xlu0 %v915
    %v917 = vpop.xlane.xlu0 %916
    %v918 = vrcp.pop %v914
    %v919 = vrcp.pop %v917
    %v920 = vmul.f32 %v909, %v918
    %v921 = vmul.f32 %v911, %v919
    %v922 = vpack.c.bf16 %v921, %v920
    %v923 = vmul.bf16 %v656, %v471
    %v924 = vmul.bf16 %v540, %v476
    %v926 = vsel %vm413, %v924, 0
    %928 = vmatprep.subr.bf16.mxu0 0
    %929 = vmatpush1.bf16.xpose.msra.mxu0 %v662
    %930 = vmatprep.subr.bf16.mxu0 0
    %931 = vmatpush1.bf16.xpose.msra.mxu0 0
    %932 = vmatprep.subr.bf16.mxu0 0
    %933 = vmatpush1.bf16.xpose.msra.mxu0 0
    %934 = vmatprep.subr.bf16.mxu0 0
    %935 = vmatpush1.bf16.xpose.msra.mxu0 0
    %936 = vmatprep.subr.bf16.mxu0 0
    %937 = vmatpush1.bf16.xpose.msra.mxu0 0
    %938 = vmatprep.subr.bf16.mxu0 0
    %939 = vmatpush1.bf16.xpose.msra.mxu0 0
    %940 = vmatprep.subr.bf16.mxu0 0
    %941 = vmatpush1.bf16.xpose.msra.mxu0 0
    %942 = vmatprep.subr.bf16.mxu0 0
    %943 = vmatpush1.bf16.xpose.msra.mxu0 0
    %944 = vmatprep.subr.bf16.mxu0 0
    %945 = vmatpush1.bf16.xpose.msra.mxu0 0
    %946 = vmatprep.subr.bf16.mxu0 0
    %947 = vmatpush1.bf16.xpose.msra.mxu0 0
    %948 = vmatprep.subr.bf16.mxu0 0
    %949 = vmatpush1.bf16.xpose.msra.mxu0 0
    %950 = vmatprep.subr.bf16.mxu0 0
    %951 = vmatpush1.bf16.xpose.msra.mxu0 0
    %952 = vmatprep.subr.bf16.mxu0 0
    %953 = vmatpush1.bf16.xpose.msra.mxu0 0
    %954 = vmatprep.subr.bf16.mxu0 0
    %955 = vmatpush1.bf16.xpose.msra.mxu0 0
    %956 = vmatprep.subr.bf16.mxu0 0
    %957 = vmatpush1.bf16.xpose.msra.mxu0 0
    %958 = vmatprep.subr.bf16.mxu0 0
    %959 = vmatpush1.bf16.xpose.msra.mxu0 0
    %960 = vmatprep.mubr.bf16.mxu0 0
    %961 = vmatmul.mubr.bf16.gmra.mrb[0].mxu0 %v926
    %v962 = vpop.f32.mrb[0].mxu0
    %v963 = vadd.f32 0.0, %v962
    %v964 = vpop.f32.mrb[0].mxu0
    %v965 = vpop.f32.mrb[0].mxu0
    %v966 = vadd.f32 0.0, %v965
    %v967 = vpop.f32.mrb[0].mxu0
    %968 = vdwg.mxu0
    %v969 = vmul.f32 %v963, 0.35355338
    %v970 = vmul.f32 %v966, 0.35355338
    %v971 = vadd.f32 %v969, %v477
    %v972 = vadd.f32 %v970, %v478
    %v973 = vsel %vm709, %v971, -inf
    %974 = vmax.xlane.f32.xlu0 %v973
    %v975 = vpop.xlane.xlu0 %974
    %v976 = vsel %vm709, %v972, -inf
    %977 = vmax.xlane.f32.xlu0 %v976
    %v978 = vpop.xlane.xlu0 %977
    %v979 = vsub.f32 %v971, %v975
    %v980 = vsub.f32 %v972, %v978
    %v981 = vmul.f32 %v979, 1.442695
    %v982 = vpow.pop %v981
    %v983 = vmul.f32 %v980, 1.442695
    %v984 = vpow.pop %v983
    %v985 = vsel %vm709, %v982, 0.0
    %986 = vadd.xlane.f32.xlu0 %v985
    %v987 = vpop.xlane.xlu0 %986
    %v988 = vsel %vm709, %v984, 0.0
    %989 = vadd.xlane.f32.xlu0 %v988
    %v990 = vpop.xlane.xlu0 %989
    %v991 = vrcp.pop %v987
    %v992 = vrcp.pop %v990
    %v993 = vmul.f32 %v982, %v991
    %v994 = vmul.f32 %v984, %v992
    %v995 = vpack.c.bf16 %v994, %v993
    %v996 = vmul.bf16 %v656, %v476
    %v998 = vsel %vm709, %v995, 0
    %1000 = vmatprep.subr.bf16.mxu0 0
    %1001 = vmatpush1.bf16.msra.mxu0 %v996
    %1002 = vmatprep.subr.bf16.mxu0 0
    %1003 = vmatpush1.bf16.msra.mxu0 0
    %1004 = vmatprep.subr.bf16.mxu0 0
    %1005 = vmatpush1.bf16.msra.mxu0 0
    %1006 = vmatprep.subr.bf16.mxu0 0
    %1007 = vmatpush1.bf16.msra.mxu0 0
    %1008 = vmatprep.subr.bf16.mxu0 0
    %1009 = vmatpush1.bf16.msra.mxu0 0
    %1010 = vmatprep.subr.bf16.mxu0 0
    %1011 = vmatpush1.bf16.msra.mxu0 0
    %1012 = vmatprep.subr.bf16.mxu0 0
    %1013 = vmatpush1.bf16.msra.mxu0 0
    %1014 = vmatprep.subr.bf16.mxu0 0
    %1015 = vmatpush1.bf16.msra.mxu0 0
    %1016 = vmatprep.subr.bf16.mxu0 0
    %1017 = vmatpush1.bf16.msra.mxu0 0
    %1018 = vmatprep.subr.bf16.mxu0 0
    %1019 = vmatpush1.bf16.msra.mxu0 0
    %1020 = vmatprep.subr.bf16.mxu0 0
    %1021 = vmatpush1.bf16.msra.mxu0 0
    %1022 = vmatprep.subr.bf16.mxu0 0
    %1023 = vmatpush1.bf16.msra.mxu0 0
    %1024 = vmatprep.subr.bf16.mxu0 0
    %1025 = vmatpush1.bf16.msra.mxu0 0
    %1026 = vmatprep.subr.bf16.mxu0 0
    %1027 = vmatpush1.bf16.msra.mxu0 0
    %1028 = vmatprep.subr.bf16.mxu0 0
    %1029 = vmatpush1.bf16.msra.mxu0 0
    %1030 = vmatprep.subr.bf16.mxu0 0
    %1031 = vmatpush1.bf16.msra.mxu0 0
    %1032 = vmatprep.mubr.bf16.mxu0 0
    %1033 = vmatmul.mubr.bf16.gmra.mrb[0].mxu0 %v998
    %v1034 = vpop.f32.mrb[0].mxu0
    %v1035 = vadd.f32 0.0, %v1034
    %v1036 = vpop.f32.mrb[0].mxu0
    %v1037 = vpop.f32.mrb[0].mxu0
    %v1038 = vadd.f32 0.0, %v1037
    %v1039 = vpop.f32.mrb[0].mxu0
    %1040 = vdwg.mxu0
    %v1042 = vsel %vm709, %v732, 0
    %1044 = vmatprep.subr.bf16.mxu0 0
    %1045 = vmatpush1.bf16.msra.mxu0 %v733
    %1046 = vmatprep.subr.bf16.mxu0 0
    %1047 = vmatpush1.bf16.msra.mxu0 0
    %1048 = vmatprep.subr.bf16.mxu0 0
    %1049 = vmatpush1.bf16.msra.mxu0 0
    %1050 = vmatprep.subr.bf16.mxu0 0
    %1051 = vmatpush1.bf16.msra.mxu0 0
    %1052 = vmatprep.subr.bf16.mxu0 0
    %1053 = vmatpush1.bf16.msra.mxu0 0
    %1054 = vmatprep.subr.bf16.mxu0 0
    %1055 = vmatpush1.bf16.msra.mxu0 0
    %1056 = vmatprep.subr.bf16.mxu0 0
    %1057 = vmatpush1.bf16.msra.mxu0 0
    %1058 = vmatprep.subr.bf16.mxu0 0
    %1059 = vmatpush1.bf16.msra.mxu0 0
    %1060 = vmatprep.subr.bf16.mxu0 0
    %1061 = vmatpush1.bf16.msra.mxu0 0
    %1062 = vmatprep.subr.bf16.mxu0 0
    %1063 = vmatpush1.bf16.msra.mxu0 0
    %1064 = vmatprep.subr.bf16.mxu0 0
    %1065 = vmatpush1.bf16.msra.mxu0 0
    %1066 = vmatprep.subr.bf16.mxu0 0
    %1067 = vmatpush1.bf16.msra.mxu0 0
    %1068 = vmatprep.subr.bf16.mxu0 0
    %1069 = vmatpush1.bf16.msra.mxu0 0
    %1070 = vmatprep.subr.bf16.mxu0 0
    %1071 = vmatpush1.bf16.msra.mxu0 0
    %1072 = vmatprep.subr.bf16.mxu0 0
    %1073 = vmatpush1.bf16.msra.mxu0 0
    %1074 = vmatprep.subr.bf16.mxu0 0
    %1075 = vmatpush1.bf16.msra.mxu0 0
    %1076 = vmatprep.mubr.bf16.mxu0 0
    %1077 = vmatmul.mubr.bf16.gmra.mrb[0].mxu0 %v1042
    %v1078 = vpop.f32.mrb[0].mxu0
    %v1079 = vadd.f32 %v845, %v1078
    %v1080 = vpop.f32.mrb[0].mxu0
    %v1081 = vpop.f32.mrb[0].mxu0
    %v1082 = vadd.f32 %v848, %v1081
    %v1083 = vpop.f32.mrb[0].mxu0
    %1084 = vdwg.mxu0
    %v1086 = vsel %vm709, %v922, 0
    %1088 = vmatprep.subr.bf16.mxu0 0
    %1089 = vmatpush1.bf16.msra.mxu0 %v923
    %1090 = vmatprep.subr.bf16.mxu0 0
    %1091 = vmatpush1.bf16.msra.mxu0 0
    %1092 = vmatprep.subr.bf16.mxu0 0
    %1093 = vmatpush1.bf16.msra.mxu0 0
    %1094 = vmatprep.subr.bf16.mxu0 0
    %1095 = vmatpush1.bf16.msra.mxu0 0
    %1096 = vmatprep.subr.bf16.mxu0 0
    %1097 = vmatpush1.bf16.msra.mxu0 0
    %1098 = vmatprep.subr.bf16.mxu0 0
    %1099 = vmatpush1.bf16.msra.mxu0 0
    %1100 = vmatprep.subr.bf16.mxu0 0
    %1101 = vmatpush1.bf16.msra.mxu0 0
    %1102 = vmatprep.subr.bf16.mxu0 0
    %1103 = vmatpush1.bf16.msra.mxu0 0
    %1104 = vmatprep.subr.bf16.mxu0 0
    %1105 = vmatpush1.bf16.msra.mxu0 0
    %1106 = vmatprep.subr.bf16.mxu0 0
    %1107 = vmatpush1.bf16.msra.mxu0 0
    %1108 = vmatprep.subr.bf16.mxu0 0
    %1109 = vmatpush1.bf16.msra.mxu0 0
    %1110 = vmatprep.subr.bf16.mxu0 0
    %1111 = vmatpush1.bf16.msra.mxu0 0
    %1112 = vmatprep.subr.bf16.mxu0 0
    %1113 = vmatpush1.bf16.msra.mxu0 0
    %1114 = vmatprep.subr.bf16.mxu0 0
    %1115 = vmatpush1.bf16.msra.mxu0 0
    %1116 = vmatprep.subr.bf16.mxu0 0
    %1117 = vmatpush1.bf16.msra.mxu0 0
    %1118 = vmatprep.subr.bf16.mxu0 0
    %1119 = vmatpush1.bf16.msra.mxu0 0
    %1120 = vmatprep.mubr.bf16.mxu0 0
    %1121 = vmatmul.mubr.bf16.gmra.mrb[0].mxu0 %v1086
    %v1122 = vpop.f32.mrb[0].mxu0
    %v1123 = vadd.f32 %v1035, %v1122
    %v1124 = vpop.f32.mrb[0].mxu0
    %v1125 = vpop.f32.mrb[0].mxu0
    %v1126 = vadd.f32 %v1038, %v1125
    %v1127 = vpop.f32.mrb[0].mxu0
    %1128 = vdwg.mxu0
    %v1129 = vadd.f32 %v1079, %v1123
    %v1130 = vadd.f32 %v1082, %v1126
    %v1131 = vpack.c.bf16 %v1130, %v1129
    %v1132 = vld [vmem:[#allocation2 + $0x4c] sm:$0xf]
    %v1133 = vld [vmem:[#allocation2 + $0x50] sm:$0xf]
    %v1134 = vld [vmem:[#allocation2 + $0x54] sm:$0xf]
    %v1135 = vld [vmem:[#allocation2 + $0x58] sm:$0xf]
    %v1140 = vunpack.c.l.b16 %v1132
    %v1141 = vunpack.c.l.b16 %v1133
    %v1142 = vunpack.c.l.b16 %v1134
    %v1143 = vunpack.c.l.b16 %v1135
    %v1144 = vpack.c.b16 %v1141, %v1140
    %v1145 = vpack.c.b16 %v1143, %v1142
    %v1149 = vsel %vm413, %v1131, 0
    %1151 = vmatprep.subr.bf16.mxu0 0
    %1152 = vmatpush1.bf16.msra.mxu0 %v1144
    %1153 = vmatprep.subr.bf16.mxu0 0
    %1154 = vmatpush1.bf16.msra.mxu0 %v1145
    %1155 = vmatprep.subr.bf16.mxu0 0
    %1156 = vmatpush1.bf16.msra.mxu0 0
    %1157 = vmatprep.subr.bf16.mxu0 0
    %1158 = vmatpush1.bf16.msra.mxu0 0
    %1159 = vmatprep.subr.bf16.mxu0 0
    %1160 = vmatpush1.bf16.msra.mxu0 0
    %1161 = vmatprep.subr.bf16.mxu0 0
    %1162 = vmatpush1.bf16.msra.mxu0 0
    %1163 = vmatprep.subr.bf16.mxu0 0
    %1164 = vmatpush1.bf16.msra.mxu0 0
    %1165 = vmatprep.subr.bf16.mxu0 0
    %1166 = vmatpush1.bf16.msra.mxu0 0
    %1167 = vmatprep.subr.bf16.mxu0 0
    %1168 = vmatpush1.bf16.msra.mxu0 0
    %1169 = vmatprep.subr.bf16.mxu0 0
    %1170 = vmatpush1.bf16.msra.mxu0 0
    %1171 = vmatprep.subr.bf16.mxu0 0
    %1172 = vmatpush1.bf16.msra.mxu0 0
    %1173 = vmatprep.subr.bf16.mxu0 0
    %1174 = vmatpush1.bf16.msra.mxu0 0
    %1175 = vmatprep.subr.bf16.mxu0 0
    %1176 = vmatpush1.bf16.msra.mxu0 0
    %1177 = vmatprep.subr.bf16.mxu0 0
    %1178 = vmatpush1.bf16.msra.mxu0 0
    %1179 = vmatprep.subr.bf16.mxu0 0
    %1180 = vmatpush1.bf16.msra.mxu0 0
    %1181 = vmatprep.subr.bf16.mxu0 0
    %1182 = vmatpush1.bf16.msra.mxu0 0
    %1183 = vmatprep.mubr.bf16.mxu0 0
    %1184 = vmatmul.mubr.bf16.gmra.mrb[0].mxu0 %v1149
    %v1185 = vpop.f32.mrb[0].mxu0
    %v1186 = vadd.f32 0.0, %v1185
    %v1187 = vpop.f32.mrb[0].mxu0
    %v1188 = vpop.f32.mrb[0].mxu0
    %v1189 = vadd.f32 0.0, %v1188
    %v1190 = vpop.f32.mrb[0].mxu0
    %1191 = vdwg.mxu0
    %v1192 = vadd.f32 %v453, %v1186
    %v1193 = vadd.f32 %v454, %v1189
    %v1194 = vld [vmem:[%s2 + $0x58] sm:$0x1]
    %v1195 = vlaneseq
    %v1196 = vshrl.u32 %v1195, 7
    %v1197 = vsub.s32 0, %v1196
    %v1198 = vrot.slane %v1194, %v1197
    %v1199 = vadd.f32 %v1192, %v1198
    %v1200 = vadd.f32 %v1193, %v1198
    %v1201 = vsel %vm413, %v1199, 0.0
    %1202 = vadd.xlane.f32.xlu0 %v1201
    %v1203 = vpop.xlane.xlu0 %1202
    %v1204 = vsel %vm413, %v1200, 0.0
    %1205 = vadd.xlane.f32.xlu0 %v1204
    %v1206 = vpop.xlane.xlu0 %1205
    %v1207 = vmul.f32 %v1203, %v420
    %v1208 = vmul.f32 %v1206, %v420
    %v1209 = vsub.f32 %v1199, %v1207
    %v1210 = vsub.f32 %v1200, %v1208
    %v1211 = vmul.f32 %v1209, %v1209
    %v1212 = vmul.f32 %v1210, %v1210
    %v1213 = vsel %vm413, %v1211, 0.0
    %1214 = vadd.xlane.f32.xlu0 %v1213
    %v1215 = vpop.xlane.xlu0 %1214
    %v1216 = vsel %vm413, %v1212, 0.0
    %1217 = vadd.xlane.f32.xlu0 %v1216
    %v1218 = vpop.xlane.xlu0 %1217
    %v1219 = vmul.f32 %v1215, %v420
    %v1220 = vmul.f32 %v1218, %v420
    %v1221 = vadd.f32 %v1219, 1e-06
    %v1222 = vadd.f32 %v1220, 1e-06
    %v1223 = vrsqrt.pop %v1221
    %v1224 = vrsqrt.pop %v1222
    %v1225 = vmul.f32 %v1209, %v1223
    %v1226 = vmul.f32 %v1210, %v1224
    %v1227 = vld [vmem:[%s2 + $0x60] sm:$0x1]
    %v1228 = vlaneseq
    %v1229 = vshrl.u32 %v1228, 7
    %v1230 = vsub.s32 0, %v1229
    %v1231 = vrot.slane %v1227, %v1230
    %v1232 = vmul.f32 %v1225, %v1231
    %v1233 = vmul.f32 %v1226, %v1231
    %v1234 = vld [vmem:[%s2 + $0x68] sm:$0x1]
    %v1235 = vlaneseq
    %v1236 = vshrl.u32 %v1235, 7
    %v1237 = vsub.s32 0, %v1236
    %v1238 = vrot.slane %v1234, %v1237
    %v1239 = vadd.f32 %v1232, %v1238
    %v1240 = vadd.f32 %v1233, %v1238
    %v1241 = vpack.c.bf16 %v1240, %v1239
    %v1242 = vld [vmem:[#allocation2 + $0x5c] sm:$0xf]
    %v1243 = vld [vmem:[#allocation2 + $0x60] sm:$0xf]
    %v1244 = vld [vmem:[#allocation2 + $0x64] sm:$0xf]
    %v1245 = vld [vmem:[#allocation2 + $0x68] sm:$0xf]
    %v1246 = vld [vmem:[%s2 + $0x70] sm:$0x1]
    %v1247 = vlaneseq
    %v1248 = vshrl.u32 %v1247, 7
    %v1249 = vsub.s32 0, %v1248
    %v1250 = vrot.slane %v1246, %v1249
    %v1255 = vunpack.c.l.b16 %v1242
    %v1256 = vunpack.c.l.b16 %v1243
    %v1257 = vunpack.c.l.b16 %v1244
    %v1258 = vunpack.c.l.b16 %v1245
    %v1259 = vpack.c.b16 %v1256, %v1255
    %v1260 = vpack.c.b16 %v1258, %v1257
    %v1264 = vsel %vm413, %v1241, 0
    %1266 = vmatprep.subr.bf16.mxu0 0
    %1267 = vmatpush1.bf16.msra.mxu0 %v1259
    %1268 = vmatprep.subr.bf16.mxu0 0
    %1269 = vmatpush1.bf16.msra.mxu0 %v1260
    %1270 = vmatprep.subr.bf16.mxu0 0
    %1271 = vmatpush1.bf16.msra.mxu0 0
    %1272 = vmatprep.subr.bf16.mxu0 0
    %1273 = vmatpush1.bf16.msra.mxu0 0
    %1274 = vmatprep.subr.bf16.mxu0 0
    %1275 = vmatpush1.bf16.msra.mxu0 0
    %1276 = vmatprep.subr.bf16.mxu0 0
    %1277 = vmatpush1.bf16.msra.mxu0 0
    %1278 = vmatprep.subr.bf16.mxu0 0
    %1279 = vmatpush1.bf16.msra.mxu0 0
    %1280 = vmatprep.subr.bf16.mxu0 0
    %1281 = vmatpush1.bf16.msra.mxu0 0
    %1282 = vmatprep.subr.bf16.mxu0 0
    %1283 = vmatpush1.bf16.msra.mxu0 0
    %1284 = vmatprep.subr.bf16.mxu0 0
    %1285 = vmatpush1.bf16.msra.mxu0 0
    %1286 = vmatprep.subr.bf16.mxu0 0
    %1287 = vmatpush1.bf16.msra.mxu0 0
    %1288 = vmatprep.subr.bf16.mxu0 0
    %1289 = vmatpush1.bf16.msra.mxu0 0
    %1290 = vmatprep.subr.bf16.mxu0 0
    %1291 = vmatpush1.bf16.msra.mxu0 0
    %1292 = vmatprep.subr.bf16.mxu0 0
    %1293 = vmatpush1.bf16.msra.mxu0 0
    %1294 = vmatprep.subr.bf16.mxu0 0
    %1295 = vmatpush1.bf16.msra.mxu0 0
    %1296 = vmatprep.subr.bf16.mxu0 0
    %1297 = vmatpush1.bf16.msra.mxu0 0
    %1298 = vmatprep.mubr.bf16.mxu0 0
    %1299 = vmatmul.mubr.bf16.gmra.mrb[0].mxu0 %v1264
    %v1300 = vpop.f32.mrb[0].mxu0
    %v1301 = vadd.f32 %v1250, %v1300
    %v1302 = vpop.f32.mrb[0].mxu0
    %v1303 = vpop.f32.mrb[0].mxu0
    %v1304 = vadd.f32 %v1250, %v1303
    %v1305 = vpop.f32.mrb[0].mxu0
    %1306 = vdwg.mxu0
    %v1307 = vmax.f32 %v1301, 0.0
    %v1308 = vmax.f32 %v1304, 0.0
    %v1309 = vpack.c.bf16 %v1308, %v1307
    %v1310 = vld [vmem:[#allocation2 + $0x6c] sm:$0xf]
    %v1311 = vld [vmem:[#allocation2 + $0x70] sm:$0xf]
    %v1312 = vld [vmem:[%s2 + $0x78] sm:$0x1]
    %v1313 = vlaneseq
    %v1314 = vshrl.u32 %v1313, 7
    %v1315 = vsub.s32 0, %v1314
    %v1316 = vrot.slane %v1312, %v1315
    %v1319 = vunpack.c.l.b16 %v1310
    %v1320 = vunpack.c.l.b16 %v1311
    %v1321 = vpack.c.b16 %v1320, %v1319
    %v1324 = vsel %vm709, %v1309, 0
    %1326 = vmatprep.subr.bf16.mxu0 0
    %1327 = vmatpush1.bf16.msra.mxu0 %v1321
    %1328 = vmatprep.subr.bf16.mxu0 0
    %1329 = vmatpush1.bf16.msra.mxu0 0
    %1330 = vmatprep.subr.bf16.mxu0 0
    %1331 = vmatpush1.bf16.msra.mxu0 0
    %1332 = vmatprep.subr.bf16.mxu0 0
    %1333 = vmatpush1.bf16.msra.mxu0 0
    %1334 = vmatprep.subr.bf16.mxu0 0
    %1335 = vmatpush1.bf16.msra.mxu0 0
    %1336 = vmatprep.subr.bf16.mxu0 0
    %1337 = vmatpush1.bf16.msra.mxu0 0
    %1338 = vmatprep.subr.bf16.mxu0 0
    %1339 = vmatpush1.bf16.msra.mxu0 0
    %1340 = vmatprep.subr.bf16.mxu0 0
    %1341 = vmatpush1.bf16.msra.mxu0 0
    %1342 = vmatprep.subr.bf16.mxu0 0
    %1343 = vmatpush1.bf16.msra.mxu0 0
    %1344 = vmatprep.subr.bf16.mxu0 0
    %1345 = vmatpush1.bf16.msra.mxu0 0
    %1346 = vmatprep.subr.bf16.mxu0 0
    %1347 = vmatpush1.bf16.msra.mxu0 0
    %1348 = vmatprep.subr.bf16.mxu0 0
    %1349 = vmatpush1.bf16.msra.mxu0 0
    %1350 = vmatprep.subr.bf16.mxu0 0
    %1351 = vmatpush1.bf16.msra.mxu0 0
    %1352 = vmatprep.subr.bf16.mxu0 0
    %1353 = vmatpush1.bf16.msra.mxu0 0
    %1354 = vmatprep.subr.bf16.mxu0 0
    %1355 = vmatpush1.bf16.msra.mxu0 0
    %1356 = vmatprep.subr.bf16.mxu0 0
    %1357 = vmatpush1.bf16.msra.mxu0 0
    %1358 = vmatprep.mubr.bf16.mxu0 0
    %1359 = vmatmul.mubr.bf16.gmra.mrb[0].mxu0 %v1324
    %v1360 = vpop.f32.mrb[0].mxu0
    %v1361 = vadd.f32 %v1316, %v1360
    %v1362 = vpop.f32.mrb[0].mxu0
    %v1363 = vpop.f32.mrb[0].mxu0
    %v1364 = vadd.f32 %v1316, %v1363
    %v1365 = vpop.f32.mrb[0].mxu0
    %1366 = vdwg.mxu0
    %v1367 = vadd.f32 %v1239, %v1361
    %v1368 = vadd.f32 %v1240, %v1364
    %v1369 = vsel %vm413, %v1367, 0.0
    %1370 = vadd.xlane.f32.xlu0 %v1369
    %v1371 = vpop.xlane.xlu0 %1370
    %v1372 = vsel %vm413, %v1368, 0.0
    %1373 = vadd.xlane.f32.xlu0 %v1372
    %v1374 = vpop.xlane.xlu0 %1373
    %v1375 = vmul.f32 %v1371, %v420
    %v1376 = vmul.f32 %v1374, %v420
    %v1377 = vsub.f32 %v1367, %v1375
    %v1378 = vsub.f32 %v1368, %v1376
    %v1379 = vmul.f32 %v1377, %v1377
    %v1380 = vmul.f32 %v1378, %v1378
    %v1381 = vsel %vm413, %v1379, 0.0
    %1382 = vadd.xlane.f32.xlu0 %v1381
    %v1383 = vpop.xlane.xlu0 %1382
    %v1384 = vsel %vm413, %v1380, 0.0
    %1385 = vadd.xlane.f32.xlu0 %v1384
    %v1386 = vpop.xlane.xlu0 %1385
    %v1387 = vmul.f32 %v1383, %v420
    %v1388 = vmul.f32 %v1386, %v420
    %v1389 = vadd.f32 %v1387, 1e-06
    %v1390 = vadd.f32 %v1388, 1e-06
    %v1391 = vrsqrt.pop %v1389
    %v1392 = vrsqrt.pop %v1390
    %v1393 = vmul.f32 %v1377, %v1391
    %v1394 = vmul.f32 %v1378, %v1392
    %v1395 = vld [vmem:[%s2 + $0x80] sm:$0x1]
    %v1396 = vlaneseq
    %v1397 = vshrl.u32 %v1396, 7
    %v1398 = vsub.s32 0, %v1397
    %v1399 = vrot.slane %v1395, %v1398
    %v1400 = vmul.f32 %v1393, %v1399
    %v1401 = vmul.f32 %v1394, %v1399
    %v1402 = vld [vmem:[%s2 + $0x88] sm:$0x1]
    %v1403 = vlaneseq
    %v1404 = vshrl.u32 %v1403, 7
    %v1405 = vsub.s32 0, %v1404
    %v1406 = vrot.slane %v1402, %v1405
    %v1407 = vadd.f32 %v1400, %v1406
    %v1408 = vadd.f32 %v1401, %v1406
    %v1409 = vpack.c.bf16 %v1408, %v1407
    %v1410 = vld [vmem:[#allocation2 + $0x74] sm:$0xf]
    %v1411 = vld [vmem:[#allocation2 + $0x78] sm:$0xf]
    %v1412 = vld [vmem:[#allocation2 + $0x7c] sm:$0xf]
    %v1413 = vld [vmem:[#allocation2 + $0x80] sm:$0xf]
    %v1418 = vunpack.c.l.b16 %v1410
    %v1419 = vunpack.c.l.b16 %v1411
    %v1420 = vunpack.c.l.b16 %v1412
    %v1421 = vunpack.c.l.b16 %v1413
    %v1422 = vpack.c.b16 %v1419, %v1418
    %v1423 = vpack.c.b16 %v1421, %v1420
    %v1427 = vsel %vm413, %v1409, 0
    %1429 = vmatprep.subr.bf16.mxu0 0
    %1430 = vmatpush1.bf16.msra.mxu0 %v1422
    %1431 = vmatprep.subr.bf16.mxu0 0
    %1432 = vmatpush1.bf16.msra.mxu0 %v1423
    %1433 = vmatprep.subr.bf16.mxu0 0
    %1434 = vmatpush1.bf16.msra.mxu0 0
    %1435 = vmatprep.subr.bf16.mxu0 0
    %1436 = vmatpush1.bf16.msra.mxu0 0
    %1437 = vmatprep.subr.bf16.mxu0 0
    %1438 = vmatpush1.bf16.msra.mxu0 0
    %1439 = vmatprep.subr.bf16.mxu0 0
    %1440 = vmatpush1.bf16.msra.mxu0 0
    %1441 = vmatprep.subr.bf16.mxu0 0
    %1442 = vmatpush1.bf16.msra.mxu0 0
    %1443 = vmatprep.subr.bf16.mxu0 0
    %1444 = vmatpush1.bf16.msra.mxu0 0
    %1445 = vmatprep.subr.bf16.mxu0 0
    %1446 = vmatpush1.bf16.msra.mxu0 0
    %1447 = vmatprep.subr.bf16.mxu0 0
    %1448 = vmatpush1.bf16.msra.mxu0 0
    %1449 = vmatprep.subr.bf16.mxu0 0
    %1450 = vmatpush1.bf16.msra.mxu0 0
    %1451 = vmatprep.subr.bf16.mxu0 0
    %1452 = vmatpush1.bf16.msra.mxu0 0
    %1453 = vmatprep.subr.bf16.mxu0 0
    %1454 = vmatpush1.bf16.msra.mxu0 0
    %1455 = vmatprep.subr.bf16.mxu0 0
    %1456 = vmatpush1.bf16.msra.mxu0 0
    %1457 = vmatprep.subr.bf16.mxu0 0
    %1458 = vmatpush1.bf16.msra.mxu0 0
    %1459 = vmatprep.subr.bf16.mxu0 0
    %1460 = vmatpush1.bf16.msra.mxu0 0
    %1461 = vmatprep.mubr.bf16.mxu0 0
    %1462 = vmatmul.mubr.bf16.gmra.mrb[0].mxu0 %v1427
    %v1463 = vpop.f32.mrb[0].mxu0
    %v1464 = vadd.f32 0.0, %v1463
    %v1465 = vpop.f32.mrb[0].mxu0
    %v1466 = vpop.f32.mrb[0].mxu0
    %v1467 = vadd.f32 0.0, %v1466
    %v1468 = vpop.f32.mrb[0].mxu0
    %1469 = vdwg.mxu0
    %v1470 = vpack.c.bf16 %v1467, %v1464
    %v1471 = vld [vmem:[#allocation2 + $0x84] sm:$0xf]
    %v1472 = vld [vmem:[#allocation2 + $0x88] sm:$0xf]
    %v1473 = vld [vmem:[#allocation2 + $0x8c] sm:$0xf]
    %v1474 = vld [vmem:[#allocation2 + $0x90] sm:$0xf]
    %v1479 = vunpack.c.l.b16 %v1471
    %v1480 = vunpack.c.l.b16 %v1472
    %v1481 = vunpack.c.l.b16 %v1473
    %v1482 = vunpack.c.l.b16 %v1474
    %v1483 = vpack.c.b16 %v1480, %v1479
    %v1484 = vpack.c.b16 %v1482, %v1481
    %1487 = vmatprep.subr.bf16.mxu0 0
    %1488 = vmatpush1.bf16.msra.mxu0 %v1483
    %1489 = vmatprep.subr.bf16.mxu0 0
    %1490 = vmatpush1.bf16.msra.mxu0 %v1484
    %1491 = vmatprep.subr.bf16.mxu0 0
    %1492 = vmatpush1.bf16.msra.mxu0 0
    %1493 = vmatprep.subr.bf16.mxu0 0
    %1494 = vmatpush1.bf16.msra.mxu0 0
    %1495 = vmatprep.subr.bf16.mxu0 0
    %1496 = vmatpush1.bf16.msra.mxu0 0
    %1497 = vmatprep.subr.bf16.mxu0 0
    %1498 = vmatpush1.bf16.msra.mxu0 0
    %1499 = vmatprep.subr.bf16.mxu0 0
    %1500 = vmatpush1.bf16.msra.mxu0 0
    %1501 = vmatprep.subr.bf16.mxu0 0
    %1502 = vmatpush1.bf16.msra.mxu0 0
    %1503 = vmatprep.subr.bf16.mxu0 0
    %1504 = vmatpush1.bf16.msra.mxu0 0
    %1505 = vmatprep.subr.bf16.mxu0 0
    %1506 = vmatpush1.bf16.msra.mxu0 0
    %1507 = vmatprep.subr.bf16.mxu0 0
    %1508 = vmatpush1.bf16.msra.mxu0 0
    %1509 = vmatprep.subr.bf16.mxu0 0
    %1510 = vmatpush1.bf16.msra.mxu0 0
    %1511 = vmatprep.subr.bf16.mxu0 0
    %1512 = vmatpush1.bf16.msra.mxu0 0
    %1513 = vmatprep.subr.bf16.mxu0 0
    %1514 = vmatpush1.bf16.msra.mxu0 0
    %1515 = vmatprep.subr.bf16.mxu0 0
    %1516 = vmatpush1.bf16.msra.mxu0 0
    %1517 = vmatprep.subr.bf16.mxu0 0
    %1518 = vmatpush1.bf16.msra.mxu0 0
    %1519 = vmatprep.mubr.bf16.mxu0 0
    %1520 = vmatmul.mubr.bf16.gmra.mrb[0].mxu0 %v1427
    %v1521 = vpop.f32.mrb[0].mxu0
    %v1522 = vadd.f32 0.0, %v1521
    %v1523 = vpop.f32.mrb[0].mxu0
    %v1524 = vpop.f32.mrb[0].mxu0
    %v1525 = vadd.f32 0.0, %v1524
    %v1526 = vpop.f32.mrb[0].mxu0
    %1527 = vdwg.mxu0
    %v1528 = vpack.c.bf16 %v1525, %v1522
    %v1529 = vld [vmem:[#allocation2 + $0x94] sm:$0xf]
    %v1530 = vld [vmem:[#allocation2 + $0x98] sm:$0xf]
    %v1531 = vld [vmem:[#allocation2 + $0x9c] sm:$0xf]
    %v1532 = vld [vmem:[#allocation2 + $0xa0] sm:$0xf]
    %v1537 = vunpack.c.l.b16 %v1529
    %v1538 = vunpack.c.l.b16 %v1530
    %v1539 = vunpack.c.l.b16 %v1531
    %v1540 = vunpack.c.l.b16 %v1532
    %v1541 = vpack.c.b16 %v1538, %v1537
    %v1542 = vpack.c.b16 %v1540, %v1539
    %1545 = vmatprep.subr.bf16.mxu0 0
    %1546 = vmatpush1.bf16.msra.mxu0 %v1541
    %1547 = vmatprep.subr.bf16.mxu0 0
    %1548 = vmatpush1.bf16.msra.mxu0 %v1542
    %1549 = vmatprep.subr.bf16.mxu0 0
    %1550 = vmatpush1.bf16.msra.mxu0 0
    %1551 = vmatprep.subr.bf16.mxu0 0
    %1552 = vmatpush1.bf16.msra.mxu0 0
    %1553 = vmatprep.subr.bf16.mxu0 0
    %1554 = vmatpush1.bf16.msra.mxu0 0
    %1555 = vmatprep.subr.bf16.mxu0 0
    %1556 = vmatpush1.bf16.msra.mxu0 0
    %1557 = vmatprep.subr.bf16.mxu0 0
    %1558 = vmatpush1.bf16.msra.mxu0 0
    %1559 = vmatprep.subr.bf16.mxu0 0
    %1560 = vmatpush1.bf16.msra.mxu0 0
    %1561 = vmatprep.subr.bf16.mxu0 0
    %1562 = vmatpush1.bf16.msra.mxu0 0
    %1563 = vmatprep.subr.bf16.mxu0 0
    %1564 = vmatpush1.bf16.msra.mxu0 0
    %1565 = vmatprep.subr.bf16.mxu0 0
    %1566 = vmatpush1.bf16.msra.mxu0 0
    %1567 = vmatprep.subr.bf16.mxu0 0
    %1568 = vmatpush1.bf16.msra.mxu0 0
    %1569 = vmatprep.subr.bf16.mxu0 0
    %1570 = vmatpush1.bf16.msra.mxu0 0
    %1571 = vmatprep.subr.bf16.mxu0 0
    %1572 = vmatpush1.bf16.msra.mxu0 0
    %1573 = vmatprep.subr.bf16.mxu0 0
    %1574 = vmatpush1.bf16.msra.mxu0 0
    %1575 = vmatprep.subr.bf16.mxu0 0
    %1576 = vmatpush1.bf16.msra.mxu0 0
    %1577 = vmatprep.mubr.bf16.mxu0 0
    %1578 = vmatmul.mubr.bf16.gmra.mrb[0].mxu0 %v1427
    %v1579 = vpop.f32.mrb[0].mxu0
    %v1580 = vadd.f32 0.0, %v1579
    %v1581 = vpop.f32.mrb[0].mxu0
    %v1582 = vpop.f32.mrb[0].mxu0
    %v1583 = vadd.f32 0.0, %v1582
    %v1584 = vpop.f32.mrb[0].mxu0
    %1585 = vdwg.mxu0
    %v1586 = vpack.c.bf16 %v1583, %v1580
    %v1587 = vmul.bf16 %v1470, %v461
    %v1589 = vsel %vm413, %v1587, 0
    %v1592 = vsel %vm413, %v1528, 0
    %1594 = vmatprep.subr.bf16.mxu0 0
    %1595 = vmatpush1.bf16.xpose.msra.mxu0 %v1592
    %1596 = vmatprep.subr.bf16.mxu0 0
    %1597 = vmatpush1.bf16.xpose.msra.mxu0 0
    %1598 = vmatprep.subr.bf16.mxu0 0
    %1599 = vmatpush1.bf16.xpose.msra.mxu0 0
    %1600 = vmatprep.subr.bf16.mxu0 0
    %1601 = vmatpush1.bf16.xpose.msra.mxu0 0
    %1602 = vmatprep.subr.bf16.mxu0 0
    %1603 = vmatpush1.bf16.xpose.msra.mxu0 0
    %1604 = vmatprep.subr.bf16.mxu0 0
    %1605 = vmatpush1.bf16.xpose.msra.mxu0 0
    %1606 = vmatprep.subr.bf16.mxu0 0
    %1607 = vmatpush1.bf16.xpose.msra.mxu0 0
    %1608 = vmatprep.subr.bf16.mxu0 0
    %1609 = vmatpush1.bf16.xpose.msra.mxu0 0
    %1610 = vmatprep.subr.bf16.mxu0 0
    %1611 = vmatpush1.bf16.xpose.msra.mxu0 0
    %1612 = vmatprep.subr.bf16.mxu0 0
    %1613 = vmatpush1.bf16.xpose.msra.mxu0 0
    %1614 = vmatprep.subr.bf16.mxu0 0
    %1615 = vmatpush1.bf16.xpose.msra.mxu0 0
    %1616 = vmatprep.subr.bf16.mxu0 0
    %1617 = vmatpush1.bf16.xpose.msra.mxu0 0
    %1618 = vmatprep.subr.bf16.mxu0 0
    %1619 = vmatpush1.bf16.xpose.msra.mxu0 0
    %1620 = vmatprep.subr.bf16.mxu0 0
    %1621 = vmatpush1.bf16.xpose.msra.mxu0 0
    %1622 = vmatprep.subr.bf16.mxu0 0
    %1623 = vmatpush1.bf16.xpose.msra.mxu0 0
    %1624 = vmatprep.subr.bf16.mxu0 0
    %1625 = vmatpush1.bf16.xpose.msra.mxu0 0
    %1626 = vmatprep.mubr.bf16.mxu0 0
    %1627 = vmatmul.mubr.bf16.gmra.mrb[0].mxu0 %v1589
    %v1628 = vpop.f32.mrb[0].mxu0
    %v1629 = vadd.f32 0.0, %v1628
    %v1630 = vpop.f32.mrb[0].mxu0
    %v1631 = vpop.f32.mrb[0].mxu0
    %v1632 = vadd.f32 0.0, %v1631
    %v1633 = vpop.f32.mrb[0].mxu0
    %1634 = vdwg.mxu0
    %v1635 = vmul.f32 %v1629, 0.35355338
    %v1636 = vmul.f32 %v1632, 0.35355338
    %v1637 = vadd.f32 %v1635, %v477
    %v1638 = vadd.f32 %v1636, %v478
    %v1639 = vsel %vm709, %v1637, -inf
    %1640 = vmax.xlane.f32.xlu0 %v1639
    %v1641 = vpop.xlane.xlu0 %1640
    %v1642 = vsel %vm709, %v1638, -inf
    %1643 = vmax.xlane.f32.xlu0 %v1642
    %v1644 = vpop.xlane.xlu0 %1643
    %v1645 = vsub.f32 %v1637, %v1641
    %v1646 = vsub.f32 %v1638, %v1644
    %v1647 = vmul.f32 %v1645, 1.442695
    %v1648 = vpow.pop %v1647
    %v1649 = vmul.f32 %v1646, 1.442695
    %v1650 = vpow.pop %v1649
    %v1651 = vsel %vm709, %v1648, 0.0
    %1652 = vadd.xlane.f32.xlu0 %v1651
    %v1653 = vpop.xlane.xlu0 %1652
    %v1654 = vsel %vm709, %v1650, 0.0
    %1655 = vadd.xlane.f32.xlu0 %v1654
    %v1656 = vpop.xlane.xlu0 %1655
    %v1657 = vrcp.pop %v1653
    %v1658 = vrcp.pop %v1656
    %v1659 = vmul.f32 %v1648, %v1657
    %v1660 = vmul.f32 %v1650, %v1658
    %v1661 = vpack.c.bf16 %v1660, %v1659
    %v1662 = vmul.bf16 %v1586, %v461
    %v1663 = vmul.bf16 %v1470, %v466
    %v1665 = vsel %vm413, %v1663, 0
    %1667 = vmatprep.subr.bf16.mxu0 0
    %1668 = vmatpush1.bf16.xpose.msra.mxu0 %v1592
    %1669 = vmatprep.subr.bf16.mxu0 0
    %1670 = vmatpush1.bf16.xpose.msra.mxu0 0
    %1671 = vmatprep.subr.bf16.mxu0 0
    %1672 = vmatpush1.bf16.xpose.msra.mxu0 0
    %1673 = vmatprep.subr.bf16.mxu0 0
    %1674 = vmatpush1.bf16.xpose.msra.mxu0 0
    %1675 = vmatprep.subr.bf16.mxu0 0
    %1676 = vmatpush1.bf16.xpose.msra.mxu0 0
    %1677 = vmatprep.subr.bf16.mxu0 0
    %1678 = vmatpush1.bf16.xpose.msra.mxu0 0
    %1679 = vmatprep.subr.bf16.mxu0 0
    %1680 = vmatpush1.bf16.xpose.msra.mxu0 0
    %1681 = vmatprep.subr.bf16.mxu0 0
    %1682 = vmatpush1.bf16.xpose.msra.mxu0 0
    %1683 = vmatprep.subr.bf16.mxu0 0
    %1684 = vmatpush1.bf16.xpose.msra.mxu0 0
    %1685 = vmatprep.subr.bf16.mxu0 0
    %1686 = vmatpush1.bf16.xpose.msra.mxu0 0
    %1687 = vmatprep.subr.bf16.mxu0 0
    %1688 = vmatpush1.bf16.xpose.msra.mxu0 0
    %1689 = vmatprep.subr.bf16.mxu0 0
    %1690 = vmatpush1.bf16.xpose.msra.mxu0 0
    %1691 = vmatprep.subr.bf16.mxu0 0
    %1692 = vmatpush1.bf16.xpose.msra.mxu0 0
    %1693 = vmatprep.subr.bf16.mxu0 0
    %1694 = vmatpush1.bf16.xpose.msra.mxu0 0
    %1695 = vmatprep.subr.bf16.mxu0 0
    %1696 = vmatpush1.bf16.xpose.msra.mxu0 0
    %1697 = vmatprep.subr.bf16.mxu0 0
    %1698 = vmatpush1.bf16.xpose.msra.mxu0 0
    %1699 = vmatprep.mubr.bf16.mxu0 0
    %1700 = vmatmul.mubr.bf16.gmra.mrb[0].mxu0 %v1665
    %v1701 = vpop.f32.mrb[0].mxu0
    %v1702 = vadd.f32 0.0, %v1701
    %v1703 = vpop.f32.mrb[0].mxu0
    %v1704 = vpop.f32.mrb[0].mxu0
    %v1705 = vadd.f32 0.0, %v1704
    %v1706 = vpop.f32.mrb[0].mxu0
    %1707 = vdwg.mxu0
    %v1708 = vmul.f32 %v1702, 0.35355338
    %v1709 = vmul.f32 %v1705, 0.35355338
    %v1710 = vadd.f32 %v1708, %v477
    %v1711 = vadd.f32 %v1709, %v478
    %v1712 = vsel %vm709, %v1710, -inf
    %1713 = vmax.xlane.f32.xlu0 %v1712
    %v1714 = vpop.xlane.xlu0 %1713
    %v1715 = vsel %vm709, %v1711, -inf
    %1716 = vmax.xlane.f32.xlu0 %v1715
    %v1717 = vpop.xlane.xlu0 %1716
    %v1718 = vsub.f32 %v1710, %v1714
    %v1719 = vsub.f32 %v1711, %v1717
    %v1720 = vmul.f32 %v1718, 1.442695
    %v1721 = vpow.pop %v1720
    %v1722 = vmul.f32 %v1719, 1.442695
    %v1723 = vpow.pop %v1722
    %v1724 = vsel %vm709, %v1721, 0.0
    %1725 = vadd.xlane.f32.xlu0 %v1724
    %v1726 = vpop.xlane.xlu0 %1725
    %v1727 = vsel %vm709, %v1723, 0.0
    %1728 = vadd.xlane.f32.xlu0 %v1727
    %v1729 = vpop.xlane.xlu0 %1728
    %v1730 = vrcp.pop %v1726
    %v1731 = vrcp.pop %v1729
    %v1732 = vmul.f32 %v1721, %v1730
    %v1733 = vmul.f32 %v1723, %v1731
    %v1734 = vpack.c.bf16 %v1733, %v1732
    %v1735 = vmul.bf16 %v1586, %v466
    %v1737 = vsel %vm709, %v1734, 0
    %1739 = vmatprep.subr.bf16.mxu0 0
    %1740 = vmatpush1.bf16.msra.mxu0 %v1735
    %1741 = vmatprep.subr.bf16.mxu0 0
    %1742 = vmatpush1.bf16.msra.mxu0 0
    %1743 = vmatprep.subr.bf16.mxu0 0
    %1744 = vmatpush1.bf16.msra.mxu0 0
    %1745 = vmatprep.subr.bf16.mxu0 0
    %1746 = vmatpush1.bf16.msra.mxu0 0
    %1747 = vmatprep.subr.bf16.mxu0 0
    %1748 = vmatpush1.bf16.msra.mxu0 0
    %1749 = vmatprep.subr.bf16.mxu0 0
    %1750 = vmatpush1.bf16.msra.mxu0 0
    %1751 = vmatprep.subr.bf16.mxu0 0
    %1752 = vmatpush1.bf16.msra.mxu0 0
    %1753 = vmatprep.subr.bf16.mxu0 0
    %1754 = vmatpush1.bf16.msra.mxu0 0
    %1755 = vmatprep.subr.bf16.mxu0 0
    %1756 = vmatpush1.bf16.msra.mxu0 0
    %1757 = vmatprep.subr.bf16.mxu0 0
    %1758 = vmatpush1.bf16.msra.mxu0 0
    %1759 = vmatprep.subr.bf16.mxu0 0
    %1760 = vmatpush1.bf16.msra.mxu0 0
    %1761 = vmatprep.subr.bf16.mxu0 0
    %1762 = vmatpush1.bf16.msra.mxu0 0
    %1763 = vmatprep.subr.bf16.mxu0 0
    %1764 = vmatpush1.bf16.msra.mxu0 0
    %1765 = vmatprep.subr.bf16.mxu0 0
    %1766 = vmatpush1.bf16.msra.mxu0 0
    %1767 = vmatprep.subr.bf16.mxu0 0
    %1768 = vmatpush1.bf16.msra.mxu0 0
    %1769 = vmatprep.subr.bf16.mxu0 0
    %1770 = vmatpush1.bf16.msra.mxu0 0
    %1771 = vmatprep.mubr.bf16.mxu0 0
    %1772 = vmatmul.mubr.bf16.gmra.mrb[0].mxu0 %v1737
    %v1773 = vpop.f32.mrb[0].mxu0
    %v1774 = vadd.f32 0.0, %v1773
    %v1775 = vpop.f32.mrb[0].mxu0
    %v1776 = vpop.f32.mrb[0].mxu0
    %v1777 = vadd.f32 0.0, %v1776
    %v1778 = vpop.f32.mrb[0].mxu0
    %1779 = vdwg.mxu0
    %v1780 = vmul.bf16 %v1470, %v471
    %v1782 = vsel %vm413, %v1780, 0
    %1784 = vmatprep.subr.bf16.mxu0 0
    %1785 = vmatpush1.bf16.xpose.msra.mxu0 %v1592
    %1786 = vmatprep.subr.bf16.mxu0 0
    %1787 = vmatpush1.bf16.xpose.msra.mxu0 0
    %1788 = vmatprep.subr.bf16.mxu0 0
    %1789 = vmatpush1.bf16.xpose.msra.mxu0 0
    %1790 = vmatprep.subr.bf16.mxu0 0
    %1791 = vmatpush1.bf16.xpose.msra.mxu0 0
    %1792 = vmatprep.subr.bf16.mxu0 0
    %1793 = vmatpush1.bf16.xpose.msra.mxu0 0
    %1794 = vmatprep.subr.bf16.mxu0 0
    %1795 = vmatpush1.bf16.xpose.msra.mxu0 0
    %1796 = vmatprep.subr.bf16.mxu0 0
    %1797 = vmatpush1.bf16.xpose.msra.mxu0 0
    %1798 = vmatprep.subr.bf16.mxu0 0
    %1799 = vmatpush1.bf16.xpose.msra.mxu0 0
    %1800 = vmatprep.subr.bf16.mxu0 0
    %1801 = vmatpush1.bf16.xpose.msra.mxu0 0
    %1802 = vmatprep.subr.bf16.mxu0 0
    %1803 = vmatpush1.bf16.xpose.msra.mxu0 0
    %1804 = vmatprep.subr.bf16.mxu0 0
    %1805 = vmatpush1.bf16.xpose.msra.mxu0 0
    %1806 = vmatprep.subr.bf16.mxu0 0
    %1807 = vmatpush1.bf16.xpose.msra.mxu0 0
    %1808 = vmatprep.subr.bf16.mxu0 0
    %1809 = vmatpush1.bf16.xpose.msra.mxu0 0
    %1810 = vmatprep.subr.bf16.mxu0 0
    %1811 = vmatpush1.bf16.xpose.msra.mxu0 0
    %1812 = vmatprep.subr.bf16.mxu0 0
    %1813 = vmatpush1.bf16.xpose.msra.mxu0 0
    %1814 = vmatprep.subr.bf16.mxu0 0
    %1815 = vmatpush1.bf16.xpose.msra.mxu0 0
    %1816 = vmatprep.mubr.bf16.mxu0 0
    %1817 = vmatmul.mubr.bf16.gmra.mrb[0].mxu0 %v1782
    %v1818 = vpop.f32.mrb[0].mxu0
    %v1819 = vadd.f32 0.0, %v1818
    %v1820 = vpop.f32.mrb[0].mxu0
    %v1821 = vpop.f32.mrb[0].mxu0
    %v1822 = vadd.f32 0.0, %v1821
    %v1823 = vpop.f32.mrb[0].mxu0
    %1824 = vdwg.mxu0
    %v1825 = vmul.f32 %v1819, 0.35355338
    %v1826 = vmul.f32 %v1822, 0.35355338
    %v1827 = vadd.f32 %v1825, %v477
    %v1828 = vadd.f32 %v1826, %v478
    %v1829 = vsel %vm709, %v1827, -inf
    %1830 = vmax.xlane.f32.xlu0 %v1829
    %v1831 = vpop.xlane.xlu0 %1830
    %v1832 = vsel %vm709, %v1828, -inf
    %1833 = vmax.xlane.f32.xlu0 %v1832
    %v1834 = vpop.xlane.xlu0 %1833
    %v1835 = vsub.f32 %v1827, %v1831
    %v1836 = vsub.f32 %v1828, %v1834
    %v1837 = vmul.f32 %v1835, 1.442695
    %v1838 = vpow.pop %v1837
    %v1839 = vmul.f32 %v1836, 1.442695
    %v1840 = vpow.pop %v1839
    %v1841 = vsel %vm709, %v1838, 0.0
    %1842 = vadd.xlane.f32.xlu0 %v1841
    %v1843 = vpop.xlane.xlu0 %1842
    %v1844 = vsel %vm709, %v1840, 0.0
    %1845 = vadd.xlane.f32.xlu0 %v1844
    %v1846 = vpop.xlane.xlu0 %1845
    %v1847 = vrcp.pop %v1843
    %v1848 = vrcp.pop %v1846
    %v1849 = vmul.f32 %v1838, %v1847
    %v1850 = vmul.f32 %v1840, %v1848
    %v1851 = vpack.c.bf16 %v1850, %v1849
    %v1852 = vmul.bf16 %v1586, %v471
    %v1853 = vmul.bf16 %v1470, %v476
    %v1855 = vsel %vm413, %v1853, 0
    %1857 = vmatprep.subr.bf16.mxu0 0
    %1858 = vmatpush1.bf16.xpose.msra.mxu0 %v1592
    %1859 = vmatprep.subr.bf16.mxu0 0
    %1860 = vmatpush1.bf16.xpose.msra.mxu0 0
    %1861 = vmatprep.subr.bf16.mxu0 0
    %1862 = vmatpush1.bf16.xpose.msra.mxu0 0
    %1863 = vmatprep.subr.bf16.mxu0 0
    %1864 = vmatpush1.bf16.xpose.msra.mxu0 0
    %1865 = vmatprep.subr.bf16.mxu0 0
    %1866 = vmatpush1.bf16.xpose.msra.mxu0 0
    %1867 = vmatprep.subr.bf16.mxu0 0
    %1868 = vmatpush1.bf16.xpose.msra.mxu0 0
    %1869 = vmatprep.subr.bf16.mxu0 0
    %1870 = vmatpush1.bf16.xpose.msra.mxu0 0
    %1871 = vmatprep.subr.bf16.mxu0 0
    %1872 = vmatpush1.bf16.xpose.msra.mxu0 0
    %1873 = vmatprep.subr.bf16.mxu0 0
    %1874 = vmatpush1.bf16.xpose.msra.mxu0 0
    %1875 = vmatprep.subr.bf16.mxu0 0
    %1876 = vmatpush1.bf16.xpose.msra.mxu0 0
    %1877 = vmatprep.subr.bf16.mxu0 0
    %1878 = vmatpush1.bf16.xpose.msra.mxu0 0
    %1879 = vmatprep.subr.bf16.mxu0 0
    %1880 = vmatpush1.bf16.xpose.msra.mxu0 0
    %1881 = vmatprep.subr.bf16.mxu0 0
    %1882 = vmatpush1.bf16.xpose.msra.mxu0 0
    %1883 = vmatprep.subr.bf16.mxu0 0
    %1884 = vmatpush1.bf16.xpose.msra.mxu0 0
    %1885 = vmatprep.subr.bf16.mxu0 0
    %1886 = vmatpush1.bf16.xpose.msra.mxu0 0
    %1887 = vmatprep.subr.bf16.mxu0 0
    %1888 = vmatpush1.bf16.xpose.msra.mxu0 0
    %1889 = vmatprep.mubr.bf16.mxu0 0
    %1890 = vmatmul.mubr.bf16.gmra.mrb[0].mxu0 %v1855
    %v1891 = vpop.f32.mrb[0].mxu0
    %v1892 = vadd.f32 0.0, %v1891
    %v1893 = vpop.f32.mrb[0].mxu0
    %v1894 = vpop.f32.mrb[0].mxu0
    %v1895 = vadd.f32 0.0, %v1894
    %v1896 = vpop.f32.mrb[0].mxu0
    %1897 = vdwg.mxu0
    %v1898 = vmul.f32 %v1892, 0.35355338
    %v1899 = vmul.f32 %v1895, 0.35355338
    %v1900 = vadd.f32 %v1898, %v477
    %v1901 = vadd.f32 %v1899, %v478
    %v1902 = vsel %vm709, %v1900, -inf
    %1903 = vmax.xlane.f32.xlu0 %v1902
    %v1904 = vpop.xlane.xlu0 %1903
    %v1905 = vsel %vm709, %v1901, -inf
    %1906 = vmax.xlane.f32.xlu0 %v1905
    %v1907 = vpop.xlane.xlu0 %1906
    %v1908 = vsub.f32 %v1900, %v1904
    %v1909 = vsub.f32 %v1901, %v1907
    %v1910 = vmul.f32 %v1908, 1.442695
    %v1911 = vpow.pop %v1910
    %v1912 = vmul.f32 %v1909, 1.442695
    %v1913 = vpow.pop %v1912
    %v1914 = vsel %vm709, %v1911, 0.0
    %1915 = vadd.xlane.f32.xlu0 %v1914
    %v1916 = vpop.xlane.xlu0 %1915
    %v1917 = vsel %vm709, %v1913, 0.0
    %1918 = vadd.xlane.f32.xlu0 %v1917
    %v1919 = vpop.xlane.xlu0 %1918
    %v1920 = vrcp.pop %v1916
    %v1921 = vrcp.pop %v1919
    %v1922 = vmul.f32 %v1911, %v1920
    %v1923 = vmul.f32 %v1913, %v1921
    %v1924 = vpack.c.bf16 %v1923, %v1922
    %v1925 = vmul.bf16 %v1586, %v476
    %v1927 = vsel %vm709, %v1924, 0
    %1929 = vmatprep.subr.bf16.mxu0 0
    %1930 = vmatpush1.bf16.msra.mxu0 %v1925
    %1931 = vmatprep.subr.bf16.mxu0 0
    %1932 = vmatpush1.bf16.msra.mxu0 0
    %1933 = vmatprep.subr.bf16.mxu0 0
    %1934 = vmatpush1.bf16.msra.mxu0 0
    %1935 = vmatprep.subr.bf16.mxu0 0
    %1936 = vmatpush1.bf16.msra.mxu0 0
    %1937 = vmatprep.subr.bf16.mxu0 0
    %1938 = vmatpush1.bf16.msra.mxu0 0
    %1939 = vmatprep.subr.bf16.mxu0 0
    %1940 = vmatpush1.bf16.msra.mxu0 0
    %1941 = vmatprep.subr.bf16.mxu0 0
    %1942 = vmatpush1.bf16.msra.mxu0 0
    %1943 = vmatprep.subr.bf16.mxu0 0
    %1944 = vmatpush1.bf16.msra.mxu0 0
    %1945 = vmatprep.subr.bf16.mxu0 0
    %1946 = vmatpush1.bf16.msra.mxu0 0
    %1947 = vmatprep.subr.bf16.mxu0 0
    %1948 = vmatpush1.bf16.msra.mxu0 0
    %1949 = vmatprep.subr.bf16.mxu0 0
    %1950 = vmatpush1.bf16.msra.mxu0 0
    %1951 = vmatprep.subr.bf16.mxu0 0
    %1952 = vmatpush1.bf16.msra.mxu0 0
    %1953 = vmatprep.subr.bf16.mxu0 0
    %1954 = vmatpush1.bf16.msra.mxu0 0
    %1955 = vmatprep.subr.bf16.mxu0 0
    %1956 = vmatpush1.bf16.msra.mxu0 0
    %1957 = vmatprep.subr.bf16.mxu0 0
    %1958 = vmatpush1.bf16.msra.mxu0 0
    %1959 = vmatprep.subr.bf16.mxu0 0
    %1960 = vmatpush1.bf16.msra.mxu0 0
    %1961 = vmatprep.mubr.bf16.mxu0 0
    %1962 = vmatmul.mubr.bf16.gmra.mrb[0].mxu0 %v1927
    %v1963 = vpop.f32.mrb[0].mxu0
    %v1964 = vadd.f32 0.0, %v1963
    %v1965 = vpop.f32.mrb[0].mxu0
    %v1966 = vpop.f32.mrb[0].mxu0
    %v1967 = vadd.f32 0.0, %v1966
    %v1968 = vpop.f32.mrb[0].mxu0
    %1969 = vdwg.mxu0
    %v1971 = vsel %vm709, %v1661, 0
    %1973 = vmatprep.subr.bf16.mxu0 0
    %1974 = vmatpush1.bf16.msra.mxu0 %v1662
    %1975 = vmatprep.subr.bf16.mxu0 0
    %1976 = vmatpush1.bf16.msra.mxu0 0
    %1977 = vmatprep.subr.bf16.mxu0 0
    %1978 = vmatpush1.bf16.msra.mxu0 0
    %1979 = vmatprep.subr.bf16.mxu0 0
    %1980 = vmatpush1.bf16.msra.mxu0 0
    %1981 = vmatprep.subr.bf16.mxu0 0
    %1982 = vmatpush1.bf16.msra.mxu0 0
    %1983 = vmatprep.subr.bf16.mxu0 0
    %1984 = vmatpush1.bf16.msra.mxu0 0
    %1985 = vmatprep.subr.bf16.mxu0 0
    %1986 = vmatpush1.bf16.msra.mxu0 0
    %1987 = vmatprep.subr.bf16.mxu0 0
    %1988 = vmatpush1.bf16.msra.mxu0 0
    %1989 = vmatprep.subr.bf16.mxu0 0
    %1990 = vmatpush1.bf16.msra.mxu0 0
    %1991 = vmatprep.subr.bf16.mxu0 0
    %1992 = vmatpush1.bf16.msra.mxu0 0
    %1993 = vmatprep.subr.bf16.mxu0 0
    %1994 = vmatpush1.bf16.msra.mxu0 0
    %1995 = vmatprep.subr.bf16.mxu0 0
    %1996 = vmatpush1.bf16.msra.mxu0 0
    %1997 = vmatprep.subr.bf16.mxu0 0
    %1998 = vmatpush1.bf16.msra.mxu0 0
    %1999 = vmatprep.subr.bf16.mxu0 0
    %2000 = vmatpush1.bf16.msra.mxu0 0
    %2001 = vmatprep.subr.bf16.mxu0 0
    %2002 = vmatpush1.bf16.msra.mxu0 0
    %2003 = vmatprep.subr.bf16.mxu0 0
    %2004 = vmatpush1.bf16.msra.mxu0 0
    %2005 = vmatprep.mubr.bf16.mxu0 0
    %2006 = vmatmul.mubr.bf16.gmra.mrb[0].mxu0 %v1971
    %v2007 = vpop.f32.mrb[0].mxu0
    %v2008 = vadd.f32 %v1774, %v2007
    %v2009 = vpop.f32.mrb[0].mxu0
    %v2010 = vpop.f32.mrb[0].mxu0
    %v2011 = vadd.f32 %v1777, %v2010
    %v2012 = vpop.f32.mrb[0].mxu0
    %2013 = vdwg.mxu0
    %v2015 = vsel %vm709, %v1851, 0
    %2017 = vmatprep.subr.bf16.mxu0 0
    %2018 = vmatpush1.bf16.msra.mxu0 %v1852
    %2019 = vmatprep.subr.bf16.mxu0 0
    %2020 = vmatpush1.bf16.msra.mxu0 0
    %2021 = vmatprep.subr.bf16.mxu0 0
    %2022 = vmatpush1.bf16.msra.mxu0 0
    %2023 = vmatprep.subr.bf16.mxu0 0
    %2024 = vmatpush1.bf16.msra.mxu0 0
    %2025 = vmatprep.subr.bf16.mxu0 0
    %2026 = vmatpush1.bf16.msra.mxu0 0
    %2027 = vmatprep.subr.bf16.mxu0 0
    %2028 = vmatpush1.bf16.msra.mxu0 0
    %2029 = vmatprep.subr.bf16.mxu0 0
    %2030 = vmatpush1.bf16.msra.mxu0 0
    %2031 = vmatprep.subr.bf16.mxu0 0
    %2032 = vmatpush1.bf16.msra.mxu0 0
    %2033 = vmatprep.subr.bf16.mxu0 0
    %2034 = vmatpush1.bf16.msra.mxu0 0
    %2035 = vmatprep.subr.bf16.mxu0 0
    %2036 = vmatpush1.bf16.msra.mxu0 0
    %2037 = vmatprep.subr.bf16.mxu0 0
    %2038 = vmatpush1.bf16.msra.mxu0 0
    %2039 = vmatprep.subr.bf16.mxu0 0
    %2040 = vmatpush1.bf16.msra.mxu0 0
    %2041 = vmatprep.subr.bf16.mxu0 0
    %2042 = vmatpush1.bf16.msra.mxu0 0
    %2043 = vmatprep.subr.bf16.mxu0 0
    %2044 = vmatpush1.bf16.msra.mxu0 0
    %2045 = vmatprep.subr.bf16.mxu0 0
    %2046 = vmatpush1.bf16.msra.mxu0 0
    %2047 = vmatprep.subr.bf16.mxu0 0
    %2048 = vmatpush1.bf16.msra.mxu0 0
    %2049 = vmatprep.mubr.bf16.mxu0 0
    %2050 = vmatmul.mubr.bf16.gmra.mrb[0].mxu0 %v2015
    %v2051 = vpop.f32.mrb[0].mxu0
    %v2052 = vadd.f32 %v1964, %v2051
    %v2053 = vpop.f32.mrb[0].mxu0
    %v2054 = vpop.f32.mrb[0].mxu0
    %v2055 = vadd.f32 %v1967, %v2054
    %v2056 = vpop.f32.mrb[0].mxu0
    %2057 = vdwg.mxu0
    %v2058 = vadd.f32 %v2008, %v2052
    %v2059 = vadd.f32 %v2011, %v2055
    %v2060 = vpack.c.bf16 %v2059, %v2058
    %v2061 = vld [vmem:[#allocation2 + $0xa4] sm:$0xf]
    %v2062 = vld [vmem:[#allocation2 + $0xa8] sm:$0xf]
    %v2063 = vld [vmem:[#allocation2 + $0xac] sm:$0xf]
    %v2064 = vld [vmem:[#allocation2 + $0xb0] sm:$0xf]
    %v2069 = vunpack.c.l.b16 %v2061
    %v2070 = vunpack.c.l.b16 %v2062
    %v2071 = vunpack.c.l.b16 %v2063
    %v2072 = vunpack.c.l.b16 %v2064
    %v2073 = vpack.c.b16 %v2070, %v2069
    %v2074 = vpack.c.b16 %v2072, %v2071
    %v2078 = vsel %vm413, %v2060, 0
    %2080 = vmatprep.subr.bf16.mxu0 0
    %2081 = vmatpush1.bf16.msra.mxu0 %v2073
    %2082 = vmatprep.subr.bf16.mxu0 0
    %2083 = vmatpush1.bf16.msra.mxu0 %v2074
    %2084 = vmatprep.subr.bf16.mxu0 0
    %2085 = vmatpush1.bf16.msra.mxu0 0
    %2086 = vmatprep.subr.bf16.mxu0 0
    %2087 = vmatpush1.bf16.msra.mxu0 0
    %2088 = vmatprep.subr.bf16.mxu0 0
    %2089 = vmatpush1.bf16.msra.mxu0 0
    %2090 = vmatprep.subr.bf16.mxu0 0
    %2091 = vmatpush1.bf16.msra.mxu0 0
    %2092 = vmatprep.subr.bf16.mxu0 0
    %2093 = vmatpush1.bf16.msra.mxu0 0
    %2094 = vmatprep.subr.bf16.mxu0 0
    %2095 = vmatpush1.bf16.msra.mxu0 0
    %2096 = vmatprep.subr.bf16.mxu0 0
    %2097 = vmatpush1.bf16.msra.mxu0 0
    %2098 = vmatprep.subr.bf16.mxu0 0
    %2099 = vmatpush1.bf16.msra.mxu0 0
    %2100 = vmatprep.subr.bf16.mxu0 0
    %2101 = vmatpush1.bf16.msra.mxu0 0
    %2102 = vmatprep.subr.bf16.mxu0 0
    %2103 = vmatpush1.bf16.msra.mxu0 0
    %2104 = vmatprep.subr.bf16.mxu0 0
    %2105 = vmatpush1.bf16.msra.mxu0 0
    %2106 = vmatprep.subr.bf16.mxu0 0
    %2107 = vmatpush1.bf16.msra.mxu0 0
    %2108 = vmatprep.subr.bf16.mxu0 0
    %2109 = vmatpush1.bf16.msra.mxu0 0
    %2110 = vmatprep.subr.bf16.mxu0 0
    %2111 = vmatpush1.bf16.msra.mxu0 0
    %2112 = vmatprep.mubr.bf16.mxu0 0
    %2113 = vmatmul.mubr.bf16.gmra.mrb[0].mxu0 %v2078
    %v2114 = vpop.f32.mrb[0].mxu0
    %v2115 = vadd.f32 0.0, %v2114
    %v2116 = vpop.f32.mrb[0].mxu0
    %v2117 = vpop.f32.mrb[0].mxu0
    %v2118 = vadd.f32 0.0, %v2117
    %v2119 = vpop.f32.mrb[0].mxu0
    %2120 = vdwg.mxu0
    %v2121 = vadd.f32 %v1407, %v2115
    %v2122 = vadd.f32 %v1408, %v2118
    %v2123 = vld [vmem:[%s2 + $0x90] sm:$0x1]
    %v2124 = vlaneseq
    %v2125 = vshrl.u32 %v2124, 7
    %v2126 = vsub.s32 0, %v2125
    %v2127 = vrot.slane %v2123, %v2126
    %v2128 = vadd.f32 %v2121, %v2127
    %v2129 = vadd.f32 %v2122, %v2127
    %v2130 = vsel %vm413, %v2128, 0.0
    %2131 = vadd.xlane.f32.xlu0 %v2130
    %v2132 = vpop.xlane.xlu0 %2131
    %v2133 = vsel %vm413, %v2129, 0.0
    %2134 = vadd.xlane.f32.xlu0 %v2133
    %v2135 = vpop.xlane.xlu0 %2134
    %v2136 = vmul.f32 %v2132, %v420
    %v2137 = vmul.f32 %v2135, %v420
    %v2138 = vsub.f32 %v2128, %v2136
    %v2139 = vsub.f32 %v2129, %v2137
    %v2140 = vmul.f32 %v2138, %v2138
    %v2141 = vmul.f32 %v2139, %v2139
    %v2142 = vsel %vm413, %v2140, 0.0
    %2143 = vadd.xlane.f32.xlu0 %v2142
    %v2144 = vpop.xlane.xlu0 %2143
    %v2145 = vsel %vm413, %v2141, 0.0
    %2146 = vadd.xlane.f32.xlu0 %v2145
    %v2147 = vpop.xlane.xlu0 %2146
    %v2148 = vmul.f32 %v2144, %v420
    %v2149 = vmul.f32 %v2147, %v420
    %v2150 = vadd.f32 %v2148, 1e-06
    %v2151 = vadd.f32 %v2149, 1e-06
    %v2152 = vrsqrt.pop %v2150
    %v2153 = vrsqrt.pop %v2151
    %v2154 = vmul.f32 %v2138, %v2152
    %v2155 = vmul.f32 %v2139, %v2153
    %v2156 = vld [vmem:[%s2 + $0x98] sm:$0x1]
    %v2157 = vlaneseq
    %v2158 = vshrl.u32 %v2157, 7
    %v2159 = vsub.s32 0, %v2158
    %v2160 = vrot.slane %v2156, %v2159
    %v2161 = vmul.f32 %v2154, %v2160
    %v2162 = vmul.f32 %v2155, %v2160
    %v2163 = vld [vmem:[%s2 + $0xa0] sm:$0x1]
    %v2164 = vlaneseq
    %v2165 = vshrl.u32 %v2164, 7
    %v2166 = vsub.s32 0, %v2165
    %v2167 = vrot.slane %v2163, %v2166
    %v2168 = vadd.f32 %v2161, %v2167
    %v2169 = vadd.f32 %v2162, %v2167
    %v2170 = vpack.c.bf16 %v2169, %v2168
    %v2171 = vld [vmem:[#allocation2 + $0xb4] sm:$0xf]
    %v2172 = vld [vmem:[#allocation2 + $0xb8] sm:$0xf]
    %v2173 = vld [vmem:[#allocation2 + $0xbc] sm:$0xf]
    %v2174 = vld [vmem:[#allocation2 + $0xc0] sm:$0xf]
    %v2175 = vld [vmem:[%s2 + $0xa8] sm:$0x1]
    %v2176 = vlaneseq
    %v2177 = vshrl.u32 %v2176, 7
    %v2178 = vsub.s32 0, %v2177
    %v2179 = vrot.slane %v2175, %v2178
    %v2184 = vunpack.c.l.b16 %v2171
    %v2185 = vunpack.c.l.b16 %v2172
    %v2186 = vunpack.c.l.b16 %v2173
    %v2187 = vunpack.c.l.b16 %v2174
    %v2188 = vpack.c.b16 %v2185, %v2184
    %v2189 = vpack.c.b16 %v2187, %v2186
    %v2193 = vsel %vm413, %v2170, 0
    %2195 = vmatprep.subr.bf16.mxu0 0
    %2196 = vmatpush1.bf16.msra.mxu0 %v2188
    %2197 = vmatprep.subr.bf16.mxu0 0
    %2198 = vmatpush1.bf16.msra.mxu0 %v2189
    %2199 = vmatprep.subr.bf16.mxu0 0
    %2200 = vmatpush1.bf16.msra.mxu0 0
    %2201 = vmatprep.subr.bf16.mxu0 0
    %2202 = vmatpush1.bf16.msra.mxu0 0
    %2203 = vmatprep.subr.bf16.mxu0 0
    %2204 = vmatpush1.bf16.msra.mxu0 0
    %2205 = vmatprep.subr.bf16.mxu0 0
    %2206 = vmatpush1.bf16.msra.mxu0 0
    %2207 = vmatprep.subr.bf16.mxu0 0
    %2208 = vmatpush1.bf16.msra.mxu0 0
    %2209 = vmatprep.subr.bf16.mxu0 0
    %2210 = vmatpush1.bf16.msra.mxu0 0
    %2211 = vmatprep.subr.bf16.mxu0 0
    %2212 = vmatpush1.bf16.msra.mxu0 0
    %2213 = vmatprep.subr.bf16.mxu0 0
    %2214 = vmatpush1.bf16.msra.mxu0 0
    %2215 = vmatprep.subr.bf16.mxu0 0
    %2216 = vmatpush1.bf16.msra.mxu0 0
    %2217 = vmatprep.subr.bf16.mxu0 0
    %2218 = vmatpush1.bf16.msra.mxu0 0
    %2219 = vmatprep.subr.bf16.mxu0 0
    %2220 = vmatpush1.bf16.msra.mxu0 0
    %2221 = vmatprep.subr.bf16.mxu0 0
    %2222 = vmatpush1.bf16.msra.mxu0 0
    %2223 = vmatprep.subr.bf16.mxu0 0
    %2224 = vmatpush1.bf16.msra.mxu0 0
    %2225 = vmatprep.subr.bf16.mxu0 0
    %2226 = vmatpush1.bf16.msra.mxu0 0
    %2227 = vmatprep.mubr.bf16.mxu0 0
    %2228 = vmatmul.mubr.bf16.gmra.mrb[0].mxu0 %v2193
    %v2229 = vpop.f32.mrb[0].mxu0
    %v2230 = vadd.f32 %v2179, %v2229
    %v2231 = vpop.f32.mrb[0].mxu0
    %v2232 = vpop.f32.mrb[0].mxu0
    %v2233 = vadd.f32 %v2179, %v2232
    %v2234 = vpop.f32.mrb[0].mxu0
    %2235 = vdwg.mxu0
    %v2236 = vmax.f32 %v2230, 0.0
    %v2237 = vmax.f32 %v2233, 0.0
    %v2238 = vpack.c.bf16 %v2237, %v2236
    %v2239 = vld [vmem:[#allocation2 + $0xc4] sm:$0xf]
    %v2240 = vld [vmem:[#allocation2 + $0xc8] sm:$0xf]
    %v2241 = vld [vmem:[%s2 + $0xb0] sm:$0x1]
    %v2242 = vlaneseq
    %v2243 = vshrl.u32 %v2242, 7
    %v2244 = vsub.s32 0, %v2243
    %v2245 = vrot.slane %v2241, %v2244
    %v2248 = vunpack.c.l.b16 %v2239
    %v2249 = vunpack.c.l.b16 %v2240
    %v2250 = vpack.c.b16 %v2249, %v2248
    %v2253 = vsel %vm709, %v2238, 0
    %2255 = vmatprep.subr.bf16.mxu0 0
    %2256 = vmatpush1.bf16.msra.mxu0 %v2250
    %2257 = vmatprep.subr.bf16.mxu0 0
    %2258 = vmatpush1.bf16.msra.mxu0 0
    %2259 = vmatprep.subr.bf16.mxu0 0
    %2260 = vmatpush1.bf16.msra.mxu0 0
    %2261 = vmatprep.subr.bf16.mxu0 0
    %2262 = vmatpush1.bf16.msra.mxu0 0
    %2263 = vmatprep.subr.bf16.mxu0 0
    %2264 = vmatpush1.bf16.msra.mxu0 0
    %2265 = vmatprep.subr.bf16.mxu0 0
    %2266 = vmatpush1.bf16.msra.mxu0 0
    %2267 = vmatprep.subr.bf16.mxu0 0
    %2268 = vmatpush1.bf16.msra.mxu0 0
    %2269 = vmatprep.subr.bf16.mxu0 0
    %2270 = vmatpush1.bf16.msra.mxu0 0
    %2271 = vmatprep.subr.bf16.mxu0 0
    %2272 = vmatpush1.bf16.msra.mxu0 0
    %2273 = vmatprep.subr.bf16.mxu0 0
    %2274 = vmatpush1.bf16.msra.mxu0 0
    %2275 = vmatprep.subr.bf16.mxu0 0
    %2276 = vmatpush1.bf16.msra.mxu0 0
    %2277 = vmatprep.subr.bf16.mxu0 0
    %2278 = vmatpush1.bf16.msra.mxu0 0
    %2279 = vmatprep.subr.bf16.mxu0 0
    %2280 = vmatpush1.bf16.msra.mxu0 0
    %2281 = vmatprep.subr.bf16.mxu0 0
    %2282 = vmatpush1.bf16.msra.mxu0 0
    %2283 = vmatprep.subr.bf16.mxu0 0
    %2284 = vmatpush1.bf16.msra.mxu0 0
    %2285 = vmatprep.subr.bf16.mxu0 0
    %2286 = vmatpush1.bf16.msra.mxu0 0
    %2287 = vmatprep.mubr.bf16.mxu0 0
    %2288 = vmatmul.mubr.bf16.gmra.mrb[0].mxu0 %v2253
    %v2289 = vpop.f32.mrb[0].mxu0
    %v2290 = vadd.f32 %v2245, %v2289
    %v2291 = vpop.f32.mrb[0].mxu0
    %v2292 = vpop.f32.mrb[0].mxu0
    %v2293 = vadd.f32 %v2245, %v2292
    %v2294 = vpop.f32.mrb[0].mxu0
    %2295 = vdwg.mxu0
    %v2296 = vadd.f32 %v2168, %v2290
    %v2297 = vadd.f32 %v2169, %v2293
    %v2298 = vsel %vm413, %v2296, 0.0
    %2299 = vadd.xlane.f32.xlu0 %v2298
    %v2300 = vpop.xlane.xlu0 %2299
    %v2301 = vsel %vm413, %v2297, 0.0
    %2302 = vadd.xlane.f32.xlu0 %v2301
    %v2303 = vpop.xlane.xlu0 %2302
    %v2304 = vmul.f32 %v2300, %v420
    %v2305 = vmul.f32 %v2303, %v420
    %v2306 = vsub.f32 %v2296, %v2304
    %v2307 = vsub.f32 %v2297, %v2305
    %v2308 = vmul.f32 %v2306, %v2306
    %v2309 = vmul.f32 %v2307, %v2307
    %v2310 = vsel %vm413, %v2308, 0.0
    %2311 = vadd.xlane.f32.xlu0 %v2310
    %v2312 = vpop.xlane.xlu0 %2311
    %v2313 = vsel %vm413, %v2309, 0.0
    %2314 = vadd.xlane.f32.xlu0 %v2313
    %v2315 = vpop.xlane.xlu0 %2314
    %v2316 = vmul.f32 %v2312, %v420
    %v2317 = vmul.f32 %v2315, %v420
    %v2318 = vadd.f32 %v2316, 1e-06
    %v2319 = vadd.f32 %v2317, 1e-06
    %v2320 = vrsqrt.pop %v2318
    %v2321 = vrsqrt.pop %v2319
    %v2322 = vmul.f32 %v2306, %v2320
    %v2323 = vmul.f32 %v2307, %v2321
    %v2324 = vld [vmem:[%s2 + $0xb8] sm:$0x1]
    %v2325 = vlaneseq
    %v2326 = vshrl.u32 %v2325, 7
    %v2327 = vsub.s32 0, %v2326
    %v2328 = vrot.slane %v2324, %v2327
    %v2329 = vmul.f32 %v2322, %v2328
    %v2330 = vmul.f32 %v2323, %v2328
    %v2331 = vld [vmem:[%s2 + $0xc0] sm:$0x1]
    %v2332 = vlaneseq
    %v2333 = vshrl.u32 %v2332, 7
    %v2334 = vsub.s32 0, %v2333
    %v2335 = vrot.slane %v2331, %v2334
    %v2336 = vadd.f32 %v2329, %v2335
    %v2337 = vadd.f32 %v2330, %v2335
    %v2338 = vpack.c.bf16 %v2337, %v2336
    %v2339 = vld [vmem:[#allocation2 + $0xcc] sm:$0xf]
    %v2340 = vld [vmem:[#allocation2 + $0xd0] sm:$0xf]
    %v2341 = vld [vmem:[#allocation2 + $0xd4] sm:$0xf]
    %v2342 = vld [vmem:[#allocation2 + $0xd8] sm:$0xf]
    %v2343 = vld [vmem:[%s2 + $0xc8] sm:$0x1]
    %v2344 = vlaneseq
    %v2345 = vshrl.u32 %v2344, 7
    %v2346 = vsub.s32 0, %v2345
    %v2347 = vrot.slane %v2343, %v2346
    %v2352 = vunpack.c.l.b16 %v2339
    %v2353 = vunpack.c.l.b16 %v2340
    %v2354 = vunpack.c.l.b16 %v2341
    %v2355 = vunpack.c.l.b16 %v2342
    %v2356 = vpack.c.b16 %v2353, %v2352
    %v2357 = vpack.c.b16 %v2355, %v2354
    %v2361 = vsel %vm413, %v2338, 0
    %2363 = vmatprep.subr.bf16.mxu0 0
    %2364 = vmatpush1.bf16.msra.mxu0 %v2356
    %2365 = vmatprep.subr.bf16.mxu0 0
    %2366 = vmatpush1.bf16.msra.mxu0 %v2357
    %2367 = vmatprep.subr.bf16.mxu0 0
    %2368 = vmatpush1.bf16.msra.mxu0 0
    %2369 = vmatprep.subr.bf16.mxu0 0
    %2370 = vmatpush1.bf16.msra.mxu0 0
    %2371 = vmatprep.subr.bf16.mxu0 0
    %2372 = vmatpush1.bf16.msra.mxu0 0
    %2373 = vmatprep.subr.bf16.mxu0 0
    %2374 = vmatpush1.bf16.msra.mxu0 0
    %2375 = vmatprep.subr.bf16.mxu0 0
    %2376 = vmatpush1.bf16.msra.mxu0 0
    %2377 = vmatprep.subr.bf16.mxu0 0
    %2378 = vmatpush1.bf16.msra.mxu0 0
    %2379 = vmatprep.subr.bf16.mxu0 0
    %2380 = vmatpush1.bf16.msra.mxu0 0
    %2381 = vmatprep.subr.bf16.mxu0 0
    %2382 = vmatpush1.bf16.msra.mxu0 0
    %2383 = vmatprep.subr.bf16.mxu0 0
    %2384 = vmatpush1.bf16.msra.mxu0 0
    %2385 = vmatprep.subr.bf16.mxu0 0
    %2386 = vmatpush1.bf16.msra.mxu0 0
    %2387 = vmatprep.subr.bf16.mxu0 0
    %2388 = vmatpush1.bf16.msra.mxu0 0
    %2389 = vmatprep.subr.bf16.mxu0 0
    %2390 = vmatpush1.bf16.msra.mxu0 0
    %2391 = vmatprep.subr.bf16.mxu0 0
    %2392 = vmatpush1.bf16.msra.mxu0 0
    %2393 = vmatprep.subr.bf16.mxu0 0
    %2394 = vmatpush1.bf16.msra.mxu0 0
    %2395 = vmatprep.mubr.bf16.mxu0 0
    %2396 = vmatmul.mubr.bf16.gmra.mrb[0].mxu0 %v2361
    %v2397 = vpop.f32.mrb[0].mxu0
    %v2398 = vadd.f32 %v2347, %v2397
    %v2399 = vpop.f32.mrb[0].mxu0
    %v2400 = vpop.f32.mrb[0].mxu0
    %v2401 = vadd.f32 %v2347, %v2400
    %v2402 = vpop.f32.mrb[0].mxu0
    %2403 = vdwg.mxu0
    %v2404 = vpack.c.bf16 %v2401, %v2398
    %v2405 = vld [vmem:[#allocation4] sm:$0xff]
    %v2406 = vld [vmem:[#allocation4 + $0x8] sm:$0xff]
    %v2407 = vld [vmem:[#allocation4 + $0x10] sm:$0xff]
    %v2408 = vld [vmem:[#allocation4 + $0x18] sm:$0xff]
    %v2409 = vld [vmem:[#allocation4 + $0x20] sm:$0xff]
    %v2410 = vld [vmem:[#allocation4 + $0x28] sm:$0xff]
    %v2411 = vld [vmem:[#allocation4 + $0x30] sm:$0xff]
    %v2412 = vld [vmem:[#allocation4 + $0x38] sm:$0xff]
    %v2421 = vunpack.c.l.b16 %v2405
    %v2422 = vunpack.c.h.b16 %v2405
    %v2423 = vunpack.c.l.b16 %v2406
    %v2424 = vunpack.c.h.b16 %v2406
    %v2425 = vunpack.c.l.b16 %v2407
    %v2426 = vunpack.c.h.b16 %v2407
    %v2427 = vunpack.c.l.b16 %v2408
    %v2428 = vunpack.c.h.b16 %v2408
    %v2429 = vunpack.c.l.b16 %v2409
    %v2430 = vunpack.c.h.b16 %v2409
    %v2431 = vunpack.c.l.b16 %v2410
    %v2432 = vunpack.c.h.b16 %v2410
    %v2433 = vunpack.c.l.b16 %v2411
    %v2434 = vunpack.c.h.b16 %v2411
    %v2435 = vunpack.c.l.b16 %v2412
    %v2436 = vunpack.c.h.b16 %v2412
    %v2437 = vpack.c.b16 %v2425, %v2421
    %v2438 = vpack.c.b16 %v2426, %v2422
    %v2439 = vpack.c.b16 %v2427, %v2423
    %v2440 = vpack.c.b16 %v2428, %v2424
    %v2441 = vpack.c.b16 %v2433, %v2429
    %v2442 = vpack.c.b16 %v2434, %v2430
    %v2443 = vpack.c.b16 %v2435, %v2431
    %v2444 = vpack.c.b16 %v2436, %v2432
    %v2454 = vsel %vm413, %v2404, 0
    %2456 = vmatprep.subr.bf16.mxu0 %v2438
    %2457 = vmatpush1.bf16.msra.mxu0 %v2437
    %2458 = vmatprep.subr.bf16.mxu0 %v2442
    %2459 = vmatpush1.bf16.msra.mxu0 %v2441
    %2460 = vmatprep.subr.bf16.mxu0 0
    %2461 = vmatpush1.bf16.msra.mxu0 0
    %2462 = vmatprep.subr.bf16.mxu0 0
    %2463 = vmatpush1.bf16.msra.mxu0 0
    %2464 = vmatprep.subr.bf16.mxu0 0
    %2465 = vmatpush1.bf16.msra.mxu0 0
    %2466 = vmatprep.subr.bf16.mxu0 0
    %2467 = vmatpush1.bf16.msra.mxu0 0
    %2468 = vmatprep.subr.bf16.mxu0 0
    %2469 = vmatpush1.bf16.msra.mxu0 0
    %2470 = vmatprep.subr.bf16.mxu0 0
    %2471 = vmatpush1.bf16.msra.mxu0 0
    %2472 = vmatprep.subr.bf16.mxu0 0
    %2473 = vmatpush1.bf16.msra.mxu0 0
    %2474 = vmatprep.subr.bf16.mxu0 0
    %2475 = vmatpush1.bf16.msra.mxu0 0
    %2476 = vmatprep.subr.bf16.mxu0 0
    %2477 = vmatpush1.bf16.msra.mxu0 0
    %2478 = vmatprep.subr.bf16.mxu0 0
    %2479 = vmatpush1.bf16.msra.mxu0 0
    %2480 = vmatprep.subr.bf16.mxu0 0
    %2481 = vmatpush1.bf16.msra.mxu0 0
    %2482 = vmatprep.subr.bf16.mxu0 0
    %2483 = vmatpush1.bf16.msra.mxu0 0
    %2484 = vmatprep.subr.bf16.mxu0 0
    %2485 = vmatpush1.bf16.msra.mxu0 0
    %2486 = vmatprep.subr.bf16.mxu0 0
    %2487 = vmatpush1.bf16.msra.mxu0 0
    %2488 = vmatprep.mubr.bf16.mxu0 0
    %2489 = vmatmul.mubr.bf16.gmra.mrb[0].mxu0 %v2454
    %v2490 = vpop.f32.mrb[0].mxu0
    %v2491 = vadd.f32 0.0, %v2490
    %v2492 = vpop.f32.mrb[0].mxu0
    %v2493 = vadd.f32 0.0, %v2492
    %v2494 = vpop.f32.mrb[0].mxu0
    %v2495 = vadd.f32 0.0, %v2494
    %v2496 = vpop.f32.mrb[0].mxu0
    %v2497 = vadd.f32 0.0, %v2496
    %2498 = vdwg.mxu0
    %2499 = vmatprep.subr.bf16.mxu0 %v2440
    %2500 = vmatpush1.bf16.msra.mxu0 %v2439
    %2501 = vmatprep.subr.bf16.mxu0 %v2444
    %2502 = vmatpush1.bf16.msra.mxu0 %v2443
    %2503 = vmatprep.subr.bf16.mxu0 0
    %2504 = vmatpush1.bf16.msra.mxu0 0
    %2505 = vmatprep.subr.bf16.mxu0 0
    %2506 = vmatpush1.bf16.msra.mxu0 0
    %2507 = vmatprep.subr.bf16.mxu0 0
    %2508 = vmatpush1.bf16.msra.mxu0 0
    %2509 = vmatprep.subr.bf16.mxu0 0
    %2510 = vmatpush1.bf16.msra.mxu0 0
    %2511 = vmatprep.subr.bf16.mxu0 0
    %2512 = vmatpush1.bf16.msra.mxu0 0
    %2513 = vmatprep.subr.bf16.mxu0 0
    %2514 = vmatpush1.bf16.msra.mxu0 0
    %2515 = vmatprep.subr.bf16.mxu0 0
    %2516 = vmatpush1.bf16.msra.mxu0 0
    %2517 = vmatprep.subr.bf16.mxu0 0
    %2518 = vmatpush1.bf16.msra.mxu0 0
    %2519 = vmatprep.subr.bf16.mxu0 0
    %2520 = vmatpush1.bf16.msra.mxu0 0
    %2521 = vmatprep.subr.bf16.mxu0 0
    %2522 = vmatpush1.bf16.msra.mxu0 0
    %2523 = vmatprep.subr.bf16.mxu0 0
    %2524 = vmatpush1.bf16.msra.mxu0 0
    %2525 = vmatprep.subr.bf16.mxu0 0
    %2526 = vmatpush1.bf16.msra.mxu0 0
    %2527 = vmatprep.subr.bf16.mxu0 0
    %2528 = vmatpush1.bf16.msra.mxu0 0
    %2529 = vmatprep.subr.bf16.mxu0 0
    %2530 = vmatpush1.bf16.msra.mxu0 0
    %2531 = vmatprep.mubr.bf16.mxu0 0
    %2532 = vmatmul.mubr.bf16.gmra.mrb[0].mxu0 %v2454
    %v2533 = vpop.f32.mrb[0].mxu0
    %v2534 = vadd.f32 0.0, %v2533
    %v2535 = vpop.f32.mrb[0].mxu0
    %v2536 = vadd.f32 0.0, %v2535
    %v2537 = vpop.f32.mrb[0].mxu0
    %v2538 = vadd.f32 0.0, %v2537
    %v2539 = vpop.f32.mrb[0].mxu0
    %v2540 = vadd.f32 0.0, %v2539
    %2541 = vdwg.mxu0
    %v2542 = vpack.c.bf16 %v2495, %v2491
    %v2543 = vpack.c.bf16 %v2497, %v2493
    %v2544 = vpack.c.bf16 %v2538, %v2534
    %v2545 = vpack.c.bf16 %v2540, %v2536
    %v2546 = vld [vmem:[#allocation4 + $0x40] sm:$0xff]
    %v2547 = vld [vmem:[#allocation4 + $0x48] sm:$0xff]
    %v2548 = vld [vmem:[#allocation4 + $0x50] sm:$0xff]
    %v2549 = vld [vmem:[#allocation4 + $0x58] sm:$0xff]
    %v2554 = vunpack.c.l.b16 %v2546
    %v2555 = vunpack.c.h.b16 %v2546
    %v2556 = vunpack.c.l.b16 %v2547
    %v2557 = vunpack.c.h.b16 %v2547
    %v2558 = vunpack.c.l.b16 %v2548
    %v2559 = vunpack.c.h.b16 %v2548
    %v2560 = vunpack.c.l.b16 %v2549
    %v2561 = vunpack.c.h.b16 %v2549
    %v2562 = vpack.c.b16 %v2558, %v2554
    %v2563 = vpack.c.b16 %v2559, %v2555
    %v2564 = vpack.c.b16 %v2560, %v2556
    %v2565 = vpack.c.b16 %v2561, %v2557
    %v2570 = vmul.bf16 %v2542, %v2562
    %v2571 = vmul.bf16 %v2543, %v2563
    %v2572 = vmul.bf16 %v2544, %v2564
    %v2573 = vmul.bf16 %v2545, %v2565
    %v2574 = vld [vmem:[%s4] sm:$0xf]
    %v2575 = vld [vmem:[%s4 + $0x4] sm:$0xf]
    %v2576 = vld [vmem:[%s4 + $0x8] sm:$0xf]
    %v2577 = vld [vmem:[%s4 + $0xc] sm:$0xf]
    %v2578 = vld [vmem:[%s4 + $0x10] sm:$0xf]
    %v2579 = vld [vmem:[%s4 + $0x14] sm:$0xf]
    %v2580 = vld [vmem:[%s4 + $0x18] sm:$0xf]
    %v2581 = vld [vmem:[%s4 + $0x1c] sm:$0xf]
    %v2582 = vld [vmem:[%s4 + $0x20] sm:$0xf]
    %v2583 = vld [vmem:[%s4 + $0x24] sm:$0xf]
    %v2584 = vld [vmem:[%s4 + $0x28] sm:$0xf]
    %v2585 = vld [vmem:[%s4 + $0x2c] sm:$0xf]
    %v2586 = vld [vmem:[%s4 + $0x30] sm:$0xf]
    %v2587 = vld [vmem:[%s4 + $0x34] sm:$0xf]
    %v2588 = vld [vmem:[%s4 + $0x38] sm:$0xf]
    %v2589 = vld [vmem:[%s4 + $0x3c] sm:$0xf]
    %v2590 = vld [vmem:[%s4 + $0x40] sm:$0xf]
    %v2591 = vld [vmem:[%s4 + $0x44] sm:$0xf]
    %v2592 = vld [vmem:[%s4 + $0x48] sm:$0xf]
    %v2593 = vld [vmem:[%s4 + $0x4c] sm:$0xf]
    %v2594 = vld [vmem:[%s4 + $0x50] sm:$0xf]
    %v2595 = vld [vmem:[%s4 + $0x54] sm:$0xf]
    %v2596 = vld [vmem:[%s4 + $0x58] sm:$0xf]
    %v2597 = vld [vmem:[%s4 + $0x5c] sm:$0xf]
    %v2598 = vld [vmem:[%s4 + $0x60] sm:$0xf]
    %v2599 = vld [vmem:[%s4 + $0x64] sm:$0xf]
    %v2600 = vld [vmem:[%s4 + $0x68] sm:$0xf]
    %v2601 = vld [vmem:[%s4 + $0x6c] sm:$0xf]
    %v2602 = vld [vmem:[%s4 + $0x70] sm:$0xf]
    %v2603 = vld [vmem:[%s4 + $0x74] sm:$0xf]
    %v2604 = vld [vmem:[%s4 + $0x78] sm:$0xf]
    %v2605 = vld [vmem:[%s4 + $0x7c] sm:$0xf]
    %v2606 = vld [vmem:[%s4 + $0x80] sm:$0xf]
    %v2607 = vld [vmem:[%s4 + $0x84] sm:$0xf]
    %v2608 = vld [vmem:[%s4 + $0x88] sm:$0xf]
    %v2609 = vld [vmem:[%s4 + $0x8c] sm:$0xf]
    %v2610 = vld [vmem:[%s4 + $0x90] sm:$0xf]
    %v2611 = vld [vmem:[%s4 + $0x94] sm:$0xf]
    %v2612 = vld [vmem:[%s4 + $0x98] sm:$0xf]
    %v2613 = vld [vmem:[%s4 + $0x9c] sm:$0xf]
    %v2614 = vld [vmem:[%s4 + $0xa0] sm:$0xf]
    %v2615 = vld [vmem:[%s4 + $0xa4] sm:$0xf]
    %v2616 = vld [vmem:[%s4 + $0xa8] sm:$0xf]
    %v2617 = vld [vmem:[%s4 + $0xac] sm:$0xf]
    %v2618 = vld [vmem:[%s4 + $0xb0] sm:$0xf]
    %v2619 = vld [vmem:[%s4 + $0xb4] sm:$0xf]
    %v2620 = vld [vmem:[%s4 + $0xb8] sm:$0xf]
    %v2621 = vld [vmem:[%s4 + $0xbc] sm:$0xf]
    %v2622 = vld [vmem:[%s4 + $0xc0] sm:$0xf]
    %v2623 = vld [vmem:[%s4 + $0xc4] sm:$0xf]
    %v2674 = vunpack.c.l.b16 %v2574
    %v2675 = vunpack.c.l.b16 %v2575
    %v2676 = vunpack.c.l.b16 %v2576
    %v2677 = vunpack.c.l.b16 %v2577
    %v2678 = vunpack.c.l.b16 %v2578
    %v2679 = vunpack.c.l.b16 %v2579
    %v2680 = vunpack.c.l.b16 %v2580
    %v2681 = vunpack.c.l.b16 %v2581
    %v2682 = vunpack.c.l.b16 %v2582
    %v2683 = vunpack.c.l.b16 %v2583
    %v2684 = vunpack.c.l.b16 %v2584
    %v2685 = vunpack.c.l.b16 %v2585
    %v2686 = vunpack.c.l.b16 %v2586
    %v2687 = vunpack.c.l.b16 %v2587
    %v2688 = vunpack.c.l.b16 %v2588
    %v2689 = vunpack.c.l.b16 %v2589
    %v2690 = vunpack.c.l.b16 %v2590
    %v2691 = vunpack.c.l.b16 %v2591
    %v2692 = vunpack.c.l.b16 %v2592
    %v2693 = vunpack.c.l.b16 %v2593
    %v2694 = vunpack.c.l.b16 %v2594
    %v2695 = vunpack.c.l.b16 %v2595
    %v2696 = vunpack.c.l.b16 %v2596
    %v2697 = vunpack.c.l.b16 %v2597
    %v2698 = vunpack.c.l.b16 %v2598
    %v2699 = vunpack.c.l.b16 %v2599
    %v2700 = vunpack.c.l.b16 %v2600
    %v2701 = vunpack.c.l.b16 %v2601
    %v2702 = vunpack.c.l.b16 %v2602
    %v2703 = vunpack.c.l.b16 %v2603
    %v2704 = vunpack.c.l.b16 %v2604
    %v2705 = vunpack.c.l.b16 %v2605
    %v2706 = vunpack.c.l.b16 %v2606
    %v2707 = vunpack.c.l.b16 %v2607
    %v2708 = vunpack.c.l.b16 %v2608
    %v2709 = vunpack.c.l.b16 %v2609
    %v2710 = vunpack.c.l.b16 %v2610
    %v2711 = vunpack.c.l.b16 %v2611
    %v2712 = vunpack.c.l.b16 %v2612
    %v2713 = vunpack.c.l.b16 %v2613
    %v2714 = vunpack.c.l.b16 %v2614
    %v2715 = vunpack.c.l.b16 %v2615
    %v2716 = vunpack.c.l.b16 %v2616
    %v2717 = vunpack.c.l.b16 %v2617
    %v2718 = vunpack.c.l.b16 %v2618
    %v2719 = vunpack.c.l.b16 %v2619
    %v2720 = vunpack.c.l.b16 %v2620
    %v2721 = vunpack.c.l.b16 %v2621
    %v2722 = vunpack.c.l.b16 %v2622
    %v2723 = vunpack.c.l.b16 %v2623
    %v2724 = vpack.c.b16 %v2675, %v2674
    %v2725 = vpack.c.b16 %v2677, %v2676
    %v2726 = vpack.c.b16 %v2679, %v2678
    %v2727 = vpack.c.b16 %v2681, %v2680
    %v2728 = vpack.c.b16 %v2683, %v2682
    %v2729 = vpack.c.b16 %v2685, %v2684
    %v2730 = vpack.c.b16 %v2687, %v2686
    %v2731 = vpack.c.b16 %v2689, %v2688
    %v2732 = vpack.c.b16 %v2691, %v2690
    %v2733 = vpack.c.b16 %v2693, %v2692
    %v2734 = vpack.c.b16 %v2695, %v2694
    %v2735 = vpack.c.b16 %v2697, %v2696
    %v2736 = vpack.c.b16 %v2699, %v2698
    %v2737 = vpack.c.b16 %v2701, %v2700
    %v2738 = vpack.c.b16 %v2703, %v2702
    %v2739 = vpack.c.b16 %v2705, %v2704
    %v2740 = vpack.c.b16 %v2707, %v2706
    %v2741 = vpack.c.b16 %v2709, %v2708
    %v2742 = vpack.c.b16 %v2711, %v2710
    %v2743 = vpack.c.b16 %v2713, %v2712
    %v2744 = vpack.c.b16 %v2715, %v2714
    %v2745 = vpack.c.b16 %v2717, %v2716
    %v2746 = vpack.c.b16 %v2719, %v2718
    %v2747 = vpack.c.b16 %v2721, %v2720
    %v2748 = vpack.c.b16 %v2723, %v2722
    %v2775 = vsel %vm709, %v2573, 0
    %2777 = vmatprep.subr.bf16.mxu0 0
    %2778 = vmatpush1.bf16.msra.mxu0 %v2724
    %2779 = vmatprep.subr.bf16.mxu0 0
    %2780 = vmatpush1.bf16.msra.mxu0 %v2725
    %2781 = vmatprep.subr.bf16.mxu0 0
    %2782 = vmatpush1.bf16.msra.mxu0 %v2726
    %2783 = vmatprep.subr.bf16.mxu0 0
    %2784 = vmatpush1.bf16.msra.mxu0 %v2727
    %2785 = vmatprep.subr.bf16.mxu0 0
    %2786 = vmatpush1.bf16.msra.mxu0 %v2728
    %2787 = vmatprep.subr.bf16.mxu0 0
    %2788 = vmatpush1.bf16.msra.mxu0 %v2729
    %2789 = vmatprep.subr.bf16.mxu0 0
    %2790 = vmatpush1.bf16.msra.mxu0 %v2730
    %2791 = vmatprep.subr.bf16.mxu0 0
    %2792 = vmatpush1.bf16.msra.mxu0 %v2731
    %2793 = vmatprep.subr.bf16.mxu0 0
    %2794 = vmatpush1.bf16.msra.mxu0 %v2732
    %2795 = vmatprep.subr.bf16.mxu0 0
    %2796 = vmatpush1.bf16.msra.mxu0 %v2733
    %2797 = vmatprep.subr.bf16.mxu0 0
    %2798 = vmatpush1.bf16.msra.mxu0 %v2734
    %2799 = vmatprep.subr.bf16.mxu0 0
    %2800 = vmatpush1.bf16.msra.mxu0 %v2735
    %2801 = vmatprep.subr.bf16.mxu0 0
    %2802 = vmatpush1.bf16.msra.mxu0 %v2736
    %2803 = vmatprep.subr.bf16.mxu0 0
    %2804 = vmatpush1.bf16.msra.mxu0 %v2737
    %2805 = vmatprep.subr.bf16.mxu0 0
    %2806 = vmatpush1.bf16.msra.mxu0 %v2738
    %2807 = vmatprep.subr.bf16.mxu0 0
    %2808 = vmatpush1.bf16.msra.mxu0 %v2739
    %2809 = vmatprep.mubr.bf16.mxu0 %v2571
    %2810 = vmatmul.mubr.bf16.gmra.mrb[0].mxu0 %v2570
    %v2811 = vpop.f32.mrb[0].mxu0
    %v2812 = vadd.f32 0.0, %v2811
    %v2813 = vpop.f32.mrb[0].mxu0
    %v2814 = vpop.f32.mrb[0].mxu0
    %v2815 = vadd.f32 0.0, %v2814
    %v2816 = vpop.f32.mrb[0].mxu0
    %2817 = vdwg.mxu0
    %2818 = vmatprep.subr.bf16.mxu0 0
    %2819 = vmatpush1.bf16.msra.mxu0 %v2740
    %2820 = vmatprep.subr.bf16.mxu0 0
    %2821 = vmatpush1.bf16.msra.mxu0 %v2741
    %2822 = vmatprep.subr.bf16.mxu0 0
    %2823 = vmatpush1.bf16.msra.mxu0 %v2742
    %2824 = vmatprep.subr.bf16.mxu0 0
    %2825 = vmatpush1.bf16.msra.mxu0 %v2743
    %2826 = vmatprep.subr.bf16.mxu0 0
    %2827 = vmatpush1.bf16.msra.mxu0 %v2744
    %2828 = vmatprep.subr.bf16.mxu0 0
    %2829 = vmatpush1.bf16.msra.mxu0 %v2745
    %2830 = vmatprep.subr.bf16.mxu0 0
    %2831 = vmatpush1.bf16.msra.mxu0 %v2746
    %2832 = vmatprep.subr.bf16.mxu0 0
    %2833 = vmatpush1.bf16.msra.mxu0 %v2747
    %2834 = vmatprep.subr.bf16.mxu0 0
    %2835 = vmatpush1.bf16.msra.mxu0 %v2748
    %2836 = vmatprep.subr.bf16.mxu0 0
    %2837 = vmatpush1.bf16.msra.mxu0 0
    %2838 = vmatprep.subr.bf16.mxu0 0
    %2839 = vmatpush1.bf16.msra.mxu0 0
    %2840 = vmatprep.subr.bf16.mxu0 0
    %2841 = vmatpush1.bf16.msra.mxu0 0
    %2842 = vmatprep.subr.bf16.mxu0 0
    %2843 = vmatpush1.bf16.msra.mxu0 0
    %2844 = vmatprep.subr.bf16.mxu0 0
    %2845 = vmatpush1.bf16.msra.mxu0 0
    %2846 = vmatprep.subr.bf16.mxu0 0
    %2847 = vmatpush1.bf16.msra.mxu0 0
    %2848 = vmatprep.subr.bf16.mxu0 0
    %2849 = vmatpush1.bf16.msra.mxu0 0
    %2850 = vmatprep.mubr.bf16.mxu0 %v2775
    %2851 = vmatmul.mubr.bf16.gmra.mrb[0].mxu0 %v2572
    %v2852 = vpop.f32.mrb[0].mxu0
    %v2853 = vadd.f32 %v2812, %v2852
    %v2854 = vpop.f32.mrb[0].mxu0
    %v2855 = vpop.f32.mrb[0].mxu0
    %v2856 = vadd.f32 %v2815, %v2855
    %v2857 = vpop.f32.mrb[0].mxu0
    %2858 = vdwg.mxu0
    %v2859 = vld [vmem:[%s2 + $0xd0] sm:$0x3]
    %v2860 = vld [vmem:[%s2 + $0xd8] sm:$0x1]
    %v2861 = vlaneseq
    %v2862 = vshrl.u32 %v2861, 7
    %v2863 = vsub.s32 0, %v2862
    %v2864 = vrot.slane %v2860, %v2863
    %v2866 = vsel %vm709, %v2859, 0
    %2868 = vmatprep.subr.mxu0 0.0
    %2869 = vmatpush1.msra.mxu0 %v2853
    %2870 = vmatprep.subr.mxu0 0.0
    %2871 = vmatpush1.msra.mxu0 %v2856
    %2872 = vmatprep.subr.mxu0 0.0
    %2873 = vmatpush1.msra.mxu0 0.0
    %2874 = vmatprep.subr.mxu0 0.0
    %2875 = vmatpush1.msra.mxu0 0.0
    %2876 = vmatprep.subr.mxu0 0.0
    %2877 = vmatpush1.msra.mxu0 0.0
    %2878 = vmatprep.subr.mxu0 0.0
    %2879 = vmatpush1.msra.mxu0 0.0
    %2880 = vmatprep.subr.mxu0 0.0
    %2881 = vmatpush1.msra.mxu0 0.0
    %2882 = vmatprep.subr.mxu0 0.0
    %2883 = vmatpush1.msra.mxu0 0.0
    %2884 = vmatprep.subr.mxu0 0.0
    %2885 = vmatpush1.msra.mxu0 0.0
    %2886 = vmatprep.subr.mxu0 0.0
    %2887 = vmatpush1.msra.mxu0 0.0
    %2888 = vmatprep.subr.mxu0 0.0
    %2889 = vmatpush1.msra.mxu0 0.0
    %2890 = vmatprep.subr.mxu0 0.0
    %2891 = vmatpush1.msra.mxu0 0.0
    %2892 = vmatprep.subr.mxu0 0.0
    %2893 = vmatpush1.msra.mxu0 0.0
    %2894 = vmatprep.subr.mxu0 0.0
    %2895 = vmatpush1.msra.mxu0 0.0
    %2896 = vmatprep.subr.mxu0 0.0
    %2897 = vmatpush1.msra.mxu0 0.0
    %2898 = vmatprep.subr.mxu0 0.0
    %2899 = vmatpush1.msra.mxu0 0.0
    %2900 = vmatprep.subr.mxu0 0.0
    %2901 = vmatpush1.msra.mxu0 0.0
    %2902 = vmatprep.subr.mxu0 0.0
    %2903 = vmatpush1.msra.mxu0 0.0
    %2904 = vmatprep.subr.mxu0 0.0
    %2905 = vmatpush1.msra.mxu0 0.0
    %2906 = vmatprep.subr.mxu0 0.0
    %2907 = vmatpush1.msra.mxu0 0.0
    %2908 = vmatprep.subr.mxu0 0.0
    %2909 = vmatpush1.msra.mxu0 0.0
    %2910 = vmatprep.subr.mxu0 0.0
    %2911 = vmatpush1.msra.mxu0 0.0
    %2912 = vmatprep.subr.mxu0 0.0
    %2913 = vmatpush1.msra.mxu0 0.0
    %2914 = vmatprep.subr.mxu0 0.0
    %2915 = vmatpush1.msra.mxu0 0.0
    %2916 = vmatprep.subr.mxu0 0.0
    %2917 = vmatpush1.msra.mxu0 0.0
    %2918 = vmatprep.subr.mxu0 0.0
    %2919 = vmatpush1.msra.mxu0 0.0
    %2920 = vmatprep.subr.mxu0 0.0
    %2921 = vmatpush1.msra.mxu0 0.0
    %2922 = vmatprep.subr.mxu0 0.0
    %2923 = vmatpush1.msra.mxu0 0.0
    %2924 = vmatprep.subr.mxu0 0.0
    %2925 = vmatpush1.msra.mxu0 0.0
    %2926 = vmatprep.subr.mxu0 0.0
    %2927 = vmatpush1.msra.mxu0 0.0
    %2928 = vmatprep.subr.mxu0 0.0
    %2929 = vmatpush1.msra.mxu0 0.0
    %2930 = vmatprep.subr.mxu0 0.0
    %2931 = vmatpush1.msra.mxu0 0.0
    %2932 = vmatprep.mubr.f32.mxu0 0.0
    %2933 = vmatmul.mubr.f32.gmra.mrb[0].mxu0 %v2866
    %v2934 = vpop.f32.mrb[0].mxu0
    %v2935 = vadd.f32 %v2864, %v2934
    %v2936 = vpop.f32.mrb[0].mxu0
    %2937 = vdwg.mxu0
    %v2938 = vmax.f32 %v2935, 0.0
    %v2939 = vld [vmem:[%s2 + $0xe0] sm:$0xff]
    %v2940 = vld [vmem:[%s2 + $0xe8] sm:$0xff]
    %v2941 = vld [vmem:[%s2 + $0xf0] sm:$0xff]
    %v2942 = vld [vmem:[%s2 + $0xf8] sm:$0xff]
    %v2943 = vld [vmem:[%s2 + $0x100] sm:$0xff]
    %v2944 = vld [vmem:[%s2 + $0x108] sm:$0xff]
    %v2945 = vld [vmem:[%s2 + $0x110] sm:$0x3]
    %v2946 = vld [vmem:[%s2 + $0x118] sm:$0x1]
    %v2947 = vlaneseq
    %v2948 = vshrl.u32 %v2947, 7
    %v2949 = vsub.s32 0, %v2948
    %v2950 = vrot.slane %v2946, %v2949
    %vm2951 = vcmask 408576
    %v2953 = vsel %vm2951, %v2938, 0
    %vm2955 = vcmask 1041408
    %v2957 = vsel %vm2955, %v2945, 0
    %2959 = vmatprep.subr.mxu0 0.0
    %2960 = vmatpush1.msra.mxu0 %v2939
    %2961 = vmatprep.subr.mxu0 0.0
    %2962 = vmatpush1.msra.mxu0 %v2940
    %2963 = vmatprep.subr.mxu0 0.0
    %2964 = vmatpush1.msra.mxu0 %v2941
    %2965 = vmatprep.subr.mxu0 0.0
    %2966 = vmatpush1.msra.mxu0 %v2942
    %2967 = vmatprep.subr.mxu0 0.0
    %2968 = vmatpush1.msra.mxu0 %v2943
    %2969 = vmatprep.subr.mxu0 0.0
    %2970 = vmatpush1.msra.mxu0 %v2944
    %2971 = vmatprep.subr.mxu0 0.0
    %2972 = vmatpush1.msra.mxu0 %v2957
    %2973 = vmatprep.subr.mxu0 0.0
    %2974 = vmatpush1.msra.mxu0 0.0
    %2975 = vmatprep.subr.mxu0 0.0
    %2976 = vmatpush1.msra.mxu0 0.0
    %2977 = vmatprep.subr.mxu0 0.0
    %2978 = vmatpush1.msra.mxu0 0.0
    %2979 = vmatprep.subr.mxu0 0.0
    %2980 = vmatpush1.msra.mxu0 0.0
    %2981 = vmatprep.subr.mxu0 0.0
    %2982 = vmatpush1.msra.mxu0 0.0
    %2983 = vmatprep.subr.mxu0 0.0
    %2984 = vmatpush1.msra.mxu0 0.0
    %2985 = vmatprep.subr.mxu0 0.0
    %2986 = vmatpush1.msra.mxu0 0.0
    %2987 = vmatprep.subr.mxu0 0.0
    %2988 = vmatpush1.msra.mxu0 0.0
    %2989 = vmatprep.subr.mxu0 0.0
    %2990 = vmatpush1.msra.mxu0 0.0
    %2991 = vmatprep.subr.mxu0 0.0
    %2992 = vmatpush1.msra.mxu0 0.0
    %2993 = vmatprep.subr.mxu0 0.0
    %2994 = vmatpush1.msra.mxu0 0.0
    %2995 = vmatprep.subr.mxu0 0.0
    %2996 = vmatpush1.msra.mxu0 0.0
    %2997 = vmatprep.subr.mxu0 0.0
    %2998 = vmatpush1.msra.mxu0 0.0
    %2999 = vmatprep.subr.mxu0 0.0
    %3000 = vmatpush1.msra.mxu0 0.0
    %3001 = vmatprep.subr.mxu0 0.0
    %3002 = vmatpush1.msra.mxu0 0.0
    %3003 = vmatprep.subr.mxu0 0.0
    %3004 = vmatpush1.msra.mxu0 0.0
    %3005 = vmatprep.subr.mxu0 0.0
    %3006 = vmatpush1.msra.mxu0 0.0
    %3007 = vmatprep.subr.mxu0 0.0
    %3008 = vmatpush1.msra.mxu0 0.0
    %3009 = vmatprep.subr.mxu0 0.0
    %3010 = vmatpush1.msra.mxu0 0.0
    %3011 = vmatprep.subr.mxu0 0.0
    %3012 = vmatpush1.msra.mxu0 0.0
    %3013 = vmatprep.subr.mxu0 0.0
    %3014 = vmatpush1.msra.mxu0 0.0
    %3015 = vmatprep.subr.mxu0 0.0
    %3016 = vmatpush1.msra.mxu0 0.0
    %3017 = vmatprep.subr.mxu0 0.0
    %3018 = vmatpush1.msra.mxu0 0.0
    %3019 = vmatprep.subr.mxu0 0.0
    %3020 = vmatpush1.msra.mxu0 0.0
    %3021 = vmatprep.subr.mxu0 0.0
    %3022 = vmatpush1.msra.mxu0 0.0
    %3023 = vmatprep.mubr.f32.mxu0 0.0
    %3024 = vmatmul.mubr.f32.gmra.mrb[0].mxu0 %v2953
    %v3025 = vpop.f32.mrb[0].mxu0
    %v3026 = vadd.f32 %v2950, %v3025
    %v3027 = vpop.f32.mrb[0].mxu0
    %3028 = vdwg.mxu0
    %v3029 = vmax.f32 %v3026, 0.0
    %v3030 = vld [vmem:[%s2 + $0x120] sm:$0xff]
    %v3031 = vld [vmem:[%s2 + $0x128] sm:$0x3]
    %v3032 = vld [vmem:[%s2 + $0x130] sm:$0x1]
    %v3033 = vlaneseq
    %v3034 = vshrl.u32 %v3033, 7
    %v3035 = vsub.s32 0, %v3034
    %v3036 = vrot.slane %v3032, %v3035
    %vm3037 = vcmask 80896
    %v3039 = vsel %vm3037, %v3029, 0
    %v3042 = vsel %vm2955, %v3031, 0
    %3044 = vmatprep.subr.mxu0 0.0
    %3045 = vmatpush1.msra.mxu0 %v3030
    %3046 = vmatprep.subr.mxu0 0.0
    %3047 = vmatpush1.msra.mxu0 %v3042
    %3048 = vmatprep.subr.mxu0 0.0
    %3049 = vmatpush1.msra.mxu0 0.0
    %3050 = vmatprep.subr.mxu0 0.0
    %3051 = vmatpush1.msra.mxu0 0.0
    %3052 = vmatprep.subr.mxu0 0.0
    %3053 = vmatpush1.msra.mxu0 0.0
    %3054 = vmatprep.subr.mxu0 0.0
    %3055 = vmatpush1.msra.mxu0 0.0
    %3056 = vmatprep.subr.mxu0 0.0
    %3057 = vmatpush1.msra.mxu0 0.0
    %3058 = vmatprep.subr.mxu0 0.0
    %3059 = vmatpush1.msra.mxu0 0.0
    %3060 = vmatprep.subr.mxu0 0.0
    %3061 = vmatpush1.msra.mxu0 0.0
    %3062 = vmatprep.subr.mxu0 0.0
    %3063 = vmatpush1.msra.mxu0 0.0
    %3064 = vmatprep.subr.mxu0 0.0
    %3065 = vmatpush1.msra.mxu0 0.0
    %3066 = vmatprep.subr.mxu0 0.0
    %3067 = vmatpush1.msra.mxu0 0.0
    %3068 = vmatprep.subr.mxu0 0.0
    %3069 = vmatpush1.msra.mxu0 0.0
    %3070 = vmatprep.subr.mxu0 0.0
    %3071 = vmatpush1.msra.mxu0 0.0
    %3072 = vmatprep.subr.mxu0 0.0
    %3073 = vmatpush1.msra.mxu0 0.0
    %3074 = vmatprep.subr.mxu0 0.0
    %3075 = vmatpush1.msra.mxu0 0.0
    %3076 = vmatprep.subr.mxu0 0.0
    %3077 = vmatpush1.msra.mxu0 0.0
    %3078 = vmatprep.subr.mxu0 0.0
    %3079 = vmatpush1.msra.mxu0 0.0
    %3080 = vmatprep.subr.mxu0 0.0
    %3081 = vmatpush1.msra.mxu0 0.0
    %3082 = vmatprep.subr.mxu0 0.0
    %3083 = vmatpush1.msra.mxu0 0.0
    %3084 = vmatprep.subr.mxu0 0.0
    %3085 = vmatpush1.msra.mxu0 0.0
    %3086 = vmatprep.subr.mxu0 0.0
    %3087 = vmatpush1.msra.mxu0 0.0
    %3088 = vmatprep.subr.mxu0 0.0
    %3089 = vmatpush1.msra.mxu0 0.0
    %3090 = vmatprep.subr.mxu0 0.0
    %3091 = vmatpush1.msra.mxu0 0.0
    %3092 = vmatprep.subr.mxu0 0.0
    %3093 = vmatpush1.msra.mxu0 0.0
    %3094 = vmatprep.subr.mxu0 0.0
    %3095 = vmatpush1.msra.mxu0 0.0
    %3096 = vmatprep.subr.mxu0 0.0
    %3097 = vmatpush1.msra.mxu0 0.0
    %3098 = vmatprep.subr.mxu0 0.0
    %3099 = vmatpush1.msra.mxu0 0.0
    %3100 = vmatprep.subr.mxu0 0.0
    %3101 = vmatpush1.msra.mxu0 0.0
    %3102 = vmatprep.subr.mxu0 0.0
    %3103 = vmatpush1.msra.mxu0 0.0
    %3104 = vmatprep.subr.mxu0 0.0
    %3105 = vmatpush1.msra.mxu0 0.0
    %3106 = vmatprep.subr.mxu0 0.0
    %3107 = vmatpush1.msra.mxu0 0.0
    %3108 = vmatprep.mubr.f32.mxu0 0.0
    %3109 = vmatmul.mubr.f32.gmra.mrb[0].mxu0 %v3039
    %v3110 = vpop.f32.mrb[0].mxu0
    %v3111 = vadd.f32 %v3036, %v3110
    %v3112 = vpop.f32.mrb[0].mxu0
    %3113 = vdwg.mxu0
    %vm3114 = vcmask 1024
    %3115 = vst.msk [vmem:[%s5] sm:$0x3] %vm3114, %v3111
    // Predicated region
    $region30: #{gcu_transformer_forward.1} parent=1 // pred_check
      _
    $region31: #{gcu_transformer_forward.1} parent=1 // pred_check_branch
      %3117 = sbr.rel (0) target = $region33
    $region32: #{gcu_transformer_forward.1} parent=1 // pred_region
      _
    $region33: #{gcu_transformer_forward.1} parent=1 // pred_fallthru
      _
    // Predicated region
    $region34: #{gcu_transformer_forward.1} parent=1 // pred_check
      _
    $region35: #{gcu_transformer_forward.1} parent=1 // pred_check_branch
      %3119 = sbr.rel (0) target = $region37
    $region36: #{gcu_transformer_forward.1} parent=1 // pred_region
      _
    $region37: #{gcu_transformer_forward.1} parent=1 // pred_fallthru
      _
    %3120 = vsyncpa [#allocation3], 1
    %3121 = vsyncpa [#allocation5], 1

</llo_original>
